<compile_context>
chip_gen: v5e
topology: v5e:2x2
jax: 0.10.0
libtpu: 0.0.40
codegen_flags: <defaults>
</compile_context>

<pallas_src>
import functools

import jax
import jax.numpy as jnp
from jax import lax
from jax.experimental import pallas as pl
from jax.experimental.pallas import tpu as pltpu  # noqa: F401  (TPU backend)

# ---------------- model hyper-parameters ------------------------------------
VOCAB_SIZE = 65
VOCAB_PAD = 128         # lane-dense padded vocab for the logits output
BLOCK_SIZE = 8          # T
N_EMBED = 32            # C
NUM_HEADS = 4
HEAD_SIZE = N_EMBED // NUM_HEADS
BATCH = 16              # BT = 128 rows per invocation (fills MXU rows)


def _round_up(x, m):
    return ((x + m - 1) // m) * m


def _slab_layout(C, H, VP):
    """Lane offsets inside the coalesced weight slab (128-aligned sections)."""
    proj_w = 2 * C + H * C              # [wq*scale | wk | wvo_0..H-1]
    ff_off = _round_up(proj_w, 128)     # wff
    fc_off = _round_up(ff_off + C, 128)  # wfc (padded to VP lanes)
    total = fc_off + VP
    return proj_w, ff_off, fc_off, total


# ---------------- Pallas kernel: whole forward pass, single invocation ------
def _bigram_kernel(batch, seq_len, num_heads, head_size, vocab_pad,
                   ff_off, fc_off,
                   idx_ref,        # (BT, 1) int32
                   tok_ref,        # (VOCAB_PAD, C)  zero-padded token table
                   posbias_ref,    # (BT, BT + C)    [causal additive bias | tiled pos]
                   w_ref,          # (C, W_TOTAL)    coalesced weight slab
                   b_ref,          # (1, VP + C)     [bfc padded | bff_eff]
                   out_ref):       # (BT, VP)
    BT = batch * seq_len
    C = num_heads * head_size
    VP = vocab_pad

    # ---- fused embedding gather (one-hot matmul on MXU) + positional add ---
    ids = idx_ref[...]                                            # (BT, 1)
    vocab_iota = lax.broadcasted_iota(jnp.int32, (BT, VP), 1)
    onehot = (ids == vocab_iota).astype(jnp.float32)              # (BT, VP)
    tok = jnp.dot(onehot, tok_ref[...],
                  preferred_element_type=jnp.float32)             # (BT, C)

    bias = posbias_ref[:, 0:BT]                                   # (BT, BT)
    pos = posbias_ref[:, BT:BT + C]                               # (BT, C)
    x = tok + pos

    # ---- fused projection: q (pre-scaled), k, v' (= v @ wo per head) -------
    proj_w = 2 * C + num_heads * C
    proj = jnp.dot(x, w_ref[:, 0:proj_w],
                   preferred_element_type=jnp.float32)            # (BT, 2C+H*C)

    acc = jnp.zeros((BT, C), jnp.float32)
    for h in range(num_heads):                    # static unroll (tiny)
        lo = h * head_size
        qh = proj[:, lo:lo + head_size]                           # (BT, hs)
        kh = proj[:, C + lo:C + lo + head_size]                   # (BT, hs)
        vph = proj[:, 2 * C + h * C:2 * C + (h + 1) * C]          # (BT, C)

        # q k^T without an explicit transpose (contract on dim 1 of both)
        scores = lax.dot_general(qh, kh, (((1,), (1,)), ((), ())),
                                 preferred_element_type=jnp.float32)
        wei = scores + bias                       # additive block-causal mask
        m = jnp.max(wei, axis=-1, keepdims=True)  # keep row-max subtraction
        e = jnp.exp(wei - m)
        s = jnp.sum(e, axis=-1, keepdims=True)
        p = e * pl.reciprocal(s, approx=False)    # exact (off MXU crit path)

        # wo already folded into v' -> accumulate straight into the output
        acc = acc + jnp.dot(p, vph, preferred_element_type=jnp.float32)

    # FeedForwardV1: Linear(C, C) + ReLU  (bo folded into bff_eff)
    wff = w_ref[:, ff_off:ff_off + C]
    bff = b_ref[:, VP:VP + C]
    ff = jnp.maximum(
        jnp.dot(acc, wff, preferred_element_type=jnp.float32) + bff, 0.0)

    # lm head: Linear(C, vocab) padded to 128 lanes (dense stores)
    wfc = w_ref[:, fc_off:fc_off + VP]
    bfc = b_ref[:, 0:VP]
    logits = jnp.dot(ff, wfc, preferred_element_type=jnp.float32) + bfc
    out_ref[...] = logits.astype(out_ref.dtype)


@jax.jit
def bigram_forward(idx, params):
    """idx: (B, T) int32 token ids.  Returns logits (B, T, vocab)."""
    B, T = idx.shape
    C = N_EMBED
    H = NUM_HEADS
    hs = HEAD_SIZE
    V = VOCAB_SIZE
    VP = VOCAB_PAD
    BT = B * T

    # ---- trace-time layout / weight-folding prep (fused by XLA, free) ------
    idx_col = idx.reshape(BT, 1).astype(jnp.int32)
    tok_p = jnp.pad(params["tok_emb"], ((0, VP - V), (0, 0)))       # (VP, C)

    # additive block-diagonal causal bias over flattened (BT, BT)
    r = jnp.arange(BT)
    keep = ((r[:, None] // T) == (r[None, :] // T)) & \
           ((r[None, :] % T) <= (r[:, None] % T))
    mask_bias = jnp.where(keep, 0.0, -1e30).astype(jnp.float32)     # (BT, BT)
    pos_tiled = jnp.tile(params["pos_emb"][:T], (B, 1))             # (BT, C)
    posbias = jnp.concatenate([mask_bias, pos_tiled], axis=1)       # (BT, BT+C)

    # fold softmax scale into wq; fold wo into wv per head
    wq_s = params["wq"] * (hs ** -0.5)
    wvo = jnp.concatenate(
        [params["wv"][:, h * hs:(h + 1) * hs] @ params["wo"][h * hs:(h + 1) * hs, :]
         for h in range(H)], axis=1)                                # (C, H*C)

    proj_w, ff_off, fc_off, w_total = _slab_layout(C, H, VP)
    w_slab = jnp.zeros((C, w_total), jnp.float32)
    w_slab = w_slab.at[:, 0:2 * C].set(
        jnp.concatenate([wq_s, params["wk"]], axis=1))
    w_slab = w_slab.at[:, 2 * C:2 * C + H * C].set(wvo)
    w_slab = w_slab.at[:, ff_off:ff_off + C].set(params["wff"])
    w_slab = w_slab.at[:, fc_off:fc_off + V].set(params["wfc"])     # rest = pad

    # fold bo through wff:  (acc + bo) @ wff + bff == acc @ wff + bff_eff
    bff_eff = params["bff"] + params["bo"] @ params["wff"]          # (1, C)
    b_slab = jnp.zeros((1, VP + C), jnp.float32)
    b_slab = b_slab.at[:, 0:V].set(params["bfc"])
    b_slab = b_slab.at[:, VP:VP + C].set(bff_eff)

    kernel = functools.partial(_bigram_kernel, B, T, H, hs, VP, ff_off, fc_off)

    # single gridless invocation; whole arrays live in VMEM (~230 KB total).
    # At BT >= 256 one would add a row-block grid with
    # dimension_semantics=("parallel",) to use both v7x TensorCores.
    logits_p = pl.pallas_call(
        kernel,
        out_shape=jax.ShapeDtypeStruct((BT, VP), jnp.float32),
    )(idx_col, tok_p, posbias, w_slab, b_slab)

    return logits_p.reshape(B, T, VP)[:, :, :V]


# ---------------- deterministic parameter init -------------------------------
def init_params(key):
    ks = jax.random.split(key, 11)
    s = 0.02
    p = {
        "tok_emb": jax.random.normal(ks[0], (VOCAB_SIZE, N_EMBED), jnp.float32) * s,
        "pos_emb": jax.random.normal(ks[1], (BLOCK_SIZE, N_EMBED), jnp.float32) * s,
        # q/k/v Linear(C, head_size, bias=False), all heads concatenated -> (C, C)
        "wq": jax.random.normal(ks[2], (N_EMBED, N_EMBED), jnp.float32) * s,
        "wk": jax.random.normal(ks[3], (N_EMBED, N_EMBED), jnp.float32) * s,
        "wv": jax.random.normal(ks[4], (N_EMBED, N_EMBED), jnp.float32) * s,
        # multi-head output projection Linear(C, C)
        "wo": jax.random.normal(ks[5], (N_EMBED, N_EMBED), jnp.float32) * s,
        "bo": jax.random.normal(ks[6], (1, N_EMBED), jnp.float32) * s,
        # FeedForwardV1: Linear(C, C)
        "wff": jax.random.normal(ks[7], (N_EMBED, N_EMBED), jnp.float32) * s,
        "bff": jax.random.normal(ks[8], (1, N_EMBED), jnp.float32) * s,
        # lm head Linear(C, vocab)
        "wfc": jax.random.normal(ks[9], (N_EMBED, VOCAB_SIZE), jnp.float32) * s,
        "bfc": jax.random.normal(ks[10], (1, VOCAB_SIZE), jnp.float32) * s,
    }
    return p


# ---------------- pure-JAX reference (for a silent sanity check) -------------
def reference_forward(idx, p):
    B, T = idx.shape
    x = jnp.take(p["tok_emb"], idx, axis=0) + p["pos_emb"][:T]        # (B,T,C)
    q = x @ p["wq"]; k = x @ p["wk"]; v = x @ p["wv"]
    hs = HEAD_SIZE
    qh = q.reshape(B, T, NUM_HEADS, hs).transpose(0, 2, 1, 3)
    kh = k.reshape(B, T, NUM_HEADS, hs).transpose(0, 2, 1, 3)
    vh = v.reshape(B, T, NUM_HEADS, hs).transpose(0, 2, 1, 3)
    wei = jnp.einsum("bhqd,bhkd->bhqk", qh, kh) * hs ** -0.5
    mask = jnp.tril(jnp.ones((T, T), bool))
    wei = jnp.where(mask, wei, -jnp.inf)
    wei = jax.nn.softmax(wei, axis=-1)
    attn = jnp.einsum("bhqk,bhkd->bhqd", wei, vh)
    attn = attn.transpose(0, 2, 1, 3).reshape(B, T, N_EMBED)
    attn = attn @ p["wo"] + p["bo"][0]
    ff = jnp.maximum(attn @ p["wff"] + p["bff"][0], 0.0)
    return ff @ p["wfc"] + p["bfc"][0]


# TODO(synk): cross-entropy loss (targets branch) and generate()'s multinomial
# sampling are host/training-side logic and are not lowered to the kernel.

if __name__ == "__main__":
    key = jax.random.PRNGKey(0)
    pkey, ikey = jax.random.split(key)
    params = init_params(pkey)
    idx = jax.random.randint(ikey, (BATCH, BLOCK_SIZE), 0, VOCAB_SIZE,
                             dtype=jnp.int32)

    logits = bigram_forward(idx, params)
    logits = jax.block_until_ready(logits)

    ref = reference_forward(idx, params)
    assert logits.shape == (BATCH, BLOCK_SIZE, VOCAB_SIZE)
    assert jnp.allclose(logits, ref, atol=5e-4, rtol=5e-4)

    print("KERNEL_OK")
</pallas_src>

<mosaic_0001>
module attributes {stable_mosaic.version = 11 : i64} {
  func.func @_bigram_kernel(%arg0: memref<128x1xi32, #tpu.memory_space<vmem>>, %arg1: memref<128x32xf32, #tpu.memory_space<vmem>>, %arg2: memref<128x160xf32, #tpu.memory_space<vmem>>, %arg3: memref<32x512xf32, #tpu.memory_space<vmem>>, %arg4: memref<1x160xf32, #tpu.memory_space<vmem>>, %arg5: memref<128x128xf32, #tpu.memory_space<vmem>>) attributes {dimension_semantics = [], scalar_prefetch = 0 : i64, scratch_operands = 0 : i64, tpu.core_type = #tpu.core_type<tc>} {
    %c0 = arith.constant 0 : index
    %c0_0 = arith.constant 0 : index
    %0 = vector.load %arg0[%c0, %c0_0] : memref<128x1xi32, #tpu.memory_space<vmem>>, vector<128x1xi32>
    %1 = tpu.iota {dimensions = array<i32: 1>} : vector<128x128xi32>
    %2 = vector.broadcast %0 : vector<128x1xi32> to vector<128x128xi32>
    %3 = arith.cmpi eq, %2, %1 : vector<128x128xi32>
    %4 = arith.extui %3 : vector<128x128xi1> to vector<128x128xi32>
    %5 = arith.sitofp %4 : vector<128x128xi32> to vector<128x128xf32>
    %c0_1 = arith.constant 0 : index
    %c0_2 = arith.constant 0 : index
    %6 = vector.load %arg1[%c0_1, %c0_2] : memref<128x32xf32, #tpu.memory_space<vmem>>, vector<128x32xf32>
    %cst = arith.constant dense<0.000000e+00> : vector<128x32xf32>
    %7 = tpu.matmul %5, %6, %cst {dimension_numbers = #tpu.dot_dimension_numbers<[1], [0], [0], [1], [0, 0, 1, 1], [], []>} : vector<128x128xf32>, vector<128x32xf32>, vector<128x32xf32> -> vector<128x32xf32>
    %c0_3 = arith.constant 0 : index
    %c0_4 = arith.constant 0 : index
    %8 = vector.load %arg2[%c0_3, %c0_4] : memref<128x160xf32, #tpu.memory_space<vmem>>, vector<128x128xf32>
    %c0_5 = arith.constant 0 : index
    %c128 = arith.constant 128 : index
    %9 = vector.load %arg2[%c0_5, %c128] : memref<128x160xf32, #tpu.memory_space<vmem>>, vector<128x32xf32>
    %10 = arith.addf %7, %9 : vector<128x32xf32>
    %c0_6 = arith.constant 0 : index
    %c0_7 = arith.constant 0 : index
    %11 = vector.load %arg3[%c0_6, %c0_7] : memref<32x512xf32, #tpu.memory_space<vmem>>, vector<32x192xf32>
    %cst_8 = arith.constant dense<0.000000e+00> : vector<128x192xf32>
    %12 = tpu.matmul %10, %11, %cst_8 {dimension_numbers = #tpu.dot_dimension_numbers<[1], [0], [0], [1], [0, 0, 1, 1], [], []>} : vector<128x32xf32>, vector<32x192xf32>, vector<128x192xf32> -> vector<128x192xf32>
    %cst_9 = arith.constant 0.000000e+00 : f32
    %13 = vector.broadcast %cst_9 : f32 to vector<128x32xf32>
    %14 = vector.extract_strided_slice %12 {offsets = [0, 0], sizes = [128, 8], strides = [1, 1]} : vector<128x192xf32> to vector<128x8xf32>
    %15 = vector.extract_strided_slice %12 {offsets = [0, 32], sizes = [128, 8], strides = [1, 1]} : vector<128x192xf32> to vector<128x8xf32>
    %16 = vector.extract_strided_slice %12 {offsets = [0, 64], sizes = [128, 32], strides = [1, 1]} : vector<128x192xf32> to vector<128x32xf32>
    %cst_10 = arith.constant dense<0.000000e+00> : vector<128x128xf32>
    %17 = tpu.matmul %14, %15, %cst_10 {dimension_numbers = #tpu.dot_dimension_numbers<[1], [1], [0], [0], [0, 0, 1, 0], [], []>} : vector<128x8xf32>, vector<128x8xf32>, vector<128x128xf32> -> vector<128x128xf32>
    %18 = arith.addf %17, %8 : vector<128x128xf32>
    %cst_11 = arith.constant dense<0xFF800000> : vector<128xf32>
    %19 = vector.multi_reduction <maximumf>, %18, %cst_11 [1] : vector<128x128xf32> to vector<128xf32>
    %20 = vector.shape_cast %19 : vector<128xf32> to vector<128x1xf32>
    %21 = vector.broadcast %20 : vector<128x1xf32> to vector<128x128xf32>
    %22 = arith.subf %18, %21 : vector<128x128xf32>
    %23 = math.exp %22 : vector<128x128xf32>
    %cst_12 = arith.constant dense<0.000000e+00> : vector<128xf32>
    %24 = vector.multi_reduction <add>, %23, %cst_12 [1] : vector<128x128xf32> to vector<128xf32>
    %25 = vector.shape_cast %24 : vector<128xf32> to vector<128x1xf32>
    %26 = tpu.reciprocal %25 : vector<128x1xf32> -> vector<128x1xf32>
    %27 = vector.broadcast %26 : vector<128x1xf32> to vector<128x128xf32>
    %28 = arith.mulf %23, %27 : vector<128x128xf32>
    %cst_13 = arith.constant dense<0.000000e+00> : vector<128x32xf32>
    %29 = tpu.matmul %28, %16, %cst_13 {dimension_numbers = #tpu.dot_dimension_numbers<[1], [0], [0], [1], [0, 0, 1, 1], [], []>} : vector<128x128xf32>, vector<128x32xf32>, vector<128x32xf32> -> vector<128x32xf32>
    %30 = arith.addf %13, %29 : vector<128x32xf32>
    %31 = vector.extract_strided_slice %12 {offsets = [0, 8], sizes = [128, 8], strides = [1, 1]} : vector<128x192xf32> to vector<128x8xf32>
    %32 = vector.extract_strided_slice %12 {offsets = [0, 40], sizes = [128, 8], strides = [1, 1]} : vector<128x192xf32> to vector<128x8xf32>
    %33 = vector.extract_strided_slice %12 {offsets = [0, 96], sizes = [128, 32], strides = [1, 1]} : vector<128x192xf32> to vector<128x32xf32>
    %cst_14 = arith.constant dense<0.000000e+00> : vector<128x128xf32>
    %34 = tpu.matmul %31, %32, %cst_14 {dimension_numbers = #tpu.dot_dimension_numbers<[1], [1], [0], [0], [0, 0, 1, 0], [], []>} : vector<128x8xf32>, vector<128x8xf32>, vector<128x128xf32> -> vector<128x128xf32>
    %35 = arith.addf %34, %8 : vector<128x128xf32>
    %cst_15 = arith.constant dense<0xFF800000> : vector<128xf32>
    %36 = vector.multi_reduction <maximumf>, %35, %cst_15 [1] : vector<128x128xf32> to vector<128xf32>
    %37 = vector.shape_cast %36 : vector<128xf32> to vector<128x1xf32>
    %38 = vector.broadcast %37 : vector<128x1xf32> to vector<128x128xf32>
    %39 = arith.subf %35, %38 : vector<128x128xf32>
    %40 = math.exp %39 : vector<128x128xf32>
    %cst_16 = arith.constant dense<0.000000e+00> : vector<128xf32>
    %41 = vector.multi_reduction <add>, %40, %cst_16 [1] : vector<128x128xf32> to vector<128xf32>
    %42 = vector.shape_cast %41 : vector<128xf32> to vector<128x1xf32>
    %43 = tpu.reciprocal %42 : vector<128x1xf32> -> vector<128x1xf32>
    %44 = vector.broadcast %43 : vector<128x1xf32> to vector<128x128xf32>
    %45 = arith.mulf %40, %44 : vector<128x128xf32>
    %cst_17 = arith.constant dense<0.000000e+00> : vector<128x32xf32>
    %46 = tpu.matmul %45, %33, %cst_17 {dimension_numbers = #tpu.dot_dimension_numbers<[1], [0], [0], [1], [0, 0, 1, 1], [], []>} : vector<128x128xf32>, vector<128x32xf32>, vector<128x32xf32> -> vector<128x32xf32>
    %47 = arith.addf %30, %46 : vector<128x32xf32>
    %48 = vector.extract_strided_slice %12 {offsets = [0, 16], sizes = [128, 8], strides = [1, 1]} : vector<128x192xf32> to vector<128x8xf32>
    %49 = vector.extract_strided_slice %12 {offsets = [0, 48], sizes = [128, 8], strides = [1, 1]} : vector<128x192xf32> to vector<128x8xf32>
    %50 = vector.extract_strided_slice %12 {offsets = [0, 128], sizes = [128, 32], strides = [1, 1]} : vector<128x192xf32> to vector<128x32xf32>
    %cst_18 = arith.constant dense<0.000000e+00> : vector<128x128xf32>
    %51 = tpu.matmul %48, %49, %cst_18 {dimension_numbers = #tpu.dot_dimension_numbers<[1], [1], [0], [0], [0, 0, 1, 0], [], []>} : vector<128x8xf32>, vector<128x8xf32>, vector<128x128xf32> -> vector<128x128xf32>
    %52 = arith.addf %51, %8 : vector<128x128xf32>
    %cst_19 = arith.constant dense<0xFF800000> : vector<128xf32>
    %53 = vector.multi_reduction <maximumf>, %52, %cst_19 [1] : vector<128x128xf32> to vector<128xf32>
    %54 = vector.shape_cast %53 : vector<128xf32> to vector<128x1xf32>
    %55 = vector.broadcast %54 : vector<128x1xf32> to vector<128x128xf32>
    %56 = arith.subf %52, %55 : vector<128x128xf32>
    %57 = math.exp %56 : vector<128x128xf32>
    %cst_20 = arith.constant dense<0.000000e+00> : vector<128xf32>
    %58 = vector.multi_reduction <add>, %57, %cst_20 [1] : vector<128x128xf32> to vector<128xf32>
    %59 = vector.shape_cast %58 : vector<128xf32> to vector<128x1xf32>
    %60 = tpu.reciprocal %59 : vector<128x1xf32> -> vector<128x1xf32>
    %61 = vector.broadcast %60 : vector<128x1xf32> to vector<128x128xf32>
    %62 = arith.mulf %57, %61 : vector<128x128xf32>
    %cst_21 = arith.constant dense<0.000000e+00> : vector<128x32xf32>
    %63 = tpu.matmul %62, %50, %cst_21 {dimension_numbers = #tpu.dot_dimension_numbers<[1], [0], [0], [1], [0, 0, 1, 1], [], []>} : vector<128x128xf32>, vector<128x32xf32>, vector<128x32xf32> -> vector<128x32xf32>
    %64 = arith.addf %47, %63 : vector<128x32xf32>
    %65 = vector.extract_strided_slice %12 {offsets = [0, 24], sizes = [128, 8], strides = [1, 1]} : vector<128x192xf32> to vector<128x8xf32>
    %66 = vector.extract_strided_slice %12 {offsets = [0, 56], sizes = [128, 8], strides = [1, 1]} : vector<128x192xf32> to vector<128x8xf32>
    %67 = vector.extract_strided_slice %12 {offsets = [0, 160], sizes = [128, 32], strides = [1, 1]} : vector<128x192xf32> to vector<128x32xf32>
    %cst_22 = arith.constant dense<0.000000e+00> : vector<128x128xf32>
    %68 = tpu.matmul %65, %66, %cst_22 {dimension_numbers = #tpu.dot_dimension_numbers<[1], [1], [0], [0], [0, 0, 1, 0], [], []>} : vector<128x8xf32>, vector<128x8xf32>, vector<128x128xf32> -> vector<128x128xf32>
    %69 = arith.addf %68, %8 : vector<128x128xf32>
    %cst_23 = arith.constant dense<0xFF800000> : vector<128xf32>
    %70 = vector.multi_reduction <maximumf>, %69, %cst_23 [1] : vector<128x128xf32> to vector<128xf32>
    %71 = vector.shape_cast %70 : vector<128xf32> to vector<128x1xf32>
    %72 = vector.broadcast %71 : vector<128x1xf32> to vector<128x128xf32>
    %73 = arith.subf %69, %72 : vector<128x128xf32>
    %74 = math.exp %73 : vector<128x128xf32>
    %cst_24 = arith.constant dense<0.000000e+00> : vector<128xf32>
    %75 = vector.multi_reduction <add>, %74, %cst_24 [1] : vector<128x128xf32> to vector<128xf32>
    %76 = vector.shape_cast %75 : vector<128xf32> to vector<128x1xf32>
    %77 = tpu.reciprocal %76 : vector<128x1xf32> -> vector<128x1xf32>
    %78 = vector.broadcast %77 : vector<128x1xf32> to vector<128x128xf32>
    %79 = arith.mulf %74, %78 : vector<128x128xf32>
    %cst_25 = arith.constant dense<0.000000e+00> : vector<128x32xf32>
    %80 = tpu.matmul %79, %67, %cst_25 {dimension_numbers = #tpu.dot_dimension_numbers<[1], [0], [0], [1], [0, 0, 1, 1], [], []>} : vector<128x128xf32>, vector<128x32xf32>, vector<128x32xf32> -> vector<128x32xf32>
    %81 = arith.addf %64, %80 : vector<128x32xf32>
    %c0_26 = arith.constant 0 : index
    %c256 = arith.constant 256 : index
    %82 = vector.load %arg3[%c0_26, %c256] : memref<32x512xf32, #tpu.memory_space<vmem>>, vector<32x32xf32>
    %c0_27 = arith.constant 0 : index
    %c128_28 = arith.constant 128 : index
    %83 = vector.load %arg4[%c0_27, %c128_28] : memref<1x160xf32, #tpu.memory_space<vmem>>, vector<1x32xf32>
    %cst_29 = arith.constant dense<0.000000e+00> : vector<128x32xf32>
    %84 = tpu.matmul %81, %82, %cst_29 {dimension_numbers = #tpu.dot_dimension_numbers<[1], [0], [0], [1], [0, 0, 1, 1], [], []>} : vector<128x32xf32>, vector<32x32xf32>, vector<128x32xf32> -> vector<128x32xf32>
    %85 = vector.broadcast %83 : vector<1x32xf32> to vector<128x32xf32>
    %86 = arith.addf %84, %85 : vector<128x32xf32>
    %cst_30 = arith.constant 0.000000e+00 : f32
    %87 = vector.broadcast %cst_30 : f32 to vector<128x32xf32>
    %88 = arith.maximumf %86, %87 : vector<128x32xf32>
    %c0_31 = arith.constant 0 : index
    %c384 = arith.constant 384 : index
    %89 = vector.load %arg3[%c0_31, %c384] : memref<32x512xf32, #tpu.memory_space<vmem>>, vector<32x128xf32>
    %c0_32 = arith.constant 0 : index
    %c0_33 = arith.constant 0 : index
    %90 = vector.load %arg4[%c0_32, %c0_33] : memref<1x160xf32, #tpu.memory_space<vmem>>, vector<1x128xf32>
    %cst_34 = arith.constant dense<0.000000e+00> : vector<128x128xf32>
    %91 = tpu.matmul %88, %89, %cst_34 {dimension_numbers = #tpu.dot_dimension_numbers<[1], [0], [0], [1], [0, 0, 1, 1], [], []>} : vector<128x32xf32>, vector<32x128xf32>, vector<128x128xf32> -> vector<128x128xf32>
    %92 = vector.broadcast %90 : vector<1x128xf32> to vector<128x128xf32>
    %93 = arith.addf %91, %92 : vector<128x128xf32>
    %c0_35 = arith.constant 0 : index
    %c0_36 = arith.constant 0 : index
    %94 = vector.load %arg5[%c0_35, %c0_36] : memref<128x128xf32, #tpu.memory_space<vmem>>, vector<128x128xf32>
    tpu.vector_store %arg5[%c0_35, %c0_36], %93 {strides = array<i32>} : memref<128x128xf32, #tpu.memory_space<vmem>>, vector<128x128xf32>,
    return
  }
}

</mosaic_0001>

<llo_original>
// kernel: bigram_forward.1
$region0: #{bigram_forward.1}
  #allocation0 [shape = 'u32[]', space=smem, size = 0x4, offset = 0x4, fixed_abs, tag = 'smem constant byte address 0x4 - core index']
  #allocation1 [shape = 'u32[72,128]{1,0:T(1,128)}', space=vmem, size = 0x9000, scoped, tag = 'internal scratch']
  %s0 = inlined_call_operand.vmem [shape: s32[128,1], index: 0, kind: input, shape index: {}]
  %s1 = inlined_call_operand.vmem [shape: f32[128,32], index: 1, kind: input, shape index: {}]
  %s2 = inlined_call_operand.vmem [shape: f32[128,160], index: 2, kind: input, shape index: {}]
  %s3 = inlined_call_operand.vmem [shape: f32[32,512], index: 3, kind: input, shape index: {}]
  %s4 = inlined_call_operand.vmem [shape: f32[1,160], index: 4, kind: input, shape index: {}]
  %s5 = inlined_call_operand.hbm [shape: f32[128,128], index: 5, kind: output, shape index: {}]
  %s6 = sld [smem:[#allocation0]]
  $region30: #{bigram_forward.1} parent=0
    _
  %s8 = ssub.s32 1, %s6
  %s9 = scalar_select 0, %s8, %s6
  $region1: #{bigram_forward.1} parent=0
    #allocation2 [shape = 'u8[65536]{0}', space=vmem, size = 0x10000, scoped, tag = 'output window, operand 0, single buffered']
    #allocation3 [shape = 's32[1]{0}', space=sflag, size = 0x4, scoped, tag = 'scoped memory for bigram_forward.1']
    %10 = vsyncpa [#allocation3], 0
    // Predicated region
    $region2: #{bigram_forward.1} parent=1 // pred_check
      _
    $region3: #{bigram_forward.1} parent=1 // pred_check_branch
      %12 = sbr.rel (0) target = $region5
    $region4: #{bigram_forward.1} parent=1 // pred_region
      _
    $region5: #{bigram_forward.1} parent=1 // pred_fallthru
      _
    // Predicated region
    $region6: #{bigram_forward.1} parent=1 // pred_check
      _
    $region7: #{bigram_forward.1} parent=1 // pred_check_branch
      %14 = sbr.rel (0) target = $region9
    $region8: #{bigram_forward.1} parent=1 // pred_region
      _
    $region9: #{bigram_forward.1} parent=1 // pred_fallthru
      _
    // Predicated region
    $region10: #{bigram_forward.1} parent=1 // pred_check
      _
    $region11: #{bigram_forward.1} parent=1 // pred_check_branch
      %16 = sbr.rel (0) target = $region13
    $region12: #{bigram_forward.1} parent=1 // pred_region
      _
    $region13: #{bigram_forward.1} parent=1 // pred_fallthru
      _
    // Predicated region
    $region14: #{bigram_forward.1} parent=1 // pred_check
      _
    $region15: #{bigram_forward.1} parent=1 // pred_check_branch
      %18 = sbr.rel (0) target = $region17
    $region16: #{bigram_forward.1} parent=1 // pred_region
      _
    $region17: #{bigram_forward.1} parent=1 // pred_fallthru
      _
    // Predicated region
    $region18: #{bigram_forward.1} parent=1 // pred_check
      _
    $region19: #{bigram_forward.1} parent=1 // pred_check_branch
      %20 = sbr.rel (0) target = $region21
    $region20: #{bigram_forward.1} parent=1 // pred_region
      _
    $region21: #{bigram_forward.1} parent=1 // pred_fallthru
      _
    %v21 = vld [vmem:[%s0] sm:$0xff]
    %v22 = vld [vmem:[%s0 + $0x8] sm:$0xff]
    %v23 = vld [vmem:[%s0 + $0x10] sm:$0xff]
    %v24 = vld [vmem:[%s0 + $0x18] sm:$0xff]
    %v25 = vld [vmem:[%s0 + $0x20] sm:$0xff]
    %v26 = vld [vmem:[%s0 + $0x28] sm:$0xff]
    %v27 = vld [vmem:[%s0 + $0x30] sm:$0xff]
    %v28 = vld [vmem:[%s0 + $0x38] sm:$0xff]
    %v29 = vld [vmem:[%s0 + $0x40] sm:$0xff]
    %v30 = vld [vmem:[%s0 + $0x48] sm:$0xff]
    %v31 = vld [vmem:[%s0 + $0x50] sm:$0xff]
    %v32 = vld [vmem:[%s0 + $0x58] sm:$0xff]
    %v33 = vld [vmem:[%s0 + $0x60] sm:$0xff]
    %v34 = vld [vmem:[%s0 + $0x68] sm:$0xff]
    %v35 = vld [vmem:[%s0 + $0x70] sm:$0xff]
    %v36 = vld [vmem:[%s0 + $0x78] sm:$0xff]
    %v37 = vlaneseq
    %v38 = vand.u32 %v37, 127
    %39 = vset.pattern.permute.xlu0 0
    %40 = vperm.xlu0 %39, %v21
    %v41 = vpop.permute.xlu0 %40
    %42 = vset.pattern.permute.xlu0 0
    %43 = vperm.xlu0 %42, %v22
    %v44 = vpop.permute.xlu0 %43
    %45 = vset.pattern.permute.xlu0 0
    %46 = vperm.xlu0 %45, %v23
    %v47 = vpop.permute.xlu0 %46
    %48 = vset.pattern.permute.xlu0 0
    %49 = vperm.xlu0 %48, %v24
    %v50 = vpop.permute.xlu0 %49
    %51 = vset.pattern.permute.xlu0 0
    %52 = vperm.xlu0 %51, %v25
    %v53 = vpop.permute.xlu0 %52
    %54 = vset.pattern.permute.xlu0 0
    %55 = vperm.xlu0 %54, %v26
    %v56 = vpop.permute.xlu0 %55
    %57 = vset.pattern.permute.xlu0 0
    %58 = vperm.xlu0 %57, %v27
    %v59 = vpop.permute.xlu0 %58
    %60 = vset.pattern.permute.xlu0 0
    %61 = vperm.xlu0 %60, %v28
    %v62 = vpop.permute.xlu0 %61
    %63 = vset.pattern.permute.xlu0 0
    %64 = vperm.xlu0 %63, %v29
    %v65 = vpop.permute.xlu0 %64
    %66 = vset.pattern.permute.xlu0 0
    %67 = vperm.xlu0 %66, %v30
    %v68 = vpop.permute.xlu0 %67
    %69 = vset.pattern.permute.xlu0 0
    %70 = vperm.xlu0 %69, %v31
    %v71 = vpop.permute.xlu0 %70
    %72 = vset.pattern.permute.xlu0 0
    %73 = vperm.xlu0 %72, %v32
    %v74 = vpop.permute.xlu0 %73
    %75 = vset.pattern.permute.xlu0 0
    %76 = vperm.xlu0 %75, %v33
    %v77 = vpop.permute.xlu0 %76
    %78 = vset.pattern.permute.xlu0 0
    %79 = vperm.xlu0 %78, %v34
    %v80 = vpop.permute.xlu0 %79
    %81 = vset.pattern.permute.xlu0 0
    %82 = vperm.xlu0 %81, %v35
    %v83 = vpop.permute.xlu0 %82
    %84 = vset.pattern.permute.xlu0 0
    %85 = vperm.xlu0 %84, %v36
    %v86 = vpop.permute.xlu0 %85
    %vm87 = vcmp.eq.s32.totalorder %v41, %v38
    %vm88 = vcmp.eq.s32.totalorder %v44, %v38
    %vm89 = vcmp.eq.s32.totalorder %v47, %v38
    %vm90 = vcmp.eq.s32.totalorder %v50, %v38
    %vm91 = vcmp.eq.s32.totalorder %v53, %v38
    %vm92 = vcmp.eq.s32.totalorder %v56, %v38
    %vm93 = vcmp.eq.s32.totalorder %v59, %v38
    %vm94 = vcmp.eq.s32.totalorder %v62, %v38
    %vm95 = vcmp.eq.s32.totalorder %v65, %v38
    %vm96 = vcmp.eq.s32.totalorder %v68, %v38
    %vm97 = vcmp.eq.s32.totalorder %v71, %v38
    %vm98 = vcmp.eq.s32.totalorder %v74, %v38
    %vm99 = vcmp.eq.s32.totalorder %v77, %v38
    %vm100 = vcmp.eq.s32.totalorder %v80, %v38
    %vm101 = vcmp.eq.s32.totalorder %v83, %v38
    %vm102 = vcmp.eq.s32.totalorder %v86, %v38
    %v103 = vsel %vm87, 1, 0
    %v104 = vsel %vm88, 1, 0
    %v105 = vsel %vm89, 1, 0
    %v106 = vsel %vm90, 1, 0
    %v107 = vsel %vm91, 1, 0
    %v108 = vsel %vm92, 1, 0
    %v109 = vsel %vm93, 1, 0
    %v110 = vsel %vm94, 1, 0
    %v111 = vsel %vm95, 1, 0
    %v112 = vsel %vm96, 1, 0
    %v113 = vsel %vm97, 1, 0
    %v114 = vsel %vm98, 1, 0
    %v115 = vsel %vm99, 1, 0
    %v116 = vsel %vm100, 1, 0
    %v117 = vsel %vm101, 1, 0
    %v118 = vsel %vm102, 1, 0
    %v119 = vcvt.s32.f32 %v103
    %v120 = vcvt.s32.f32 %v104
    %v121 = vcvt.s32.f32 %v105
    %v122 = vcvt.s32.f32 %v106
    %v123 = vcvt.s32.f32 %v107
    %v124 = vcvt.s32.f32 %v108
    %v125 = vcvt.s32.f32 %v109
    %v126 = vcvt.s32.f32 %v110
    %v127 = vcvt.s32.f32 %v111
    %v128 = vcvt.s32.f32 %v112
    %v129 = vcvt.s32.f32 %v113
    %v130 = vcvt.s32.f32 %v114
    %v131 = vcvt.s32.f32 %v115
    %v132 = vcvt.s32.f32 %v116
    %v133 = vcvt.s32.f32 %v117
    %v134 = vcvt.s32.f32 %v118
    %v135 = vld [vmem:[%s1] sm:$0xff]
    %v136 = vld [vmem:[%s1 + $0x8] sm:$0xff]
    %v137 = vld [vmem:[%s1 + $0x10] sm:$0xff]
    %v138 = vld [vmem:[%s1 + $0x18] sm:$0xff]
    %v139 = vld [vmem:[%s1 + $0x20] sm:$0xff]
    %v140 = vld [vmem:[%s1 + $0x28] sm:$0xff]
    %v141 = vld [vmem:[%s1 + $0x30] sm:$0xff]
    %v142 = vld [vmem:[%s1 + $0x38] sm:$0xff]
    %v143 = vld [vmem:[%s1 + $0x40] sm:$0xff]
    %v144 = vld [vmem:[%s1 + $0x48] sm:$0xff]
    %v145 = vld [vmem:[%s1 + $0x50] sm:$0xff]
    %v146 = vld [vmem:[%s1 + $0x58] sm:$0xff]
    %v147 = vld [vmem:[%s1 + $0x60] sm:$0xff]
    %v148 = vld [vmem:[%s1 + $0x68] sm:$0xff]
    %v149 = vld [vmem:[%s1 + $0x70] sm:$0xff]
    %v150 = vld [vmem:[%s1 + $0x78] sm:$0xff]
    %v151 = vld [vmem:[%s2] sm:$0xff]
    %v152 = vld [vmem:[%s2 + $0x10] sm:$0xff]
    %v153 = vld [vmem:[%s2 + $0x20] sm:$0xff]
    %v154 = vld [vmem:[%s2 + $0x30] sm:$0xff]
    %v155 = vld [vmem:[%s2 + $0x40] sm:$0xff]
    %v156 = vld [vmem:[%s2 + $0x50] sm:$0xff]
    %v157 = vld [vmem:[%s2 + $0x60] sm:$0xff]
    %v158 = vld [vmem:[%s2 + $0x70] sm:$0xff]
    %v159 = vld [vmem:[%s2 + $0x80] sm:$0xff]
    %v160 = vld [vmem:[%s2 + $0x90] sm:$0xff]
    %v161 = vld [vmem:[%s2 + $0xa0] sm:$0xff]
    %v162 = vld [vmem:[%s2 + $0xb0] sm:$0xff]
    %v163 = vld [vmem:[%s2 + $0xc0] sm:$0xff]
    %v164 = vld [vmem:[%s2 + $0xd0] sm:$0xff]
    %v165 = vld [vmem:[%s2 + $0xe0] sm:$0xff]
    %v166 = vld [vmem:[%s2 + $0xf0] sm:$0xff]
    %v167 = vld [vmem:[%s2 + $0x8] sm:$0xff]
    %v168 = vld [vmem:[%s2 + $0x18] sm:$0xff]
    %v169 = vld [vmem:[%s2 + $0x28] sm:$0xff]
    %v170 = vld [vmem:[%s2 + $0x38] sm:$0xff]
    %v171 = vld [vmem:[%s2 + $0x48] sm:$0xff]
    %v172 = vld [vmem:[%s2 + $0x58] sm:$0xff]
    %v173 = vld [vmem:[%s2 + $0x68] sm:$0xff]
    %v174 = vld [vmem:[%s2 + $0x78] sm:$0xff]
    %v175 = vld [vmem:[%s2 + $0x88] sm:$0xff]
    %v176 = vld [vmem:[%s2 + $0x98] sm:$0xff]
    %v177 = vld [vmem:[%s2 + $0xa8] sm:$0xff]
    %v178 = vld [vmem:[%s2 + $0xb8] sm:$0xff]
    %v179 = vld [vmem:[%s2 + $0xc8] sm:$0xff]
    %v180 = vld [vmem:[%s2 + $0xd8] sm:$0xff]
    %v181 = vld [vmem:[%s2 + $0xe8] sm:$0xff]
    %v182 = vld [vmem:[%s2 + $0xf8] sm:$0xff]
    %183 = vmatpush.msra.mxu0 %v150
    %184 = vmatpush.msra.mxu0 %v149
    %185 = vmatpush.msra.mxu0 %v148
    %186 = vmatpush.msra.mxu0 %v147
    %187 = vmatpush.msra.mxu0 %v146
    %188 = vmatpush.msra.mxu0 %v145
    %189 = vmatpush.msra.mxu0 %v144
    %190 = vmatpush.msra.mxu0 %v143
    %191 = vmatpush.msra.mxu0 %v142
    %192 = vmatpush.msra.mxu0 %v141
    %193 = vmatpush.msra.mxu0 %v140
    %194 = vmatpush.msra.mxu0 %v139
    %195 = vmatpush.msra.mxu0 %v138
    %196 = vmatpush.msra.mxu0 %v137
    %197 = vmatpush.msra.mxu0 %v136
    %198 = vmatpush.msra.mxu0 %v135
    %199 = vmatmul.f32.gmra.mxu0 %v119
    %v200 = vpop.f32.mrf.mxu0
    %v201 = vadd.f32 %v167, %v200
    %202 = vmatmul.f32.gmra.mxu0 %v120
    %v203 = vpop.f32.mrf.mxu0
    %v204 = vadd.f32 %v168, %v203
    %205 = vmatmul.f32.gmra.mxu0 %v121
    %v206 = vpop.f32.mrf.mxu0
    %v207 = vadd.f32 %v169, %v206
    %208 = vmatmul.f32.gmra.mxu0 %v122
    %v209 = vpop.f32.mrf.mxu0
    %v210 = vadd.f32 %v170, %v209
    %211 = vmatmul.f32.gmra.mxu0 %v123
    %v212 = vpop.f32.mrf.mxu0
    %v213 = vadd.f32 %v171, %v212
    %214 = vmatmul.f32.gmra.mxu0 %v124
    %v215 = vpop.f32.mrf.mxu0
    %v216 = vadd.f32 %v172, %v215
    %217 = vmatmul.f32.gmra.mxu0 %v125
    %v218 = vpop.f32.mrf.mxu0
    %v219 = vadd.f32 %v173, %v218
    %220 = vmatmul.f32.gmra.mxu0 %v126
    %v221 = vpop.f32.mrf.mxu0
    %v222 = vadd.f32 %v174, %v221
    %223 = vmatmul.f32.gmra.mxu0 %v127
    %v224 = vpop.f32.mrf.mxu0
    %v225 = vadd.f32 %v175, %v224
    %226 = vmatmul.f32.gmra.mxu0 %v128
    %v227 = vpop.f32.mrf.mxu0
    %v228 = vadd.f32 %v176, %v227
    %229 = vmatmul.f32.gmra.mxu0 %v129
    %v230 = vpop.f32.mrf.mxu0
    %v231 = vadd.f32 %v177, %v230
    %232 = vmatmul.f32.gmra.mxu0 %v130
    %v233 = vpop.f32.mrf.mxu0
    %v234 = vadd.f32 %v178, %v233
    %235 = vmatmul.f32.gmra.mxu0 %v131
    %v236 = vpop.f32.mrf.mxu0
    %v237 = vadd.f32 %v179, %v236
    %238 = vmatmul.f32.gmra.mxu0 %v132
    %v239 = vpop.f32.mrf.mxu0
    %v240 = vadd.f32 %v180, %v239
    %241 = vmatmul.f32.gmra.mxu0 %v133
    %v242 = vpop.f32.mrf.mxu0
    %v243 = vadd.f32 %v181, %v242
    %244 = vmatmul.f32.gmra.mxu0 %v134
    %v245 = vpop.f32.mrf.mxu0
    %v246 = vadd.f32 %v182, %v245
    %247 = vdwg.mxu0
    %v248 = vld [vmem:[%s3] sm:$0xff]
    %v249 = vld [vmem:[%s3 + $0x8] sm:$0xff]
    %v250 = vld [vmem:[%s3 + $0x20] sm:$0xff]
    %v251 = vld [vmem:[%s3 + $0x28] sm:$0xff]
    %v252 = vld [vmem:[%s3 + $0x40] sm:$0xff]
    %v253 = vld [vmem:[%s3 + $0x48] sm:$0xff]
    %v254 = vld [vmem:[%s3 + $0x60] sm:$0xff]
    %v255 = vld [vmem:[%s3 + $0x68] sm:$0xff]
    %vm256 = vcmask 261120
    %v258 = vsel %vm256, %v201, 0
    %v261 = vsel %vm256, %v204, 0
    %v264 = vsel %vm256, %v207, 0
    %v267 = vsel %vm256, %v210, 0
    %v270 = vsel %vm256, %v213, 0
    %v273 = vsel %vm256, %v216, 0
    %v276 = vsel %vm256, %v219, 0
    %v279 = vsel %vm256, %v222, 0
    %v282 = vsel %vm256, %v225, 0
    %v285 = vsel %vm256, %v228, 0
    %v288 = vsel %vm256, %v231, 0
    %v291 = vsel %vm256, %v234, 0
    %v294 = vsel %vm256, %v237, 0
    %v297 = vsel %vm256, %v240, 0
    %v300 = vsel %vm256, %v243, 0
    %v303 = vsel %vm256, %v246, 0
    %305 = vmatpush.msra.mxu0 0.0
    %306 = vmatpush.msra.mxu0 0.0
    %307 = vmatpush.msra.mxu0 0.0
    %308 = vmatpush.msra.mxu0 0.0
    %309 = vmatpush.msra.mxu0 0.0
    %310 = vmatpush.msra.mxu0 0.0
    %311 = vmatpush.msra.mxu0 0.0
    %312 = vmatpush.msra.mxu0 0.0
    %313 = vmatpush.msra.mxu0 0.0
    %314 = vmatpush.msra.mxu0 0.0
    %315 = vmatpush.msra.mxu0 0.0
    %316 = vmatpush.msra.mxu0 0.0
    %317 = vmatpush.msra.mxu0 %v254
    %318 = vmatpush.msra.mxu0 %v252
    %319 = vmatpush.msra.mxu0 %v250
    %320 = vmatpush.msra.mxu0 %v248
    %321 = vmatmul.f32.gmra.mxu0 %v258
    %v322 = vpop.f32.mrf.mxu0
    %v323 = vadd.f32 0.0, %v322
    %324 = vmatmul.f32.gmra.mxu0 %v261
    %v325 = vpop.f32.mrf.mxu0
    %v326 = vadd.f32 0.0, %v325
    %327 = vmatmul.f32.gmra.mxu0 %v264
    %v328 = vpop.f32.mrf.mxu0
    %v329 = vadd.f32 0.0, %v328
    %330 = vmatmul.f32.gmra.mxu0 %v267
    %v331 = vpop.f32.mrf.mxu0
    %v332 = vadd.f32 0.0, %v331
    %333 = vmatmul.f32.gmra.mxu0 %v270
    %v334 = vpop.f32.mrf.mxu0
    %v335 = vadd.f32 0.0, %v334
    %336 = vmatmul.f32.gmra.mxu0 %v273
    %v337 = vpop.f32.mrf.mxu0
    %v338 = vadd.f32 0.0, %v337
    %339 = vmatmul.f32.gmra.mxu0 %v276
    %v340 = vpop.f32.mrf.mxu0
    %v341 = vadd.f32 0.0, %v340
    %342 = vmatmul.f32.gmra.mxu0 %v279
    %v343 = vpop.f32.mrf.mxu0
    %v344 = vadd.f32 0.0, %v343
    %345 = vmatmul.f32.gmra.mxu0 %v282
    %v346 = vpop.f32.mrf.mxu0
    %v347 = vadd.f32 0.0, %v346
    %348 = vmatmul.f32.gmra.mxu0 %v285
    %v349 = vpop.f32.mrf.mxu0
    %v350 = vadd.f32 0.0, %v349
    %351 = vmatmul.f32.gmra.mxu0 %v288
    %v352 = vpop.f32.mrf.mxu0
    %v353 = vadd.f32 0.0, %v352
    %354 = vmatmul.f32.gmra.mxu0 %v291
    %v355 = vpop.f32.mrf.mxu0
    %v356 = vadd.f32 0.0, %v355
    %357 = vmatmul.f32.gmra.mxu0 %v294
    %v358 = vpop.f32.mrf.mxu0
    %v359 = vadd.f32 0.0, %v358
    %360 = vmatmul.f32.gmra.mxu0 %v297
    %v361 = vpop.f32.mrf.mxu0
    %v362 = vadd.f32 0.0, %v361
    %363 = vmatmul.f32.gmra.mxu0 %v300
    %v364 = vpop.f32.mrf.mxu0
    %v365 = vadd.f32 0.0, %v364
    %366 = vmatmul.f32.gmra.mxu0 %v303
    %v367 = vpop.f32.mrf.mxu0
    %v368 = vadd.f32 0.0, %v367
    %369 = vdwg.mxu0
    %370 = vmatpush.msra.mxu0 0.0
    %371 = vmatpush.msra.mxu0 0.0
    %372 = vmatpush.msra.mxu0 0.0
    %373 = vmatpush.msra.mxu0 0.0
    %374 = vmatpush.msra.mxu0 0.0
    %375 = vmatpush.msra.mxu0 0.0
    %376 = vmatpush.msra.mxu0 0.0
    %377 = vmatpush.msra.mxu0 0.0
    %378 = vmatpush.msra.mxu0 0.0
    %379 = vmatpush.msra.mxu0 0.0
    %380 = vmatpush.msra.mxu0 0.0
    %381 = vmatpush.msra.mxu0 0.0
    %382 = vmatpush.msra.mxu0 %v255
    %383 = vmatpush.msra.mxu0 %v253
    %384 = vmatpush.msra.mxu0 %v251
    %385 = vmatpush.msra.mxu0 %v249
    %386 = vmatmul.f32.gmra.mxu0 %v258
    %v387 = vpop.f32.mrf.mxu0
    %v388 = vadd.f32 0.0, %v387
    %389 = vmatmul.f32.gmra.mxu0 %v261
    %v390 = vpop.f32.mrf.mxu0
    %v391 = vadd.f32 0.0, %v390
    %392 = vmatmul.f32.gmra.mxu0 %v264
    %v393 = vpop.f32.mrf.mxu0
    %v394 = vadd.f32 0.0, %v393
    %395 = vmatmul.f32.gmra.mxu0 %v267
    %v396 = vpop.f32.mrf.mxu0
    %v397 = vadd.f32 0.0, %v396
    %398 = vmatmul.f32.gmra.mxu0 %v270
    %v399 = vpop.f32.mrf.mxu0
    %v400 = vadd.f32 0.0, %v399
    %401 = vmatmul.f32.gmra.mxu0 %v273
    %v402 = vpop.f32.mrf.mxu0
    %v403 = vadd.f32 0.0, %v402
    %404 = vmatmul.f32.gmra.mxu0 %v276
    %v405 = vpop.f32.mrf.mxu0
    %v406 = vadd.f32 0.0, %v405
    %407 = vmatmul.f32.gmra.mxu0 %v279
    %v408 = vpop.f32.mrf.mxu0
    %v409 = vadd.f32 0.0, %v408
    %410 = vmatmul.f32.gmra.mxu0 %v282
    %v411 = vpop.f32.mrf.mxu0
    %v412 = vadd.f32 0.0, %v411
    %413 = vmatmul.f32.gmra.mxu0 %v285
    %v414 = vpop.f32.mrf.mxu0
    %v415 = vadd.f32 0.0, %v414
    %416 = vmatmul.f32.gmra.mxu0 %v288
    %v417 = vpop.f32.mrf.mxu0
    %v418 = vadd.f32 0.0, %v417
    %419 = vmatmul.f32.gmra.mxu0 %v291
    %v420 = vpop.f32.mrf.mxu0
    %v421 = vadd.f32 0.0, %v420
    %422 = vmatmul.f32.gmra.mxu0 %v294
    %v423 = vpop.f32.mrf.mxu0
    %v424 = vadd.f32 0.0, %v423
    %425 = vmatmul.f32.gmra.mxu0 %v297
    %v426 = vpop.f32.mrf.mxu0
    %v427 = vadd.f32 0.0, %v426
    %428 = vmatmul.f32.gmra.mxu0 %v300
    %v429 = vpop.f32.mrf.mxu0
    %v430 = vadd.f32 0.0, %v429
    %431 = vmatmul.f32.gmra.mxu0 %v303
    %v432 = vpop.f32.mrf.mxu0
    %v433 = vadd.f32 0.0, %v432
    %434 = vdwg.mxu0
    %451 = vrot.lane.b32.xlu0 %v323, 96
    %v452 = vpop.permute.xlu0 %451
    %453 = vrot.lane.b32.xlu0 %v326, 96
    %v454 = vpop.permute.xlu0 %453
    %455 = vrot.lane.b32.xlu0 %v329, 96
    %v456 = vpop.permute.xlu0 %455
    %457 = vrot.lane.b32.xlu0 %v332, 96
    %v458 = vpop.permute.xlu0 %457
    %459 = vrot.lane.b32.xlu0 %v335, 96
    %v460 = vpop.permute.xlu0 %459
    %461 = vrot.lane.b32.xlu0 %v338, 96
    %v462 = vpop.permute.xlu0 %461
    %463 = vrot.lane.b32.xlu0 %v341, 96
    %v464 = vpop.permute.xlu0 %463
    %465 = vrot.lane.b32.xlu0 %v344, 96
    %v466 = vpop.permute.xlu0 %465
    %467 = vrot.lane.b32.xlu0 %v347, 96
    %v468 = vpop.permute.xlu0 %467
    %469 = vrot.lane.b32.xlu0 %v350, 96
    %v470 = vpop.permute.xlu0 %469
    %471 = vrot.lane.b32.xlu0 %v353, 96
    %v472 = vpop.permute.xlu0 %471
    %473 = vrot.lane.b32.xlu0 %v356, 96
    %v474 = vpop.permute.xlu0 %473
    %475 = vrot.lane.b32.xlu0 %v359, 96
    %v476 = vpop.permute.xlu0 %475
    %477 = vrot.lane.b32.xlu0 %v362, 96
    %v478 = vpop.permute.xlu0 %477
    %479 = vrot.lane.b32.xlu0 %v365, 96
    %v480 = vpop.permute.xlu0 %479
    %481 = vrot.lane.b32.xlu0 %v368, 96
    %v482 = vpop.permute.xlu0 %481
    %vm483 = vcmask 64512
    %v484 = vsel %vm483, %v323, 0
    %v486 = vsel %vm483, %v326, 0
    %v488 = vsel %vm483, %v329, 0
    %v490 = vsel %vm483, %v332, 0
    %v492 = vsel %vm483, %v335, 0
    %v494 = vsel %vm483, %v338, 0
    %v496 = vsel %vm483, %v341, 0
    %v498 = vsel %vm483, %v344, 0
    %v500 = vsel %vm483, %v347, 0
    %v502 = vsel %vm483, %v350, 0
    %v504 = vsel %vm483, %v353, 0
    %v506 = vsel %vm483, %v356, 0
    %v508 = vsel %vm483, %v359, 0
    %v510 = vsel %vm483, %v362, 0
    %v512 = vsel %vm483, %v365, 0
    %v514 = vsel %vm483, %v368, 0
    %v516 = vsel %vm483, %v452, 0
    %v518 = vsel %vm483, %v454, 0
    %v520 = vsel %vm483, %v456, 0
    %v522 = vsel %vm483, %v458, 0
    %v524 = vsel %vm483, %v460, 0
    %v526 = vsel %vm483, %v462, 0
    %v528 = vsel %vm483, %v464, 0
    %v530 = vsel %vm483, %v466, 0
    %v532 = vsel %vm483, %v468, 0
    %v534 = vsel %vm483, %v470, 0
    %v536 = vsel %vm483, %v472, 0
    %v538 = vsel %vm483, %v474, 0
    %v540 = vsel %vm483, %v476, 0
    %v542 = vsel %vm483, %v478, 0
    %v544 = vsel %vm483, %v480, 0
    %v546 = vsel %vm483, %v482, 0
    %548 = vmatpush.xpose.msra.mxu0 %v546
    %549 = vmatpush.xpose.msra.mxu0 %v544
    %550 = vmatpush.xpose.msra.mxu0 %v542
    %551 = vmatpush.xpose.msra.mxu0 %v540
    %552 = vmatpush.xpose.msra.mxu0 %v538
    %553 = vmatpush.xpose.msra.mxu0 %v536
    %554 = vmatpush.xpose.msra.mxu0 %v534
    %555 = vmatpush.xpose.msra.mxu0 %v532
    %556 = vmatpush.xpose.msra.mxu0 %v530
    %557 = vmatpush.xpose.msra.mxu0 %v528
    %558 = vmatpush.xpose.msra.mxu0 %v526
    %559 = vmatpush.xpose.msra.mxu0 %v524
    %560 = vmatpush.xpose.msra.mxu0 %v522
    %561 = vmatpush.xpose.msra.mxu0 %v520
    %562 = vmatpush.xpose.msra.mxu0 %v518
    %563 = vmatpush.xpose.msra.mxu0 %v516
    %564 = vmatmul.f32.gmra.mxu0 %v484
    %v565 = vpop.f32.mrf.mxu0
    %v566 = vadd.f32 %v151, %v565
    %567 = vmatmul.f32.gmra.mxu0 %v486
    %v568 = vpop.f32.mrf.mxu0
    %v569 = vadd.f32 %v152, %v568
    %570 = vmatmul.f32.gmra.mxu0 %v488
    %v571 = vpop.f32.mrf.mxu0
    %v572 = vadd.f32 %v153, %v571
    %573 = vmatmul.f32.gmra.mxu0 %v490
    %v574 = vpop.f32.mrf.mxu0
    %v575 = vadd.f32 %v154, %v574
    %576 = vmatmul.f32.gmra.mxu0 %v492
    %v577 = vpop.f32.mrf.mxu0
    %v578 = vadd.f32 %v155, %v577
    %579 = vmatmul.f32.gmra.mxu0 %v494
    %v580 = vpop.f32.mrf.mxu0
    %v581 = vadd.f32 %v156, %v580
    %582 = vmatmul.f32.gmra.mxu0 %v496
    %v583 = vpop.f32.mrf.mxu0
    %v584 = vadd.f32 %v157, %v583
    %585 = vmatmul.f32.gmra.mxu0 %v498
    %v586 = vpop.f32.mrf.mxu0
    %v587 = vadd.f32 %v158, %v586
    %588 = vmatmul.f32.gmra.mxu0 %v500
    %v589 = vpop.f32.mrf.mxu0
    %v590 = vadd.f32 %v159, %v589
    %591 = vmatmul.f32.gmra.mxu0 %v502
    %v592 = vpop.f32.mrf.mxu0
    %v593 = vadd.f32 %v160, %v592
    %594 = vmatmul.f32.gmra.mxu0 %v504
    %v595 = vpop.f32.mrf.mxu0
    %v596 = vadd.f32 %v161, %v595
    %597 = vmatmul.f32.gmra.mxu0 %v506
    %v598 = vpop.f32.mrf.mxu0
    %v599 = vadd.f32 %v162, %v598
    %600 = vmatmul.f32.gmra.mxu0 %v508
    %v601 = vpop.f32.mrf.mxu0
    %v602 = vadd.f32 %v163, %v601
    %603 = vmatmul.f32.gmra.mxu0 %v510
    %v604 = vpop.f32.mrf.mxu0
    %v605 = vadd.f32 %v164, %v604
    %606 = vmatmul.f32.gmra.mxu0 %v512
    %v607 = vpop.f32.mrf.mxu0
    %v608 = vadd.f32 %v165, %v607
    %609 = vmatmul.f32.gmra.mxu0 %v514
    %v610 = vpop.f32.mrf.mxu0
    %v611 = vadd.f32 %v166, %v610
    %612 = vdwg.mxu0
    %613 = vmax.xlane.f32.xlu0 %v566
    %v614 = vpop.xlane.xlu0 %613
    %615 = vmax.xlane.f32.xlu0 %v569
    %v616 = vpop.xlane.xlu0 %615
    %617 = vmax.xlane.f32.xlu0 %v572
    %v618 = vpop.xlane.xlu0 %617
    %619 = vmax.xlane.f32.xlu0 %v575
    %v620 = vpop.xlane.xlu0 %619
    %621 = vmax.xlane.f32.xlu0 %v578
    %v622 = vpop.xlane.xlu0 %621
    %623 = vmax.xlane.f32.xlu0 %v581
    %v624 = vpop.xlane.xlu0 %623
    %625 = vmax.xlane.f32.xlu0 %v584
    %v626 = vpop.xlane.xlu0 %625
    %627 = vmax.xlane.f32.xlu0 %v587
    %v628 = vpop.xlane.xlu0 %627
    %629 = vmax.xlane.f32.xlu0 %v590
    %v630 = vpop.xlane.xlu0 %629
    %631 = vmax.xlane.f32.xlu0 %v593
    %v632 = vpop.xlane.xlu0 %631
    %633 = vmax.xlane.f32.xlu0 %v596
    %v634 = vpop.xlane.xlu0 %633
    %635 = vmax.xlane.f32.xlu0 %v599
    %v636 = vpop.xlane.xlu0 %635
    %637 = vmax.xlane.f32.xlu0 %v602
    %v638 = vpop.xlane.xlu0 %637
    %639 = vmax.xlane.f32.xlu0 %v605
    %v640 = vpop.xlane.xlu0 %639
    %641 = vmax.xlane.f32.xlu0 %v608
    %v642 = vpop.xlane.xlu0 %641
    %643 = vmax.xlane.f32.xlu0 %v611
    %v644 = vpop.xlane.xlu0 %643
    %v645 = vsub.f32 %v566, %v614
    %v646 = vsub.f32 %v569, %v616
    %v647 = vsub.f32 %v572, %v618
    %v648 = vsub.f32 %v575, %v620
    %v649 = vsub.f32 %v578, %v622
    %v650 = vsub.f32 %v581, %v624
    %v651 = vsub.f32 %v584, %v626
    %v652 = vsub.f32 %v587, %v628
    %v653 = vsub.f32 %v590, %v630
    %v654 = vsub.f32 %v593, %v632
    %v655 = vsub.f32 %v596, %v634
    %v656 = vsub.f32 %v599, %v636
    %v657 = vsub.f32 %v602, %v638
    %v658 = vsub.f32 %v605, %v640
    %v659 = vsub.f32 %v608, %v642
    %v660 = vsub.f32 %v611, %v644
    %v661 = vmul.f32 %v645, 1.442695
    %v662 = vpow.pop %v661
    %v663 = vmul.f32 %v646, 1.442695
    %v664 = vpow.pop %v663
    %v665 = vmul.f32 %v647, 1.442695
    %v666 = vpow.pop %v665
    %v667 = vmul.f32 %v648, 1.442695
    %v668 = vpow.pop %v667
    %v669 = vmul.f32 %v649, 1.442695
    %v670 = vpow.pop %v669
    %v671 = vmul.f32 %v650, 1.442695
    %v672 = vpow.pop %v671
    %v673 = vmul.f32 %v651, 1.442695
    %v674 = vpow.pop %v673
    %v675 = vmul.f32 %v652, 1.442695
    %v676 = vpow.pop %v675
    %v677 = vmul.f32 %v653, 1.442695
    %v678 = vpow.pop %v677
    %v679 = vmul.f32 %v654, 1.442695
    %v680 = vpow.pop %v679
    %v681 = vmul.f32 %v655, 1.442695
    %v682 = vpow.pop %v681
    %v683 = vmul.f32 %v656, 1.442695
    %v684 = vpow.pop %v683
    %v685 = vmul.f32 %v657, 1.442695
    %v686 = vpow.pop %v685
    %v687 = vmul.f32 %v658, 1.442695
    %v688 = vpow.pop %v687
    %v689 = vmul.f32 %v659, 1.442695
    %v690 = vpow.pop %v689
    %v691 = vmul.f32 %v660, 1.442695
    %v692 = vpow.pop %v691
    %693 = vadd.xlane.f32.xlu0 %v662
    %v694 = vpop.xlane.xlu0 %693
    %695 = vadd.xlane.f32.xlu0 %v664
    %v696 = vpop.xlane.xlu0 %695
    %697 = vadd.xlane.f32.xlu0 %v666
    %v698 = vpop.xlane.xlu0 %697
    %699 = vadd.xlane.f32.xlu0 %v668
    %v700 = vpop.xlane.xlu0 %699
    %701 = vadd.xlane.f32.xlu0 %v670
    %v702 = vpop.xlane.xlu0 %701
    %703 = vadd.xlane.f32.xlu0 %v672
    %v704 = vpop.xlane.xlu0 %703
    %705 = vadd.xlane.f32.xlu0 %v674
    %v706 = vpop.xlane.xlu0 %705
    %707 = vadd.xlane.f32.xlu0 %v676
    %v708 = vpop.xlane.xlu0 %707
    %709 = vadd.xlane.f32.xlu0 %v678
    %v710 = vpop.xlane.xlu0 %709
    %711 = vadd.xlane.f32.xlu0 %v680
    %v712 = vpop.xlane.xlu0 %711
    %713 = vadd.xlane.f32.xlu0 %v682
    %v714 = vpop.xlane.xlu0 %713
    %715 = vadd.xlane.f32.xlu0 %v684
    %v716 = vpop.xlane.xlu0 %715
    %717 = vadd.xlane.f32.xlu0 %v686
    %v718 = vpop.xlane.xlu0 %717
    %719 = vadd.xlane.f32.xlu0 %v688
    %v720 = vpop.xlane.xlu0 %719
    %721 = vadd.xlane.f32.xlu0 %v690
    %v722 = vpop.xlane.xlu0 %721
    %723 = vadd.xlane.f32.xlu0 %v692
    %v724 = vpop.xlane.xlu0 %723
    %v725 = vrcp.pop %v694
    %v726 = vmul.f32 %v694, %v725
    %v727 = vsub.f32 1.0, %v726
    %v728 = vmul.f32 %v725, %v727
    %v729 = vadd.f32 %v725, %v728
    %vm730 = vweird.f32 %v694
    %vm731 = vweird.f32 %v725
    %vm732 = vmor %vm730, %vm731
    %v733 = vsel %vm732, %v725, %v729
    %v734 = vand.u32 2147483647, %v694
    %vm735 = vcmp.eq.f32.partialorder %v734, 8.507059e+37
    %v736 = vand.u32 %v694, 2147483648
    %v737 = vor.u32 1.1754944e-38, %v736
    %v738 = vsel %vm735, %v737, %v733
    %v739 = vrcp.pop %v696
    %v740 = vmul.f32 %v696, %v739
    %v741 = vsub.f32 1.0, %v740
    %v742 = vmul.f32 %v739, %v741
    %v743 = vadd.f32 %v739, %v742
    %vm744 = vweird.f32 %v696
    %vm745 = vweird.f32 %v739
    %vm746 = vmor %vm744, %vm745
    %v747 = vsel %vm746, %v739, %v743
    %v748 = vand.u32 2147483647, %v696
    %vm749 = vcmp.eq.f32.partialorder %v748, 8.507059e+37
    %v750 = vand.u32 %v696, 2147483648
    %v751 = vor.u32 1.1754944e-38, %v750
    %v752 = vsel %vm749, %v751, %v747
    %v753 = vrcp.pop %v698
    %v754 = vmul.f32 %v698, %v753
    %v755 = vsub.f32 1.0, %v754
    %v756 = vmul.f32 %v753, %v755
    %v757 = vadd.f32 %v753, %v756
    %vm758 = vweird.f32 %v698
    %vm759 = vweird.f32 %v753
    %vm760 = vmor %vm758, %vm759
    %v761 = vsel %vm760, %v753, %v757
    %v762 = vand.u32 2147483647, %v698
    %vm763 = vcmp.eq.f32.partialorder %v762, 8.507059e+37
    %v764 = vand.u32 %v698, 2147483648
    %v765 = vor.u32 1.1754944e-38, %v764
    %v766 = vsel %vm763, %v765, %v761
    %v767 = vrcp.pop %v700
    %v768 = vmul.f32 %v700, %v767
    %v769 = vsub.f32 1.0, %v768
    %v770 = vmul.f32 %v767, %v769
    %v771 = vadd.f32 %v767, %v770
    %vm772 = vweird.f32 %v700
    %vm773 = vweird.f32 %v767
    %vm774 = vmor %vm772, %vm773
    %v775 = vsel %vm774, %v767, %v771
    %v776 = vand.u32 2147483647, %v700
    %vm777 = vcmp.eq.f32.partialorder %v776, 8.507059e+37
    %v778 = vand.u32 %v700, 2147483648
    %v779 = vor.u32 1.1754944e-38, %v778
    %v780 = vsel %vm777, %v779, %v775
    %v781 = vrcp.pop %v702
    %v782 = vmul.f32 %v702, %v781
    %v783 = vsub.f32 1.0, %v782
    %v784 = vmul.f32 %v781, %v783
    %v785 = vadd.f32 %v781, %v784
    %vm786 = vweird.f32 %v702
    %vm787 = vweird.f32 %v781
    %vm788 = vmor %vm786, %vm787
    %v789 = vsel %vm788, %v781, %v785
    %v790 = vand.u32 2147483647, %v702
    %vm791 = vcmp.eq.f32.partialorder %v790, 8.507059e+37
    %v792 = vand.u32 %v702, 2147483648
    %v793 = vor.u32 1.1754944e-38, %v792
    %v794 = vsel %vm791, %v793, %v789
    %v795 = vrcp.pop %v704
    %v796 = vmul.f32 %v704, %v795
    %v797 = vsub.f32 1.0, %v796
    %v798 = vmul.f32 %v795, %v797
    %v799 = vadd.f32 %v795, %v798
    %vm800 = vweird.f32 %v704
    %vm801 = vweird.f32 %v795
    %vm802 = vmor %vm800, %vm801
    %v803 = vsel %vm802, %v795, %v799
    %v804 = vand.u32 2147483647, %v704
    %vm805 = vcmp.eq.f32.partialorder %v804, 8.507059e+37
    %v806 = vand.u32 %v704, 2147483648
    %v807 = vor.u32 1.1754944e-38, %v806
    %v808 = vsel %vm805, %v807, %v803
    %v809 = vrcp.pop %v706
    %v810 = vmul.f32 %v706, %v809
    %v811 = vsub.f32 1.0, %v810
    %v812 = vmul.f32 %v809, %v811
    %v813 = vadd.f32 %v809, %v812
    %vm814 = vweird.f32 %v706
    %vm815 = vweird.f32 %v809
    %vm816 = vmor %vm814, %vm815
    %v817 = vsel %vm816, %v809, %v813
    %v818 = vand.u32 2147483647, %v706
    %vm819 = vcmp.eq.f32.partialorder %v818, 8.507059e+37
    %v820 = vand.u32 %v706, 2147483648
    %v821 = vor.u32 1.1754944e-38, %v820
    %v822 = vsel %vm819, %v821, %v817
    %v823 = vrcp.pop %v708
    %v824 = vmul.f32 %v708, %v823
    %v825 = vsub.f32 1.0, %v824
    %v826 = vmul.f32 %v823, %v825
    %v827 = vadd.f32 %v823, %v826
    %vm828 = vweird.f32 %v708
    %vm829 = vweird.f32 %v823
    %vm830 = vmor %vm828, %vm829
    %v831 = vsel %vm830, %v823, %v827
    %v832 = vand.u32 2147483647, %v708
    %vm833 = vcmp.eq.f32.partialorder %v832, 8.507059e+37
    %v834 = vand.u32 %v708, 2147483648
    %v835 = vor.u32 1.1754944e-38, %v834
    %v836 = vsel %vm833, %v835, %v831
    %v837 = vrcp.pop %v710
    %v838 = vmul.f32 %v710, %v837
    %v839 = vsub.f32 1.0, %v838
    %v840 = vmul.f32 %v837, %v839
    %v841 = vadd.f32 %v837, %v840
    %vm842 = vweird.f32 %v710
    %vm843 = vweird.f32 %v837
    %vm844 = vmor %vm842, %vm843
    %v845 = vsel %vm844, %v837, %v841
    %v846 = vand.u32 2147483647, %v710
    %vm847 = vcmp.eq.f32.partialorder %v846, 8.507059e+37
    %v848 = vand.u32 %v710, 2147483648
    %v849 = vor.u32 1.1754944e-38, %v848
    %v850 = vsel %vm847, %v849, %v845
    %v851 = vrcp.pop %v712
    %v852 = vmul.f32 %v712, %v851
    %v853 = vsub.f32 1.0, %v852
    %v854 = vmul.f32 %v851, %v853
    %v855 = vadd.f32 %v851, %v854
    %vm856 = vweird.f32 %v712
    %vm857 = vweird.f32 %v851
    %vm858 = vmor %vm856, %vm857
    %v859 = vsel %vm858, %v851, %v855
    %v860 = vand.u32 2147483647, %v712
    %vm861 = vcmp.eq.f32.partialorder %v860, 8.507059e+37
    %v862 = vand.u32 %v712, 2147483648
    %v863 = vor.u32 1.1754944e-38, %v862
    %v864 = vsel %vm861, %v863, %v859
    %v865 = vrcp.pop %v714
    %v866 = vmul.f32 %v714, %v865
    %v867 = vsub.f32 1.0, %v866
    %v868 = vmul.f32 %v865, %v867
    %v869 = vadd.f32 %v865, %v868
    %vm870 = vweird.f32 %v714
    %vm871 = vweird.f32 %v865
    %vm872 = vmor %vm870, %vm871
    %v873 = vsel %vm872, %v865, %v869
    %v874 = vand.u32 2147483647, %v714
    %vm875 = vcmp.eq.f32.partialorder %v874, 8.507059e+37
    %v876 = vand.u32 %v714, 2147483648
    %v877 = vor.u32 1.1754944e-38, %v876
    %v878 = vsel %vm875, %v877, %v873
    %v879 = vrcp.pop %v716
    %v880 = vmul.f32 %v716, %v879
    %v881 = vsub.f32 1.0, %v880
    %v882 = vmul.f32 %v879, %v881
    %v883 = vadd.f32 %v879, %v882
    %vm884 = vweird.f32 %v716
    %vm885 = vweird.f32 %v879
    %vm886 = vmor %vm884, %vm885
    %v887 = vsel %vm886, %v879, %v883
    %v888 = vand.u32 2147483647, %v716
    %vm889 = vcmp.eq.f32.partialorder %v888, 8.507059e+37
    %v890 = vand.u32 %v716, 2147483648
    %v891 = vor.u32 1.1754944e-38, %v890
    %v892 = vsel %vm889, %v891, %v887
    %v893 = vrcp.pop %v718
    %v894 = vmul.f32 %v718, %v893
    %v895 = vsub.f32 1.0, %v894
    %v896 = vmul.f32 %v893, %v895
    %v897 = vadd.f32 %v893, %v896
    %vm898 = vweird.f32 %v718
    %vm899 = vweird.f32 %v893
    %vm900 = vmor %vm898, %vm899
    %v901 = vsel %vm900, %v893, %v897
    %v902 = vand.u32 2147483647, %v718
    %vm903 = vcmp.eq.f32.partialorder %v902, 8.507059e+37
    %v904 = vand.u32 %v718, 2147483648
    %v905 = vor.u32 1.1754944e-38, %v904
    %v906 = vsel %vm903, %v905, %v901
    %v907 = vrcp.pop %v720
    %v908 = vmul.f32 %v720, %v907
    %v909 = vsub.f32 1.0, %v908
    %v910 = vmul.f32 %v907, %v909
    %v911 = vadd.f32 %v907, %v910
    %vm912 = vweird.f32 %v720
    %vm913 = vweird.f32 %v907
    %vm914 = vmor %vm912, %vm913
    %v915 = vsel %vm914, %v907, %v911
    %v916 = vand.u32 2147483647, %v720
    %vm917 = vcmp.eq.f32.partialorder %v916, 8.507059e+37
    %v918 = vand.u32 %v720, 2147483648
    %v919 = vor.u32 1.1754944e-38, %v918
    %v920 = vsel %vm917, %v919, %v915
    %v921 = vrcp.pop %v722
    %v922 = vmul.f32 %v722, %v921
    %v923 = vsub.f32 1.0, %v922
    %v924 = vmul.f32 %v921, %v923
    %v925 = vadd.f32 %v921, %v924
    %vm926 = vweird.f32 %v722
    %vm927 = vweird.f32 %v921
    %vm928 = vmor %vm926, %vm927
    %v929 = vsel %vm928, %v921, %v925
    %v930 = vand.u32 2147483647, %v722
    %vm931 = vcmp.eq.f32.partialorder %v930, 8.507059e+37
    %v932 = vand.u32 %v722, 2147483648
    %v933 = vor.u32 1.1754944e-38, %v932
    %v934 = vsel %vm931, %v933, %v929
    %v935 = vrcp.pop %v724
    %v936 = vmul.f32 %v724, %v935
    %v937 = vsub.f32 1.0, %v936
    %v938 = vmul.f32 %v935, %v937
    %v939 = vadd.f32 %v935, %v938
    %vm940 = vweird.f32 %v724
    %vm941 = vweird.f32 %v935
    %vm942 = vmor %vm940, %vm941
    %v943 = vsel %vm942, %v935, %v939
    %v944 = vand.u32 2147483647, %v724
    %vm945 = vcmp.eq.f32.partialorder %v944, 8.507059e+37
    %v946 = vand.u32 %v724, 2147483648
    %v947 = vor.u32 1.1754944e-38, %v946
    %v948 = vsel %vm945, %v947, %v943
    %v949 = vmul.f32 %v662, %v738
    %v950 = vmul.f32 %v664, %v752
    %v951 = vmul.f32 %v666, %v766
    %v952 = vmul.f32 %v668, %v780
    %v953 = vmul.f32 %v670, %v794
    %v954 = vmul.f32 %v672, %v808
    %v955 = vmul.f32 %v674, %v822
    %v956 = vmul.f32 %v676, %v836
    %v957 = vmul.f32 %v678, %v850
    %v958 = vmul.f32 %v680, %v864
    %v959 = vmul.f32 %v682, %v878
    %v960 = vmul.f32 %v684, %v892
    %v961 = vmul.f32 %v686, %v906
    %v962 = vmul.f32 %v688, %v920
    %v963 = vmul.f32 %v690, %v934
    %v964 = vmul.f32 %v692, %v948
    %965 = vrot.lane.b32.xlu0 %v323, 120
    %v966 = vpop.permute.xlu0 %965
    %967 = vrot.lane.b32.xlu0 %v326, 120
    %v968 = vpop.permute.xlu0 %967
    %969 = vrot.lane.b32.xlu0 %v329, 120
    %v970 = vpop.permute.xlu0 %969
    %971 = vrot.lane.b32.xlu0 %v332, 120
    %v972 = vpop.permute.xlu0 %971
    %973 = vrot.lane.b32.xlu0 %v335, 120
    %v974 = vpop.permute.xlu0 %973
    %975 = vrot.lane.b32.xlu0 %v338, 120
    %v976 = vpop.permute.xlu0 %975
    %977 = vrot.lane.b32.xlu0 %v341, 120
    %v978 = vpop.permute.xlu0 %977
    %979 = vrot.lane.b32.xlu0 %v344, 120
    %v980 = vpop.permute.xlu0 %979
    %981 = vrot.lane.b32.xlu0 %v347, 120
    %v982 = vpop.permute.xlu0 %981
    %983 = vrot.lane.b32.xlu0 %v350, 120
    %v984 = vpop.permute.xlu0 %983
    %985 = vrot.lane.b32.xlu0 %v353, 120
    %v986 = vpop.permute.xlu0 %985
    %987 = vrot.lane.b32.xlu0 %v356, 120
    %v988 = vpop.permute.xlu0 %987
    %989 = vrot.lane.b32.xlu0 %v359, 120
    %v990 = vpop.permute.xlu0 %989
    %991 = vrot.lane.b32.xlu0 %v362, 120
    %v992 = vpop.permute.xlu0 %991
    %993 = vrot.lane.b32.xlu0 %v365, 120
    %v994 = vpop.permute.xlu0 %993
    %995 = vrot.lane.b32.xlu0 %v368, 120
    %v996 = vpop.permute.xlu0 %995
    %997 = vrot.lane.b32.xlu0 %v323, 88
    %v998 = vpop.permute.xlu0 %997
    %999 = vrot.lane.b32.xlu0 %v326, 88
    %v1000 = vpop.permute.xlu0 %999
    %1001 = vrot.lane.b32.xlu0 %v329, 88
    %v1002 = vpop.permute.xlu0 %1001
    %1003 = vrot.lane.b32.xlu0 %v332, 88
    %v1004 = vpop.permute.xlu0 %1003
    %1005 = vrot.lane.b32.xlu0 %v335, 88
    %v1006 = vpop.permute.xlu0 %1005
    %1007 = vrot.lane.b32.xlu0 %v338, 88
    %v1008 = vpop.permute.xlu0 %1007
    %1009 = vrot.lane.b32.xlu0 %v341, 88
    %v1010 = vpop.permute.xlu0 %1009
    %1011 = vrot.lane.b32.xlu0 %v344, 88
    %v1012 = vpop.permute.xlu0 %1011
    %1013 = vrot.lane.b32.xlu0 %v347, 88
    %v1014 = vpop.permute.xlu0 %1013
    %1015 = vrot.lane.b32.xlu0 %v350, 88
    %v1016 = vpop.permute.xlu0 %1015
    %1017 = vrot.lane.b32.xlu0 %v353, 88
    %v1018 = vpop.permute.xlu0 %1017
    %1019 = vrot.lane.b32.xlu0 %v356, 88
    %v1020 = vpop.permute.xlu0 %1019
    %1021 = vrot.lane.b32.xlu0 %v359, 88
    %v1022 = vpop.permute.xlu0 %1021
    %1023 = vrot.lane.b32.xlu0 %v362, 88
    %v1024 = vpop.permute.xlu0 %1023
    %1025 = vrot.lane.b32.xlu0 %v365, 88
    %v1026 = vpop.permute.xlu0 %1025
    %1027 = vrot.lane.b32.xlu0 %v368, 88
    %v1028 = vpop.permute.xlu0 %1027
    %v1029 = vsel %vm483, %v966, 0
    %v1031 = vsel %vm483, %v968, 0
    %v1033 = vsel %vm483, %v970, 0
    %v1035 = vsel %vm483, %v972, 0
    %v1037 = vsel %vm483, %v974, 0
    %v1039 = vsel %vm483, %v976, 0
    %v1041 = vsel %vm483, %v978, 0
    %v1043 = vsel %vm483, %v980, 0
    %v1045 = vsel %vm483, %v982, 0
    %v1047 = vsel %vm483, %v984, 0
    %v1049 = vsel %vm483, %v986, 0
    %v1051 = vsel %vm483, %v988, 0
    %v1053 = vsel %vm483, %v990, 0
    %v1055 = vsel %vm483, %v992, 0
    %v1057 = vsel %vm483, %v994, 0
    %v1059 = vsel %vm483, %v996, 0
    %v1061 = vsel %vm483, %v998, 0
    %v1063 = vsel %vm483, %v1000, 0
    %v1065 = vsel %vm483, %v1002, 0
    %v1067 = vsel %vm483, %v1004, 0
    %v1069 = vsel %vm483, %v1006, 0
    %v1071 = vsel %vm483, %v1008, 0
    %v1073 = vsel %vm483, %v1010, 0
    %v1075 = vsel %vm483, %v1012, 0
    %v1077 = vsel %vm483, %v1014, 0
    %v1079 = vsel %vm483, %v1016, 0
    %v1081 = vsel %vm483, %v1018, 0
    %v1083 = vsel %vm483, %v1020, 0
    %v1085 = vsel %vm483, %v1022, 0
    %v1087 = vsel %vm483, %v1024, 0
    %v1089 = vsel %vm483, %v1026, 0
    %v1091 = vsel %vm483, %v1028, 0
    %1093 = vmatpush.xpose.msra.mxu0 %v1091
    %1094 = vmatpush.xpose.msra.mxu0 %v1089
    %1095 = vmatpush.xpose.msra.mxu0 %v1087
    %1096 = vmatpush.xpose.msra.mxu0 %v1085
    %1097 = vmatpush.xpose.msra.mxu0 %v1083
    %1098 = vmatpush.xpose.msra.mxu0 %v1081
    %1099 = vmatpush.xpose.msra.mxu0 %v1079
    %1100 = vmatpush.xpose.msra.mxu0 %v1077
    %1101 = vmatpush.xpose.msra.mxu0 %v1075
    %1102 = vmatpush.xpose.msra.mxu0 %v1073
    %1103 = vmatpush.xpose.msra.mxu0 %v1071
    %1104 = vmatpush.xpose.msra.mxu0 %v1069
    %1105 = vmatpush.xpose.msra.mxu0 %v1067
    %1106 = vmatpush.xpose.msra.mxu0 %v1065
    %1107 = vmatpush.xpose.msra.mxu0 %v1063
    %1108 = vmatpush.xpose.msra.mxu0 %v1061
    %1109 = vmatmul.f32.gmra.mxu0 %v1029
    %v1110 = vpop.f32.mrf.mxu0
    %v1111 = vadd.f32 %v151, %v1110
    %1112 = vmatmul.f32.gmra.mxu0 %v1031
    %v1113 = vpop.f32.mrf.mxu0
    %v1114 = vadd.f32 %v152, %v1113
    %1115 = vmatmul.f32.gmra.mxu0 %v1033
    %v1116 = vpop.f32.mrf.mxu0
    %v1117 = vadd.f32 %v153, %v1116
    %1118 = vmatmul.f32.gmra.mxu0 %v1035
    %v1119 = vpop.f32.mrf.mxu0
    %v1120 = vadd.f32 %v154, %v1119
    %1121 = vmatmul.f32.gmra.mxu0 %v1037
    %v1122 = vpop.f32.mrf.mxu0
    %v1123 = vadd.f32 %v155, %v1122
    %1124 = vmatmul.f32.gmra.mxu0 %v1039
    %v1125 = vpop.f32.mrf.mxu0
    %v1126 = vadd.f32 %v156, %v1125
    %1127 = vmatmul.f32.gmra.mxu0 %v1041
    %v1128 = vpop.f32.mrf.mxu0
    %v1129 = vadd.f32 %v157, %v1128
    %1130 = vmatmul.f32.gmra.mxu0 %v1043
    %v1131 = vpop.f32.mrf.mxu0
    %v1132 = vadd.f32 %v158, %v1131
    %1133 = vmatmul.f32.gmra.mxu0 %v1045
    %v1134 = vpop.f32.mrf.mxu0
    %v1135 = vadd.f32 %v159, %v1134
    %1136 = vmatmul.f32.gmra.mxu0 %v1047
    %v1137 = vpop.f32.mrf.mxu0
    %v1138 = vadd.f32 %v160, %v1137
    %1139 = vmatmul.f32.gmra.mxu0 %v1049
    %v1140 = vpop.f32.mrf.mxu0
    %v1141 = vadd.f32 %v161, %v1140
    %1142 = vmatmul.f32.gmra.mxu0 %v1051
    %v1143 = vpop.f32.mrf.mxu0
    %v1144 = vadd.f32 %v162, %v1143
    %1145 = vmatmul.f32.gmra.mxu0 %v1053
    %v1146 = vpop.f32.mrf.mxu0
    %v1147 = vadd.f32 %v163, %v1146
    %1148 = vmatmul.f32.gmra.mxu0 %v1055
    %v1149 = vpop.f32.mrf.mxu0
    %v1150 = vadd.f32 %v164, %v1149
    %1151 = vmatmul.f32.gmra.mxu0 %v1057
    %v1152 = vpop.f32.mrf.mxu0
    %v1153 = vadd.f32 %v165, %v1152
    %1154 = vmatmul.f32.gmra.mxu0 %v1059
    %v1155 = vpop.f32.mrf.mxu0
    %v1156 = vadd.f32 %v166, %v1155
    %1157 = vdwg.mxu0
    %1158 = vmax.xlane.f32.xlu0 %v1111
    %v1159 = vpop.xlane.xlu0 %1158
    %1160 = vmax.xlane.f32.xlu0 %v1114
    %v1161 = vpop.xlane.xlu0 %1160
    %1162 = vmax.xlane.f32.xlu0 %v1117
    %v1163 = vpop.xlane.xlu0 %1162
    %1164 = vmax.xlane.f32.xlu0 %v1120
    %v1165 = vpop.xlane.xlu0 %1164
    %1166 = vmax.xlane.f32.xlu0 %v1123
    %v1167 = vpop.xlane.xlu0 %1166
    %1168 = vmax.xlane.f32.xlu0 %v1126
    %v1169 = vpop.xlane.xlu0 %1168
    %1170 = vmax.xlane.f32.xlu0 %v1129
    %v1171 = vpop.xlane.xlu0 %1170
    %1172 = vmax.xlane.f32.xlu0 %v1132
    %v1173 = vpop.xlane.xlu0 %1172
    %1174 = vmax.xlane.f32.xlu0 %v1135
    %v1175 = vpop.xlane.xlu0 %1174
    %1176 = vmax.xlane.f32.xlu0 %v1138
    %v1177 = vpop.xlane.xlu0 %1176
    %1178 = vmax.xlane.f32.xlu0 %v1141
    %v1179 = vpop.xlane.xlu0 %1178
    %1180 = vmax.xlane.f32.xlu0 %v1144
    %v1181 = vpop.xlane.xlu0 %1180
    %1182 = vmax.xlane.f32.xlu0 %v1147
    %v1183 = vpop.xlane.xlu0 %1182
    %1184 = vmax.xlane.f32.xlu0 %v1150
    %v1185 = vpop.xlane.xlu0 %1184
    %1186 = vmax.xlane.f32.xlu0 %v1153
    %v1187 = vpop.xlane.xlu0 %1186
    %1188 = vmax.xlane.f32.xlu0 %v1156
    %v1189 = vpop.xlane.xlu0 %1188
    %v1190 = vsub.f32 %v1111, %v1159
    %v1191 = vsub.f32 %v1114, %v1161
    %v1192 = vsub.f32 %v1117, %v1163
    %v1193 = vsub.f32 %v1120, %v1165
    %v1194 = vsub.f32 %v1123, %v1167
    %v1195 = vsub.f32 %v1126, %v1169
    %v1196 = vsub.f32 %v1129, %v1171
    %v1197 = vsub.f32 %v1132, %v1173
    %v1198 = vsub.f32 %v1135, %v1175
    %v1199 = vsub.f32 %v1138, %v1177
    %v1200 = vsub.f32 %v1141, %v1179
    %v1201 = vsub.f32 %v1144, %v1181
    %v1202 = vsub.f32 %v1147, %v1183
    %v1203 = vsub.f32 %v1150, %v1185
    %v1204 = vsub.f32 %v1153, %v1187
    %v1205 = vsub.f32 %v1156, %v1189
    %v1206 = vmul.f32 %v1190, 1.442695
    %v1207 = vpow.pop %v1206
    %v1208 = vmul.f32 %v1191, 1.442695
    %v1209 = vpow.pop %v1208
    %v1210 = vmul.f32 %v1192, 1.442695
    %v1211 = vpow.pop %v1210
    %v1212 = vmul.f32 %v1193, 1.442695
    %v1213 = vpow.pop %v1212
    %v1214 = vmul.f32 %v1194, 1.442695
    %v1215 = vpow.pop %v1214
    %v1216 = vmul.f32 %v1195, 1.442695
    %v1217 = vpow.pop %v1216
    %v1218 = vmul.f32 %v1196, 1.442695
    %v1219 = vpow.pop %v1218
    %v1220 = vmul.f32 %v1197, 1.442695
    %v1221 = vpow.pop %v1220
    %v1222 = vmul.f32 %v1198, 1.442695
    %v1223 = vpow.pop %v1222
    %v1224 = vmul.f32 %v1199, 1.442695
    %v1225 = vpow.pop %v1224
    %v1226 = vmul.f32 %v1200, 1.442695
    %v1227 = vpow.pop %v1226
    %v1228 = vmul.f32 %v1201, 1.442695
    %v1229 = vpow.pop %v1228
    %v1230 = vmul.f32 %v1202, 1.442695
    %v1231 = vpow.pop %v1230
    %v1232 = vmul.f32 %v1203, 1.442695
    %v1233 = vpow.pop %v1232
    %v1234 = vmul.f32 %v1204, 1.442695
    %v1235 = vpow.pop %v1234
    %v1236 = vmul.f32 %v1205, 1.442695
    %v1237 = vpow.pop %v1236
    %1238 = vadd.xlane.f32.xlu0 %v1207
    %v1239 = vpop.xlane.xlu0 %1238
    %1240 = vadd.xlane.f32.xlu0 %v1209
    %v1241 = vpop.xlane.xlu0 %1240
    %1242 = vadd.xlane.f32.xlu0 %v1211
    %v1243 = vpop.xlane.xlu0 %1242
    %1244 = vadd.xlane.f32.xlu0 %v1213
    %v1245 = vpop.xlane.xlu0 %1244
    %1246 = vadd.xlane.f32.xlu0 %v1215
    %v1247 = vpop.xlane.xlu0 %1246
    %1248 = vadd.xlane.f32.xlu0 %v1217
    %v1249 = vpop.xlane.xlu0 %1248
    %1250 = vadd.xlane.f32.xlu0 %v1219
    %v1251 = vpop.xlane.xlu0 %1250
    %1252 = vadd.xlane.f32.xlu0 %v1221
    %v1253 = vpop.xlane.xlu0 %1252
    %1254 = vadd.xlane.f32.xlu0 %v1223
    %v1255 = vpop.xlane.xlu0 %1254
    %1256 = vadd.xlane.f32.xlu0 %v1225
    %v1257 = vpop.xlane.xlu0 %1256
    %1258 = vadd.xlane.f32.xlu0 %v1227
    %v1259 = vpop.xlane.xlu0 %1258
    %1260 = vadd.xlane.f32.xlu0 %v1229
    %v1261 = vpop.xlane.xlu0 %1260
    %1262 = vadd.xlane.f32.xlu0 %v1231
    %v1263 = vpop.xlane.xlu0 %1262
    %1264 = vadd.xlane.f32.xlu0 %v1233
    %v1265 = vpop.xlane.xlu0 %1264
    %1266 = vadd.xlane.f32.xlu0 %v1235
    %v1267 = vpop.xlane.xlu0 %1266
    %1268 = vadd.xlane.f32.xlu0 %v1237
    %v1269 = vpop.xlane.xlu0 %1268
    %v1270 = vrcp.pop %v1239
    %v1271 = vmul.f32 %v1239, %v1270
    %v1272 = vsub.f32 1.0, %v1271
    %v1273 = vmul.f32 %v1270, %v1272
    %v1274 = vadd.f32 %v1270, %v1273
    %vm1275 = vweird.f32 %v1239
    %vm1276 = vweird.f32 %v1270
    %vm1277 = vmor %vm1275, %vm1276
    %v1278 = vsel %vm1277, %v1270, %v1274
    %v1279 = vand.u32 2147483647, %v1239
    %vm1280 = vcmp.eq.f32.partialorder %v1279, 8.507059e+37
    %v1281 = vand.u32 %v1239, 2147483648
    %v1282 = vor.u32 1.1754944e-38, %v1281
    %v1283 = vsel %vm1280, %v1282, %v1278
    %v1284 = vrcp.pop %v1241
    %v1285 = vmul.f32 %v1241, %v1284
    %v1286 = vsub.f32 1.0, %v1285
    %v1287 = vmul.f32 %v1284, %v1286
    %v1288 = vadd.f32 %v1284, %v1287
    %vm1289 = vweird.f32 %v1241
    %vm1290 = vweird.f32 %v1284
    %vm1291 = vmor %vm1289, %vm1290
    %v1292 = vsel %vm1291, %v1284, %v1288
    %v1293 = vand.u32 2147483647, %v1241
    %vm1294 = vcmp.eq.f32.partialorder %v1293, 8.507059e+37
    %v1295 = vand.u32 %v1241, 2147483648
    %v1296 = vor.u32 1.1754944e-38, %v1295
    %v1297 = vsel %vm1294, %v1296, %v1292
    %v1298 = vrcp.pop %v1243
    %v1299 = vmul.f32 %v1243, %v1298
    %v1300 = vsub.f32 1.0, %v1299
    %v1301 = vmul.f32 %v1298, %v1300
    %v1302 = vadd.f32 %v1298, %v1301
    %vm1303 = vweird.f32 %v1243
    %vm1304 = vweird.f32 %v1298
    %vm1305 = vmor %vm1303, %vm1304
    %v1306 = vsel %vm1305, %v1298, %v1302
    %v1307 = vand.u32 2147483647, %v1243
    %vm1308 = vcmp.eq.f32.partialorder %v1307, 8.507059e+37
    %v1309 = vand.u32 %v1243, 2147483648
    %v1310 = vor.u32 1.1754944e-38, %v1309
    %v1311 = vsel %vm1308, %v1310, %v1306
    %v1312 = vrcp.pop %v1245
    %v1313 = vmul.f32 %v1245, %v1312
    %v1314 = vsub.f32 1.0, %v1313
    %v1315 = vmul.f32 %v1312, %v1314
    %v1316 = vadd.f32 %v1312, %v1315
    %vm1317 = vweird.f32 %v1245
    %vm1318 = vweird.f32 %v1312
    %vm1319 = vmor %vm1317, %vm1318
    %v1320 = vsel %vm1319, %v1312, %v1316
    %v1321 = vand.u32 2147483647, %v1245
    %vm1322 = vcmp.eq.f32.partialorder %v1321, 8.507059e+37
    %v1323 = vand.u32 %v1245, 2147483648
    %v1324 = vor.u32 1.1754944e-38, %v1323
    %v1325 = vsel %vm1322, %v1324, %v1320
    %v1326 = vrcp.pop %v1247
    %v1327 = vmul.f32 %v1247, %v1326
    %v1328 = vsub.f32 1.0, %v1327
    %v1329 = vmul.f32 %v1326, %v1328
    %v1330 = vadd.f32 %v1326, %v1329
    %vm1331 = vweird.f32 %v1247
    %vm1332 = vweird.f32 %v1326
    %vm1333 = vmor %vm1331, %vm1332
    %v1334 = vsel %vm1333, %v1326, %v1330
    %v1335 = vand.u32 2147483647, %v1247
    %vm1336 = vcmp.eq.f32.partialorder %v1335, 8.507059e+37
    %v1337 = vand.u32 %v1247, 2147483648
    %v1338 = vor.u32 1.1754944e-38, %v1337
    %v1339 = vsel %vm1336, %v1338, %v1334
    %v1340 = vrcp.pop %v1249
    %v1341 = vmul.f32 %v1249, %v1340
    %v1342 = vsub.f32 1.0, %v1341
    %v1343 = vmul.f32 %v1340, %v1342
    %v1344 = vadd.f32 %v1340, %v1343
    %vm1345 = vweird.f32 %v1249
    %vm1346 = vweird.f32 %v1340
    %vm1347 = vmor %vm1345, %vm1346
    %v1348 = vsel %vm1347, %v1340, %v1344
    %v1349 = vand.u32 2147483647, %v1249
    %vm1350 = vcmp.eq.f32.partialorder %v1349, 8.507059e+37
    %v1351 = vand.u32 %v1249, 2147483648
    %v1352 = vor.u32 1.1754944e-38, %v1351
    %v1353 = vsel %vm1350, %v1352, %v1348
    %v1354 = vrcp.pop %v1251
    %v1355 = vmul.f32 %v1251, %v1354
    %v1356 = vsub.f32 1.0, %v1355
    %v1357 = vmul.f32 %v1354, %v1356
    %v1358 = vadd.f32 %v1354, %v1357
    %vm1359 = vweird.f32 %v1251
    %vm1360 = vweird.f32 %v1354
    %vm1361 = vmor %vm1359, %vm1360
    %v1362 = vsel %vm1361, %v1354, %v1358
    %v1363 = vand.u32 2147483647, %v1251
    %vm1364 = vcmp.eq.f32.partialorder %v1363, 8.507059e+37
    %v1365 = vand.u32 %v1251, 2147483648
    %v1366 = vor.u32 1.1754944e-38, %v1365
    %v1367 = vsel %vm1364, %v1366, %v1362
    %v1368 = vrcp.pop %v1253
    %v1369 = vmul.f32 %v1253, %v1368
    %v1370 = vsub.f32 1.0, %v1369
    %v1371 = vmul.f32 %v1368, %v1370
    %v1372 = vadd.f32 %v1368, %v1371
    %vm1373 = vweird.f32 %v1253
    %vm1374 = vweird.f32 %v1368
    %vm1375 = vmor %vm1373, %vm1374
    %v1376 = vsel %vm1375, %v1368, %v1372
    %v1377 = vand.u32 2147483647, %v1253
    %vm1378 = vcmp.eq.f32.partialorder %v1377, 8.507059e+37
    %v1379 = vand.u32 %v1253, 2147483648
    %v1380 = vor.u32 1.1754944e-38, %v1379
    %v1381 = vsel %vm1378, %v1380, %v1376
    %v1382 = vrcp.pop %v1255
    %v1383 = vmul.f32 %v1255, %v1382
    %v1384 = vsub.f32 1.0, %v1383
    %v1385 = vmul.f32 %v1382, %v1384
    %v1386 = vadd.f32 %v1382, %v1385
    %vm1387 = vweird.f32 %v1255
    %vm1388 = vweird.f32 %v1382
    %vm1389 = vmor %vm1387, %vm1388
    %v1390 = vsel %vm1389, %v1382, %v1386
    %v1391 = vand.u32 2147483647, %v1255
    %vm1392 = vcmp.eq.f32.partialorder %v1391, 8.507059e+37
    %v1393 = vand.u32 %v1255, 2147483648
    %v1394 = vor.u32 1.1754944e-38, %v1393
    %v1395 = vsel %vm1392, %v1394, %v1390
    %v1396 = vrcp.pop %v1257
    %v1397 = vmul.f32 %v1257, %v1396
    %v1398 = vsub.f32 1.0, %v1397
    %v1399 = vmul.f32 %v1396, %v1398
    %v1400 = vadd.f32 %v1396, %v1399
    %vm1401 = vweird.f32 %v1257
    %vm1402 = vweird.f32 %v1396
    %vm1403 = vmor %vm1401, %vm1402
    %v1404 = vsel %vm1403, %v1396, %v1400
    %v1405 = vand.u32 2147483647, %v1257
    %vm1406 = vcmp.eq.f32.partialorder %v1405, 8.507059e+37
    %v1407 = vand.u32 %v1257, 2147483648
    %v1408 = vor.u32 1.1754944e-38, %v1407
    %v1409 = vsel %vm1406, %v1408, %v1404
    %v1410 = vrcp.pop %v1259
    %v1411 = vmul.f32 %v1259, %v1410
    %v1412 = vsub.f32 1.0, %v1411
    %v1413 = vmul.f32 %v1410, %v1412
    %v1414 = vadd.f32 %v1410, %v1413
    %vm1415 = vweird.f32 %v1259
    %vm1416 = vweird.f32 %v1410
    %vm1417 = vmor %vm1415, %vm1416
    %v1418 = vsel %vm1417, %v1410, %v1414
    %v1419 = vand.u32 2147483647, %v1259
    %vm1420 = vcmp.eq.f32.partialorder %v1419, 8.507059e+37
    %v1421 = vand.u32 %v1259, 2147483648
    %v1422 = vor.u32 1.1754944e-38, %v1421
    %v1423 = vsel %vm1420, %v1422, %v1418
    %v1424 = vrcp.pop %v1261
    %v1425 = vmul.f32 %v1261, %v1424
    %v1426 = vsub.f32 1.0, %v1425
    %v1427 = vmul.f32 %v1424, %v1426
    %v1428 = vadd.f32 %v1424, %v1427
    %vm1429 = vweird.f32 %v1261
    %vm1430 = vweird.f32 %v1424
    %vm1431 = vmor %vm1429, %vm1430
    %v1432 = vsel %vm1431, %v1424, %v1428
    %v1433 = vand.u32 2147483647, %v1261
    %vm1434 = vcmp.eq.f32.partialorder %v1433, 8.507059e+37
    %v1435 = vand.u32 %v1261, 2147483648
    %v1436 = vor.u32 1.1754944e-38, %v1435
    %v1437 = vsel %vm1434, %v1436, %v1432
    %v1438 = vrcp.pop %v1263
    %v1439 = vmul.f32 %v1263, %v1438
    %v1440 = vsub.f32 1.0, %v1439
    %v1441 = vmul.f32 %v1438, %v1440
    %v1442 = vadd.f32 %v1438, %v1441
    %vm1443 = vweird.f32 %v1263
    %vm1444 = vweird.f32 %v1438
    %vm1445 = vmor %vm1443, %vm1444
    %v1446 = vsel %vm1445, %v1438, %v1442
    %v1447 = vand.u32 2147483647, %v1263
    %vm1448 = vcmp.eq.f32.partialorder %v1447, 8.507059e+37
    %v1449 = vand.u32 %v1263, 2147483648
    %v1450 = vor.u32 1.1754944e-38, %v1449
    %v1451 = vsel %vm1448, %v1450, %v1446
    %v1452 = vrcp.pop %v1265
    %v1453 = vmul.f32 %v1265, %v1452
    %v1454 = vsub.f32 1.0, %v1453
    %v1455 = vmul.f32 %v1452, %v1454
    %v1456 = vadd.f32 %v1452, %v1455
    %vm1457 = vweird.f32 %v1265
    %vm1458 = vweird.f32 %v1452
    %vm1459 = vmor %vm1457, %vm1458
    %v1460 = vsel %vm1459, %v1452, %v1456
    %v1461 = vand.u32 2147483647, %v1265
    %vm1462 = vcmp.eq.f32.partialorder %v1461, 8.507059e+37
    %v1463 = vand.u32 %v1265, 2147483648
    %v1464 = vor.u32 1.1754944e-38, %v1463
    %v1465 = vsel %vm1462, %v1464, %v1460
    %v1466 = vrcp.pop %v1267
    %v1467 = vmul.f32 %v1267, %v1466
    %v1468 = vsub.f32 1.0, %v1467
    %v1469 = vmul.f32 %v1466, %v1468
    %v1470 = vadd.f32 %v1466, %v1469
    %vm1471 = vweird.f32 %v1267
    %vm1472 = vweird.f32 %v1466
    %vm1473 = vmor %vm1471, %vm1472
    %v1474 = vsel %vm1473, %v1466, %v1470
    %v1475 = vand.u32 2147483647, %v1267
    %vm1476 = vcmp.eq.f32.partialorder %v1475, 8.507059e+37
    %v1477 = vand.u32 %v1267, 2147483648
    %v1478 = vor.u32 1.1754944e-38, %v1477
    %v1479 = vsel %vm1476, %v1478, %v1474
    %v1480 = vrcp.pop %v1269
    %v1481 = vmul.f32 %v1269, %v1480
    %v1482 = vsub.f32 1.0, %v1481
    %v1483 = vmul.f32 %v1480, %v1482
    %v1484 = vadd.f32 %v1480, %v1483
    %vm1485 = vweird.f32 %v1269
    %vm1486 = vweird.f32 %v1480
    %vm1487 = vmor %vm1485, %vm1486
    %v1488 = vsel %vm1487, %v1480, %v1484
    %v1489 = vand.u32 2147483647, %v1269
    %vm1490 = vcmp.eq.f32.partialorder %v1489, 8.507059e+37
    %v1491 = vand.u32 %v1269, 2147483648
    %v1492 = vor.u32 1.1754944e-38, %v1491
    %v1493 = vsel %vm1490, %v1492, %v1488
    %v1494 = vmul.f32 %v1207, %v1283
    %v1495 = vmul.f32 %v1209, %v1297
    %v1496 = vmul.f32 %v1211, %v1311
    %v1497 = vmul.f32 %v1213, %v1325
    %v1498 = vmul.f32 %v1215, %v1339
    %v1499 = vmul.f32 %v1217, %v1353
    %v1500 = vmul.f32 %v1219, %v1367
    %v1501 = vmul.f32 %v1221, %v1381
    %v1502 = vmul.f32 %v1223, %v1395
    %v1503 = vmul.f32 %v1225, %v1409
    %v1504 = vmul.f32 %v1227, %v1423
    %v1505 = vmul.f32 %v1229, %v1437
    %v1506 = vmul.f32 %v1231, %v1451
    %v1507 = vmul.f32 %v1233, %v1465
    %v1508 = vmul.f32 %v1235, %v1479
    %v1509 = vmul.f32 %v1237, %v1493
    %1510 = vrot.lane.b32.xlu0 %v323, 32
    %v1511 = vpop.permute.xlu0 %1510
    %1512 = vrot.lane.b32.xlu0 %v326, 32
    %v1513 = vpop.permute.xlu0 %1512
    %1514 = vrot.lane.b32.xlu0 %v329, 32
    %v1515 = vpop.permute.xlu0 %1514
    %1516 = vrot.lane.b32.xlu0 %v332, 32
    %v1517 = vpop.permute.xlu0 %1516
    %1518 = vrot.lane.b32.xlu0 %v335, 32
    %v1519 = vpop.permute.xlu0 %1518
    %1520 = vrot.lane.b32.xlu0 %v338, 32
    %v1521 = vpop.permute.xlu0 %1520
    %1522 = vrot.lane.b32.xlu0 %v341, 32
    %v1523 = vpop.permute.xlu0 %1522
    %1524 = vrot.lane.b32.xlu0 %v344, 32
    %v1525 = vpop.permute.xlu0 %1524
    %1526 = vrot.lane.b32.xlu0 %v347, 32
    %v1527 = vpop.permute.xlu0 %1526
    %1528 = vrot.lane.b32.xlu0 %v350, 32
    %v1529 = vpop.permute.xlu0 %1528
    %1530 = vrot.lane.b32.xlu0 %v353, 32
    %v1531 = vpop.permute.xlu0 %1530
    %1532 = vrot.lane.b32.xlu0 %v356, 32
    %v1533 = vpop.permute.xlu0 %1532
    %1534 = vrot.lane.b32.xlu0 %v359, 32
    %v1535 = vpop.permute.xlu0 %1534
    %1536 = vrot.lane.b32.xlu0 %v362, 32
    %v1537 = vpop.permute.xlu0 %1536
    %1538 = vrot.lane.b32.xlu0 %v365, 32
    %v1539 = vpop.permute.xlu0 %1538
    %1540 = vrot.lane.b32.xlu0 %v368, 32
    %v1541 = vpop.permute.xlu0 %1540
    %1558 = vmatpush.msra.mxu0 %v1541
    %1559 = vmatpush.msra.mxu0 %v1539
    %1560 = vmatpush.msra.mxu0 %v1537
    %1561 = vmatpush.msra.mxu0 %v1535
    %1562 = vmatpush.msra.mxu0 %v1533
    %1563 = vmatpush.msra.mxu0 %v1531
    %1564 = vmatpush.msra.mxu0 %v1529
    %1565 = vmatpush.msra.mxu0 %v1527
    %1566 = vmatpush.msra.mxu0 %v1525
    %1567 = vmatpush.msra.mxu0 %v1523
    %1568 = vmatpush.msra.mxu0 %v1521
    %1569 = vmatpush.msra.mxu0 %v1519
    %1570 = vmatpush.msra.mxu0 %v1517
    %1571 = vmatpush.msra.mxu0 %v1515
    %1572 = vmatpush.msra.mxu0 %v1513
    %1573 = vmatpush.msra.mxu0 %v1511
    %1574 = vmatmul.f32.gmra.mxu0 %v1494
    %v1575 = vpop.f32.mrf.mxu0
    %v1576 = vadd.f32 0.0, %v1575
    %1577 = vmatmul.f32.gmra.mxu0 %v1495
    %v1578 = vpop.f32.mrf.mxu0
    %v1579 = vadd.f32 0.0, %v1578
    %1580 = vmatmul.f32.gmra.mxu0 %v1496
    %v1581 = vpop.f32.mrf.mxu0
    %v1582 = vadd.f32 0.0, %v1581
    %1583 = vmatmul.f32.gmra.mxu0 %v1497
    %v1584 = vpop.f32.mrf.mxu0
    %v1585 = vadd.f32 0.0, %v1584
    %1586 = vmatmul.f32.gmra.mxu0 %v1498
    %v1587 = vpop.f32.mrf.mxu0
    %v1588 = vadd.f32 0.0, %v1587
    %1589 = vmatmul.f32.gmra.mxu0 %v1499
    %v1590 = vpop.f32.mrf.mxu0
    %v1591 = vadd.f32 0.0, %v1590
    %1592 = vmatmul.f32.gmra.mxu0 %v1500
    %v1593 = vpop.f32.mrf.mxu0
    %v1594 = vadd.f32 0.0, %v1593
    %1595 = vmatmul.f32.gmra.mxu0 %v1501
    %v1596 = vpop.f32.mrf.mxu0
    %v1597 = vadd.f32 0.0, %v1596
    %1598 = vmatmul.f32.gmra.mxu0 %v1502
    %v1599 = vpop.f32.mrf.mxu0
    %v1600 = vadd.f32 0.0, %v1599
    %1601 = vmatmul.f32.gmra.mxu0 %v1503
    %v1602 = vpop.f32.mrf.mxu0
    %v1603 = vadd.f32 0.0, %v1602
    %1604 = vmatmul.f32.gmra.mxu0 %v1504
    %v1605 = vpop.f32.mrf.mxu0
    %v1606 = vadd.f32 0.0, %v1605
    %1607 = vmatmul.f32.gmra.mxu0 %v1505
    %v1608 = vpop.f32.mrf.mxu0
    %v1609 = vadd.f32 0.0, %v1608
    %1610 = vmatmul.f32.gmra.mxu0 %v1506
    %v1611 = vpop.f32.mrf.mxu0
    %v1612 = vadd.f32 0.0, %v1611
    %1613 = vmatmul.f32.gmra.mxu0 %v1507
    %v1614 = vpop.f32.mrf.mxu0
    %v1615 = vadd.f32 0.0, %v1614
    %1616 = vmatmul.f32.gmra.mxu0 %v1508
    %v1617 = vpop.f32.mrf.mxu0
    %v1618 = vadd.f32 0.0, %v1617
    %1619 = vmatmul.f32.gmra.mxu0 %v1509
    %v1620 = vpop.f32.mrf.mxu0
    %v1621 = vadd.f32 0.0, %v1620
    %1622 = vdwg.mxu0
    %1623 = vrot.lane.b32.xlu0 %v323, 64
    %v1624 = vpop.permute.xlu0 %1623
    %1625 = vrot.lane.b32.xlu0 %v326, 64
    %v1626 = vpop.permute.xlu0 %1625
    %1627 = vrot.lane.b32.xlu0 %v329, 64
    %v1628 = vpop.permute.xlu0 %1627
    %1629 = vrot.lane.b32.xlu0 %v332, 64
    %v1630 = vpop.permute.xlu0 %1629
    %1631 = vrot.lane.b32.xlu0 %v335, 64
    %v1632 = vpop.permute.xlu0 %1631
    %1633 = vrot.lane.b32.xlu0 %v338, 64
    %v1634 = vpop.permute.xlu0 %1633
    %1635 = vrot.lane.b32.xlu0 %v341, 64
    %v1636 = vpop.permute.xlu0 %1635
    %1637 = vrot.lane.b32.xlu0 %v344, 64
    %v1638 = vpop.permute.xlu0 %1637
    %1639 = vrot.lane.b32.xlu0 %v347, 64
    %v1640 = vpop.permute.xlu0 %1639
    %1641 = vrot.lane.b32.xlu0 %v350, 64
    %v1642 = vpop.permute.xlu0 %1641
    %1643 = vrot.lane.b32.xlu0 %v353, 64
    %v1644 = vpop.permute.xlu0 %1643
    %1645 = vrot.lane.b32.xlu0 %v356, 64
    %v1646 = vpop.permute.xlu0 %1645
    %1647 = vrot.lane.b32.xlu0 %v359, 64
    %v1648 = vpop.permute.xlu0 %1647
    %1649 = vrot.lane.b32.xlu0 %v362, 64
    %v1650 = vpop.permute.xlu0 %1649
    %1651 = vrot.lane.b32.xlu0 %v365, 64
    %v1652 = vpop.permute.xlu0 %1651
    %1653 = vrot.lane.b32.xlu0 %v368, 64
    %v1654 = vpop.permute.xlu0 %1653
    %1671 = vmatpush.msra.mxu0 %v1654
    %1672 = vmatpush.msra.mxu0 %v1652
    %1673 = vmatpush.msra.mxu0 %v1650
    %1674 = vmatpush.msra.mxu0 %v1648
    %1675 = vmatpush.msra.mxu0 %v1646
    %1676 = vmatpush.msra.mxu0 %v1644
    %1677 = vmatpush.msra.mxu0 %v1642
    %1678 = vmatpush.msra.mxu0 %v1640
    %1679 = vmatpush.msra.mxu0 %v1638
    %1680 = vmatpush.msra.mxu0 %v1636
    %1681 = vmatpush.msra.mxu0 %v1634
    %1682 = vmatpush.msra.mxu0 %v1632
    %1683 = vmatpush.msra.mxu0 %v1630
    %1684 = vmatpush.msra.mxu0 %v1628
    %1685 = vmatpush.msra.mxu0 %v1626
    %1686 = vmatpush.msra.mxu0 %v1624
    %1687 = vmatmul.f32.gmra.mxu0 %v949
    %v1688 = vpop.f32.mrf.mxu0
    %v1689 = vadd.f32 %v1576, %v1688
    %1690 = vmatmul.f32.gmra.mxu0 %v950
    %v1691 = vpop.f32.mrf.mxu0
    %v1692 = vadd.f32 %v1579, %v1691
    %1693 = vmatmul.f32.gmra.mxu0 %v951
    %v1694 = vpop.f32.mrf.mxu0
    %v1695 = vadd.f32 %v1582, %v1694
    %1696 = vmatmul.f32.gmra.mxu0 %v952
    %v1697 = vpop.f32.mrf.mxu0
    %v1698 = vadd.f32 %v1585, %v1697
    %1699 = vmatmul.f32.gmra.mxu0 %v953
    %v1700 = vpop.f32.mrf.mxu0
    %v1701 = vadd.f32 %v1588, %v1700
    %1702 = vmatmul.f32.gmra.mxu0 %v954
    %v1703 = vpop.f32.mrf.mxu0
    %v1704 = vadd.f32 %v1591, %v1703
    %1705 = vmatmul.f32.gmra.mxu0 %v955
    %v1706 = vpop.f32.mrf.mxu0
    %v1707 = vadd.f32 %v1594, %v1706
    %1708 = vmatmul.f32.gmra.mxu0 %v956
    %v1709 = vpop.f32.mrf.mxu0
    %v1710 = vadd.f32 %v1597, %v1709
    %1711 = vmatmul.f32.gmra.mxu0 %v957
    %v1712 = vpop.f32.mrf.mxu0
    %v1713 = vadd.f32 %v1600, %v1712
    %1714 = vmatmul.f32.gmra.mxu0 %v958
    %v1715 = vpop.f32.mrf.mxu0
    %v1716 = vadd.f32 %v1603, %v1715
    %1717 = vmatmul.f32.gmra.mxu0 %v959
    %v1718 = vpop.f32.mrf.mxu0
    %v1719 = vadd.f32 %v1606, %v1718
    %1720 = vmatmul.f32.gmra.mxu0 %v960
    %v1721 = vpop.f32.mrf.mxu0
    %v1722 = vadd.f32 %v1609, %v1721
    %1723 = vmatmul.f32.gmra.mxu0 %v961
    %v1724 = vpop.f32.mrf.mxu0
    %v1725 = vadd.f32 %v1612, %v1724
    %1726 = vmatmul.f32.gmra.mxu0 %v962
    %v1727 = vpop.f32.mrf.mxu0
    %v1728 = vadd.f32 %v1615, %v1727
    %1729 = vmatmul.f32.gmra.mxu0 %v963
    %v1730 = vpop.f32.mrf.mxu0
    %v1731 = vadd.f32 %v1618, %v1730
    %1732 = vmatmul.f32.gmra.mxu0 %v964
    %v1733 = vpop.f32.mrf.mxu0
    %v1734 = vadd.f32 %v1621, %v1733
    %1735 = vdwg.mxu0
    %1736 = vrot.lane.b32.xlu0 %v323, 112
    %v1737 = vpop.permute.xlu0 %1736
    %1738 = vrot.lane.b32.xlu0 %v326, 112
    %v1739 = vpop.permute.xlu0 %1738
    %1740 = vrot.lane.b32.xlu0 %v329, 112
    %v1741 = vpop.permute.xlu0 %1740
    %1742 = vrot.lane.b32.xlu0 %v332, 112
    %v1743 = vpop.permute.xlu0 %1742
    %1744 = vrot.lane.b32.xlu0 %v335, 112
    %v1745 = vpop.permute.xlu0 %1744
    %1746 = vrot.lane.b32.xlu0 %v338, 112
    %v1747 = vpop.permute.xlu0 %1746
    %1748 = vrot.lane.b32.xlu0 %v341, 112
    %v1749 = vpop.permute.xlu0 %1748
    %1750 = vrot.lane.b32.xlu0 %v344, 112
    %v1751 = vpop.permute.xlu0 %1750
    %1752 = vrot.lane.b32.xlu0 %v347, 112
    %v1753 = vpop.permute.xlu0 %1752
    %1754 = vrot.lane.b32.xlu0 %v350, 112
    %v1755 = vpop.permute.xlu0 %1754
    %1756 = vrot.lane.b32.xlu0 %v353, 112
    %v1757 = vpop.permute.xlu0 %1756
    %1758 = vrot.lane.b32.xlu0 %v356, 112
    %v1759 = vpop.permute.xlu0 %1758
    %1760 = vrot.lane.b32.xlu0 %v359, 112
    %v1761 = vpop.permute.xlu0 %1760
    %1762 = vrot.lane.b32.xlu0 %v362, 112
    %v1763 = vpop.permute.xlu0 %1762
    %1764 = vrot.lane.b32.xlu0 %v365, 112
    %v1765 = vpop.permute.xlu0 %1764
    %1766 = vrot.lane.b32.xlu0 %v368, 112
    %v1767 = vpop.permute.xlu0 %1766
    %1768 = vrot.lane.b32.xlu0 %v323, 80
    %v1769 = vpop.permute.xlu0 %1768
    %1770 = vrot.lane.b32.xlu0 %v326, 80
    %v1771 = vpop.permute.xlu0 %1770
    %1772 = vrot.lane.b32.xlu0 %v329, 80
    %v1773 = vpop.permute.xlu0 %1772
    %1774 = vrot.lane.b32.xlu0 %v332, 80
    %v1775 = vpop.permute.xlu0 %1774
    %1776 = vrot.lane.b32.xlu0 %v335, 80
    %v1777 = vpop.permute.xlu0 %1776
    %1778 = vrot.lane.b32.xlu0 %v338, 80
    %v1779 = vpop.permute.xlu0 %1778
    %1780 = vrot.lane.b32.xlu0 %v341, 80
    %v1781 = vpop.permute.xlu0 %1780
    %1782 = vrot.lane.b32.xlu0 %v344, 80
    %v1783 = vpop.permute.xlu0 %1782
    %1784 = vrot.lane.b32.xlu0 %v347, 80
    %v1785 = vpop.permute.xlu0 %1784
    %1786 = vrot.lane.b32.xlu0 %v350, 80
    %v1787 = vpop.permute.xlu0 %1786
    %1788 = vrot.lane.b32.xlu0 %v353, 80
    %v1789 = vpop.permute.xlu0 %1788
    %1790 = vrot.lane.b32.xlu0 %v356, 80
    %v1791 = vpop.permute.xlu0 %1790
    %1792 = vrot.lane.b32.xlu0 %v359, 80
    %v1793 = vpop.permute.xlu0 %1792
    %1794 = vrot.lane.b32.xlu0 %v362, 80
    %v1795 = vpop.permute.xlu0 %1794
    %1796 = vrot.lane.b32.xlu0 %v365, 80
    %v1797 = vpop.permute.xlu0 %1796
    %1798 = vrot.lane.b32.xlu0 %v368, 80
    %v1799 = vpop.permute.xlu0 %1798
    %v1800 = vsel %vm483, %v1737, 0
    %v1802 = vsel %vm483, %v1739, 0
    %v1804 = vsel %vm483, %v1741, 0
    %v1806 = vsel %vm483, %v1743, 0
    %v1808 = vsel %vm483, %v1745, 0
    %v1810 = vsel %vm483, %v1747, 0
    %v1812 = vsel %vm483, %v1749, 0
    %v1814 = vsel %vm483, %v1751, 0
    %v1816 = vsel %vm483, %v1753, 0
    %v1818 = vsel %vm483, %v1755, 0
    %v1820 = vsel %vm483, %v1757, 0
    %v1822 = vsel %vm483, %v1759, 0
    %v1824 = vsel %vm483, %v1761, 0
    %v1826 = vsel %vm483, %v1763, 0
    %v1828 = vsel %vm483, %v1765, 0
    %v1830 = vsel %vm483, %v1767, 0
    %v1832 = vsel %vm483, %v1769, 0
    %v1834 = vsel %vm483, %v1771, 0
    %v1836 = vsel %vm483, %v1773, 0
    %v1838 = vsel %vm483, %v1775, 0
    %v1840 = vsel %vm483, %v1777, 0
    %v1842 = vsel %vm483, %v1779, 0
    %v1844 = vsel %vm483, %v1781, 0
    %v1846 = vsel %vm483, %v1783, 0
    %v1848 = vsel %vm483, %v1785, 0
    %v1850 = vsel %vm483, %v1787, 0
    %v1852 = vsel %vm483, %v1789, 0
    %v1854 = vsel %vm483, %v1791, 0
    %v1856 = vsel %vm483, %v1793, 0
    %v1858 = vsel %vm483, %v1795, 0
    %v1860 = vsel %vm483, %v1797, 0
    %v1862 = vsel %vm483, %v1799, 0
    %1864 = vmatpush.xpose.msra.mxu0 %v1862
    %1865 = vmatpush.xpose.msra.mxu0 %v1860
    %1866 = vmatpush.xpose.msra.mxu0 %v1858
    %1867 = vmatpush.xpose.msra.mxu0 %v1856
    %1868 = vmatpush.xpose.msra.mxu0 %v1854
    %1869 = vmatpush.xpose.msra.mxu0 %v1852
    %1870 = vmatpush.xpose.msra.mxu0 %v1850
    %1871 = vmatpush.xpose.msra.mxu0 %v1848
    %1872 = vmatpush.xpose.msra.mxu0 %v1846
    %1873 = vmatpush.xpose.msra.mxu0 %v1844
    %1874 = vmatpush.xpose.msra.mxu0 %v1842
    %1875 = vmatpush.xpose.msra.mxu0 %v1840
    %1876 = vmatpush.xpose.msra.mxu0 %v1838
    %1877 = vmatpush.xpose.msra.mxu0 %v1836
    %1878 = vmatpush.xpose.msra.mxu0 %v1834
    %1879 = vmatpush.xpose.msra.mxu0 %v1832
    %1880 = vmatmul.f32.gmra.mxu0 %v1800
    %v1881 = vpop.f32.mrf.mxu0
    %v1882 = vadd.f32 %v151, %v1881
    %1883 = vmatmul.f32.gmra.mxu0 %v1802
    %v1884 = vpop.f32.mrf.mxu0
    %v1885 = vadd.f32 %v152, %v1884
    %1886 = vmatmul.f32.gmra.mxu0 %v1804
    %v1887 = vpop.f32.mrf.mxu0
    %v1888 = vadd.f32 %v153, %v1887
    %1889 = vmatmul.f32.gmra.mxu0 %v1806
    %v1890 = vpop.f32.mrf.mxu0
    %v1891 = vadd.f32 %v154, %v1890
    %1892 = vmatmul.f32.gmra.mxu0 %v1808
    %v1893 = vpop.f32.mrf.mxu0
    %v1894 = vadd.f32 %v155, %v1893
    %1895 = vmatmul.f32.gmra.mxu0 %v1810
    %v1896 = vpop.f32.mrf.mxu0
    %v1897 = vadd.f32 %v156, %v1896
    %1898 = vmatmul.f32.gmra.mxu0 %v1812
    %v1899 = vpop.f32.mrf.mxu0
    %v1900 = vadd.f32 %v157, %v1899
    %1901 = vmatmul.f32.gmra.mxu0 %v1814
    %v1902 = vpop.f32.mrf.mxu0
    %v1903 = vadd.f32 %v158, %v1902
    %1904 = vmatmul.f32.gmra.mxu0 %v1816
    %v1905 = vpop.f32.mrf.mxu0
    %v1906 = vadd.f32 %v159, %v1905
    %1907 = vmatmul.f32.gmra.mxu0 %v1818
    %v1908 = vpop.f32.mrf.mxu0
    %v1909 = vadd.f32 %v160, %v1908
    %1910 = vmatmul.f32.gmra.mxu0 %v1820
    %v1911 = vpop.f32.mrf.mxu0
    %v1912 = vadd.f32 %v161, %v1911
    %1913 = vmatmul.f32.gmra.mxu0 %v1822
    %v1914 = vpop.f32.mrf.mxu0
    %v1915 = vadd.f32 %v162, %v1914
    %1916 = vmatmul.f32.gmra.mxu0 %v1824
    %v1917 = vpop.f32.mrf.mxu0
    %v1918 = vadd.f32 %v163, %v1917
    %1919 = vmatmul.f32.gmra.mxu0 %v1826
    %v1920 = vpop.f32.mrf.mxu0
    %v1921 = vadd.f32 %v164, %v1920
    %1922 = vmatmul.f32.gmra.mxu0 %v1828
    %v1923 = vpop.f32.mrf.mxu0
    %v1924 = vadd.f32 %v165, %v1923
    %1925 = vmatmul.f32.gmra.mxu0 %v1830
    %v1926 = vpop.f32.mrf.mxu0
    %v1927 = vadd.f32 %v166, %v1926
    %1928 = vdwg.mxu0
    %1929 = vmax.xlane.f32.xlu0 %v1882
    %v1930 = vpop.xlane.xlu0 %1929
    %1931 = vmax.xlane.f32.xlu0 %v1885
    %v1932 = vpop.xlane.xlu0 %1931
    %1933 = vmax.xlane.f32.xlu0 %v1888
    %v1934 = vpop.xlane.xlu0 %1933
    %1935 = vmax.xlane.f32.xlu0 %v1891
    %v1936 = vpop.xlane.xlu0 %1935
    %1937 = vmax.xlane.f32.xlu0 %v1894
    %v1938 = vpop.xlane.xlu0 %1937
    %1939 = vmax.xlane.f32.xlu0 %v1897
    %v1940 = vpop.xlane.xlu0 %1939
    %1941 = vmax.xlane.f32.xlu0 %v1900
    %v1942 = vpop.xlane.xlu0 %1941
    %1943 = vmax.xlane.f32.xlu0 %v1903
    %v1944 = vpop.xlane.xlu0 %1943
    %1945 = vmax.xlane.f32.xlu0 %v1906
    %v1946 = vpop.xlane.xlu0 %1945
    %1947 = vmax.xlane.f32.xlu0 %v1909
    %v1948 = vpop.xlane.xlu0 %1947
    %1949 = vmax.xlane.f32.xlu0 %v1912
    %v1950 = vpop.xlane.xlu0 %1949
    %1951 = vmax.xlane.f32.xlu0 %v1915
    %v1952 = vpop.xlane.xlu0 %1951
    %1953 = vmax.xlane.f32.xlu0 %v1918
    %v1954 = vpop.xlane.xlu0 %1953
    %1955 = vmax.xlane.f32.xlu0 %v1921
    %v1956 = vpop.xlane.xlu0 %1955
    %1957 = vmax.xlane.f32.xlu0 %v1924
    %v1958 = vpop.xlane.xlu0 %1957
    %1959 = vmax.xlane.f32.xlu0 %v1927
    %v1960 = vpop.xlane.xlu0 %1959
    %v1961 = vsub.f32 %v1882, %v1930
    %v1962 = vsub.f32 %v1885, %v1932
    %v1963 = vsub.f32 %v1888, %v1934
    %v1964 = vsub.f32 %v1891, %v1936
    %v1965 = vsub.f32 %v1894, %v1938
    %v1966 = vsub.f32 %v1897, %v1940
    %v1967 = vsub.f32 %v1900, %v1942
    %v1968 = vsub.f32 %v1903, %v1944
    %v1969 = vsub.f32 %v1906, %v1946
    %v1970 = vsub.f32 %v1909, %v1948
    %v1971 = vsub.f32 %v1912, %v1950
    %v1972 = vsub.f32 %v1915, %v1952
    %v1973 = vsub.f32 %v1918, %v1954
    %v1974 = vsub.f32 %v1921, %v1956
    %v1975 = vsub.f32 %v1924, %v1958
    %v1976 = vsub.f32 %v1927, %v1960
    %v1977 = vmul.f32 %v1961, 1.442695
    %v1978 = vpow.pop %v1977
    %v1979 = vmul.f32 %v1962, 1.442695
    %v1980 = vpow.pop %v1979
    %v1981 = vmul.f32 %v1963, 1.442695
    %v1982 = vpow.pop %v1981
    %v1983 = vmul.f32 %v1964, 1.442695
    %v1984 = vpow.pop %v1983
    %v1985 = vmul.f32 %v1965, 1.442695
    %v1986 = vpow.pop %v1985
    %v1987 = vmul.f32 %v1966, 1.442695
    %v1988 = vpow.pop %v1987
    %v1989 = vmul.f32 %v1967, 1.442695
    %v1990 = vpow.pop %v1989
    %v1991 = vmul.f32 %v1968, 1.442695
    %v1992 = vpow.pop %v1991
    %v1993 = vmul.f32 %v1969, 1.442695
    %v1994 = vpow.pop %v1993
    %v1995 = vmul.f32 %v1970, 1.442695
    %v1996 = vpow.pop %v1995
    %v1997 = vmul.f32 %v1971, 1.442695
    %v1998 = vpow.pop %v1997
    %v1999 = vmul.f32 %v1972, 1.442695
    %v2000 = vpow.pop %v1999
    %v2001 = vmul.f32 %v1973, 1.442695
    %v2002 = vpow.pop %v2001
    %v2003 = vmul.f32 %v1974, 1.442695
    %v2004 = vpow.pop %v2003
    %v2005 = vmul.f32 %v1975, 1.442695
    %v2006 = vpow.pop %v2005
    %v2007 = vmul.f32 %v1976, 1.442695
    %v2008 = vpow.pop %v2007
    %2009 = vadd.xlane.f32.xlu0 %v1978
    %v2010 = vpop.xlane.xlu0 %2009
    %2011 = vadd.xlane.f32.xlu0 %v1980
    %v2012 = vpop.xlane.xlu0 %2011
    %2013 = vadd.xlane.f32.xlu0 %v1982
    %v2014 = vpop.xlane.xlu0 %2013
    %2015 = vadd.xlane.f32.xlu0 %v1984
    %v2016 = vpop.xlane.xlu0 %2015
    %2017 = vadd.xlane.f32.xlu0 %v1986
    %v2018 = vpop.xlane.xlu0 %2017
    %2019 = vadd.xlane.f32.xlu0 %v1988
    %v2020 = vpop.xlane.xlu0 %2019
    %2021 = vadd.xlane.f32.xlu0 %v1990
    %v2022 = vpop.xlane.xlu0 %2021
    %2023 = vadd.xlane.f32.xlu0 %v1992
    %v2024 = vpop.xlane.xlu0 %2023
    %2025 = vadd.xlane.f32.xlu0 %v1994
    %v2026 = vpop.xlane.xlu0 %2025
    %2027 = vadd.xlane.f32.xlu0 %v1996
    %v2028 = vpop.xlane.xlu0 %2027
    %2029 = vadd.xlane.f32.xlu0 %v1998
    %v2030 = vpop.xlane.xlu0 %2029
    %2031 = vadd.xlane.f32.xlu0 %v2000
    %v2032 = vpop.xlane.xlu0 %2031
    %2033 = vadd.xlane.f32.xlu0 %v2002
    %v2034 = vpop.xlane.xlu0 %2033
    %2035 = vadd.xlane.f32.xlu0 %v2004
    %v2036 = vpop.xlane.xlu0 %2035
    %2037 = vadd.xlane.f32.xlu0 %v2006
    %v2038 = vpop.xlane.xlu0 %2037
    %2039 = vadd.xlane.f32.xlu0 %v2008
    %v2040 = vpop.xlane.xlu0 %2039
    %v2041 = vrcp.pop %v2010
    %v2042 = vmul.f32 %v2010, %v2041
    %v2043 = vsub.f32 1.0, %v2042
    %v2044 = vmul.f32 %v2041, %v2043
    %v2045 = vadd.f32 %v2041, %v2044
    %vm2046 = vweird.f32 %v2010
    %vm2047 = vweird.f32 %v2041
    %vm2048 = vmor %vm2046, %vm2047
    %v2049 = vsel %vm2048, %v2041, %v2045
    %v2050 = vand.u32 2147483647, %v2010
    %vm2051 = vcmp.eq.f32.partialorder %v2050, 8.507059e+37
    %v2052 = vand.u32 %v2010, 2147483648
    %v2053 = vor.u32 1.1754944e-38, %v2052
    %v2054 = vsel %vm2051, %v2053, %v2049
    %v2055 = vrcp.pop %v2012
    %v2056 = vmul.f32 %v2012, %v2055
    %v2057 = vsub.f32 1.0, %v2056
    %v2058 = vmul.f32 %v2055, %v2057
    %v2059 = vadd.f32 %v2055, %v2058
    %vm2060 = vweird.f32 %v2012
    %vm2061 = vweird.f32 %v2055
    %vm2062 = vmor %vm2060, %vm2061
    %v2063 = vsel %vm2062, %v2055, %v2059
    %v2064 = vand.u32 2147483647, %v2012
    %vm2065 = vcmp.eq.f32.partialorder %v2064, 8.507059e+37
    %v2066 = vand.u32 %v2012, 2147483648
    %v2067 = vor.u32 1.1754944e-38, %v2066
    %v2068 = vsel %vm2065, %v2067, %v2063
    %v2069 = vrcp.pop %v2014
    %v2070 = vmul.f32 %v2014, %v2069
    %v2071 = vsub.f32 1.0, %v2070
    %v2072 = vmul.f32 %v2069, %v2071
    %v2073 = vadd.f32 %v2069, %v2072
    %vm2074 = vweird.f32 %v2014
    %vm2075 = vweird.f32 %v2069
    %vm2076 = vmor %vm2074, %vm2075
    %v2077 = vsel %vm2076, %v2069, %v2073
    %v2078 = vand.u32 2147483647, %v2014
    %vm2079 = vcmp.eq.f32.partialorder %v2078, 8.507059e+37
    %v2080 = vand.u32 %v2014, 2147483648
    %v2081 = vor.u32 1.1754944e-38, %v2080
    %v2082 = vsel %vm2079, %v2081, %v2077
    %v2083 = vrcp.pop %v2016
    %v2084 = vmul.f32 %v2016, %v2083
    %v2085 = vsub.f32 1.0, %v2084
    %v2086 = vmul.f32 %v2083, %v2085
    %v2087 = vadd.f32 %v2083, %v2086
    %vm2088 = vweird.f32 %v2016
    %vm2089 = vweird.f32 %v2083
    %vm2090 = vmor %vm2088, %vm2089
    %v2091 = vsel %vm2090, %v2083, %v2087
    %v2092 = vand.u32 2147483647, %v2016
    %vm2093 = vcmp.eq.f32.partialorder %v2092, 8.507059e+37
    %v2094 = vand.u32 %v2016, 2147483648
    %v2095 = vor.u32 1.1754944e-38, %v2094
    %v2096 = vsel %vm2093, %v2095, %v2091
    %v2097 = vrcp.pop %v2018
    %v2098 = vmul.f32 %v2018, %v2097
    %v2099 = vsub.f32 1.0, %v2098
    %v2100 = vmul.f32 %v2097, %v2099
    %v2101 = vadd.f32 %v2097, %v2100
    %vm2102 = vweird.f32 %v2018
    %vm2103 = vweird.f32 %v2097
    %vm2104 = vmor %vm2102, %vm2103
    %v2105 = vsel %vm2104, %v2097, %v2101
    %v2106 = vand.u32 2147483647, %v2018
    %vm2107 = vcmp.eq.f32.partialorder %v2106, 8.507059e+37
    %v2108 = vand.u32 %v2018, 2147483648
    %v2109 = vor.u32 1.1754944e-38, %v2108
    %v2110 = vsel %vm2107, %v2109, %v2105
    %v2111 = vrcp.pop %v2020
    %v2112 = vmul.f32 %v2020, %v2111
    %v2113 = vsub.f32 1.0, %v2112
    %v2114 = vmul.f32 %v2111, %v2113
    %v2115 = vadd.f32 %v2111, %v2114
    %vm2116 = vweird.f32 %v2020
    %vm2117 = vweird.f32 %v2111
    %vm2118 = vmor %vm2116, %vm2117
    %v2119 = vsel %vm2118, %v2111, %v2115
    %v2120 = vand.u32 2147483647, %v2020
    %vm2121 = vcmp.eq.f32.partialorder %v2120, 8.507059e+37
    %v2122 = vand.u32 %v2020, 2147483648
    %v2123 = vor.u32 1.1754944e-38, %v2122
    %v2124 = vsel %vm2121, %v2123, %v2119
    %v2125 = vrcp.pop %v2022
    %v2126 = vmul.f32 %v2022, %v2125
    %v2127 = vsub.f32 1.0, %v2126
    %v2128 = vmul.f32 %v2125, %v2127
    %v2129 = vadd.f32 %v2125, %v2128
    %vm2130 = vweird.f32 %v2022
    %vm2131 = vweird.f32 %v2125
    %vm2132 = vmor %vm2130, %vm2131
    %v2133 = vsel %vm2132, %v2125, %v2129
    %v2134 = vand.u32 2147483647, %v2022
    %vm2135 = vcmp.eq.f32.partialorder %v2134, 8.507059e+37
    %v2136 = vand.u32 %v2022, 2147483648
    %v2137 = vor.u32 1.1754944e-38, %v2136
    %v2138 = vsel %vm2135, %v2137, %v2133
    %v2139 = vrcp.pop %v2024
    %v2140 = vmul.f32 %v2024, %v2139
    %v2141 = vsub.f32 1.0, %v2140
    %v2142 = vmul.f32 %v2139, %v2141
    %v2143 = vadd.f32 %v2139, %v2142
    %vm2144 = vweird.f32 %v2024
    %vm2145 = vweird.f32 %v2139
    %vm2146 = vmor %vm2144, %vm2145
    %v2147 = vsel %vm2146, %v2139, %v2143
    %v2148 = vand.u32 2147483647, %v2024
    %vm2149 = vcmp.eq.f32.partialorder %v2148, 8.507059e+37
    %v2150 = vand.u32 %v2024, 2147483648
    %v2151 = vor.u32 1.1754944e-38, %v2150
    %v2152 = vsel %vm2149, %v2151, %v2147
    %v2153 = vrcp.pop %v2026
    %v2154 = vmul.f32 %v2026, %v2153
    %v2155 = vsub.f32 1.0, %v2154
    %v2156 = vmul.f32 %v2153, %v2155
    %v2157 = vadd.f32 %v2153, %v2156
    %vm2158 = vweird.f32 %v2026
    %vm2159 = vweird.f32 %v2153
    %vm2160 = vmor %vm2158, %vm2159
    %v2161 = vsel %vm2160, %v2153, %v2157
    %v2162 = vand.u32 2147483647, %v2026
    %vm2163 = vcmp.eq.f32.partialorder %v2162, 8.507059e+37
    %v2164 = vand.u32 %v2026, 2147483648
    %v2165 = vor.u32 1.1754944e-38, %v2164
    %v2166 = vsel %vm2163, %v2165, %v2161
    %v2167 = vrcp.pop %v2028
    %v2168 = vmul.f32 %v2028, %v2167
    %v2169 = vsub.f32 1.0, %v2168
    %v2170 = vmul.f32 %v2167, %v2169
    %v2171 = vadd.f32 %v2167, %v2170
    %vm2172 = vweird.f32 %v2028
    %vm2173 = vweird.f32 %v2167
    %vm2174 = vmor %vm2172, %vm2173
    %v2175 = vsel %vm2174, %v2167, %v2171
    %v2176 = vand.u32 2147483647, %v2028
    %vm2177 = vcmp.eq.f32.partialorder %v2176, 8.507059e+37
    %v2178 = vand.u32 %v2028, 2147483648
    %v2179 = vor.u32 1.1754944e-38, %v2178
    %v2180 = vsel %vm2177, %v2179, %v2175
    %v2181 = vrcp.pop %v2030
    %v2182 = vmul.f32 %v2030, %v2181
    %v2183 = vsub.f32 1.0, %v2182
    %v2184 = vmul.f32 %v2181, %v2183
    %v2185 = vadd.f32 %v2181, %v2184
    %vm2186 = vweird.f32 %v2030
    %vm2187 = vweird.f32 %v2181
    %vm2188 = vmor %vm2186, %vm2187
    %v2189 = vsel %vm2188, %v2181, %v2185
    %v2190 = vand.u32 2147483647, %v2030
    %vm2191 = vcmp.eq.f32.partialorder %v2190, 8.507059e+37
    %v2192 = vand.u32 %v2030, 2147483648
    %v2193 = vor.u32 1.1754944e-38, %v2192
    %v2194 = vsel %vm2191, %v2193, %v2189
    %v2195 = vrcp.pop %v2032
    %v2196 = vmul.f32 %v2032, %v2195
    %v2197 = vsub.f32 1.0, %v2196
    %v2198 = vmul.f32 %v2195, %v2197
    %v2199 = vadd.f32 %v2195, %v2198
    %vm2200 = vweird.f32 %v2032
    %vm2201 = vweird.f32 %v2195
    %vm2202 = vmor %vm2200, %vm2201
    %v2203 = vsel %vm2202, %v2195, %v2199
    %v2204 = vand.u32 2147483647, %v2032
    %vm2205 = vcmp.eq.f32.partialorder %v2204, 8.507059e+37
    %v2206 = vand.u32 %v2032, 2147483648
    %v2207 = vor.u32 1.1754944e-38, %v2206
    %v2208 = vsel %vm2205, %v2207, %v2203
    %v2209 = vrcp.pop %v2034
    %v2210 = vmul.f32 %v2034, %v2209
    %v2211 = vsub.f32 1.0, %v2210
    %v2212 = vmul.f32 %v2209, %v2211
    %v2213 = vadd.f32 %v2209, %v2212
    %vm2214 = vweird.f32 %v2034
    %vm2215 = vweird.f32 %v2209
    %vm2216 = vmor %vm2214, %vm2215
    %v2217 = vsel %vm2216, %v2209, %v2213
    %v2218 = vand.u32 2147483647, %v2034
    %vm2219 = vcmp.eq.f32.partialorder %v2218, 8.507059e+37
    %v2220 = vand.u32 %v2034, 2147483648
    %v2221 = vor.u32 1.1754944e-38, %v2220
    %v2222 = vsel %vm2219, %v2221, %v2217
    %v2223 = vrcp.pop %v2036
    %v2224 = vmul.f32 %v2036, %v2223
    %v2225 = vsub.f32 1.0, %v2224
    %v2226 = vmul.f32 %v2223, %v2225
    %v2227 = vadd.f32 %v2223, %v2226
    %vm2228 = vweird.f32 %v2036
    %vm2229 = vweird.f32 %v2223
    %vm2230 = vmor %vm2228, %vm2229
    %v2231 = vsel %vm2230, %v2223, %v2227
    %v2232 = vand.u32 2147483647, %v2036
    %vm2233 = vcmp.eq.f32.partialorder %v2232, 8.507059e+37
    %v2234 = vand.u32 %v2036, 2147483648
    %v2235 = vor.u32 1.1754944e-38, %v2234
    %v2236 = vsel %vm2233, %v2235, %v2231
    %v2237 = vrcp.pop %v2038
    %v2238 = vmul.f32 %v2038, %v2237
    %v2239 = vsub.f32 1.0, %v2238
    %v2240 = vmul.f32 %v2237, %v2239
    %v2241 = vadd.f32 %v2237, %v2240
    %vm2242 = vweird.f32 %v2038
    %vm2243 = vweird.f32 %v2237
    %vm2244 = vmor %vm2242, %vm2243
    %v2245 = vsel %vm2244, %v2237, %v2241
    %v2246 = vand.u32 2147483647, %v2038
    %vm2247 = vcmp.eq.f32.partialorder %v2246, 8.507059e+37
    %v2248 = vand.u32 %v2038, 2147483648
    %v2249 = vor.u32 1.1754944e-38, %v2248
    %v2250 = vsel %vm2247, %v2249, %v2245
    %v2251 = vrcp.pop %v2040
    %v2252 = vmul.f32 %v2040, %v2251
    %v2253 = vsub.f32 1.0, %v2252
    %v2254 = vmul.f32 %v2251, %v2253
    %v2255 = vadd.f32 %v2251, %v2254
    %vm2256 = vweird.f32 %v2040
    %vm2257 = vweird.f32 %v2251
    %vm2258 = vmor %vm2256, %vm2257
    %v2259 = vsel %vm2258, %v2251, %v2255
    %v2260 = vand.u32 2147483647, %v2040
    %vm2261 = vcmp.eq.f32.partialorder %v2260, 8.507059e+37
    %v2262 = vand.u32 %v2040, 2147483648
    %v2263 = vor.u32 1.1754944e-38, %v2262
    %v2264 = vsel %vm2261, %v2263, %v2259
    %v2265 = vmul.f32 %v1978, %v2054
    %v2266 = vmul.f32 %v1980, %v2068
    %v2267 = vmul.f32 %v1982, %v2082
    %v2268 = vmul.f32 %v1984, %v2096
    %v2269 = vmul.f32 %v1986, %v2110
    %v2270 = vmul.f32 %v1988, %v2124
    %v2271 = vmul.f32 %v1990, %v2138
    %v2272 = vmul.f32 %v1992, %v2152
    %v2273 = vmul.f32 %v1994, %v2166
    %v2274 = vmul.f32 %v1996, %v2180
    %v2275 = vmul.f32 %v1998, %v2194
    %v2276 = vmul.f32 %v2000, %v2208
    %v2277 = vmul.f32 %v2002, %v2222
    %v2278 = vmul.f32 %v2004, %v2236
    %v2279 = vmul.f32 %v2006, %v2250
    %v2280 = vmul.f32 %v2008, %v2264
    %2281 = vmatpush.msra.mxu0 %v433
    %2282 = vmatpush.msra.mxu0 %v430
    %2283 = vmatpush.msra.mxu0 %v427
    %2284 = vmatpush.msra.mxu0 %v424
    %2285 = vmatpush.msra.mxu0 %v421
    %2286 = vmatpush.msra.mxu0 %v418
    %2287 = vmatpush.msra.mxu0 %v415
    %2288 = vmatpush.msra.mxu0 %v412
    %2289 = vmatpush.msra.mxu0 %v409
    %2290 = vmatpush.msra.mxu0 %v406
    %2291 = vmatpush.msra.mxu0 %v403
    %2292 = vmatpush.msra.mxu0 %v400
    %2293 = vmatpush.msra.mxu0 %v397
    %2294 = vmatpush.msra.mxu0 %v394
    %2295 = vmatpush.msra.mxu0 %v391
    %2296 = vmatpush.msra.mxu0 %v388
    %2297 = vmatmul.f32.gmra.mxu0 %v2265
    %v2298 = vpop.f32.mrf.mxu0
    %v2299 = vadd.f32 0.0, %v2298
    %2300 = vmatmul.f32.gmra.mxu0 %v2266
    %v2301 = vpop.f32.mrf.mxu0
    %v2302 = vadd.f32 0.0, %v2301
    %2303 = vmatmul.f32.gmra.mxu0 %v2267
    %v2304 = vpop.f32.mrf.mxu0
    %v2305 = vadd.f32 0.0, %v2304
    %2306 = vmatmul.f32.gmra.mxu0 %v2268
    %v2307 = vpop.f32.mrf.mxu0
    %v2308 = vadd.f32 0.0, %v2307
    %2309 = vmatmul.f32.gmra.mxu0 %v2269
    %v2310 = vpop.f32.mrf.mxu0
    %v2311 = vadd.f32 0.0, %v2310
    %2312 = vmatmul.f32.gmra.mxu0 %v2270
    %v2313 = vpop.f32.mrf.mxu0
    %v2314 = vadd.f32 0.0, %v2313
    %2315 = vmatmul.f32.gmra.mxu0 %v2271
    %v2316 = vpop.f32.mrf.mxu0
    %v2317 = vadd.f32 0.0, %v2316
    %2318 = vmatmul.f32.gmra.mxu0 %v2272
    %v2319 = vpop.f32.mrf.mxu0
    %v2320 = vadd.f32 0.0, %v2319
    %2321 = vmatmul.f32.gmra.mxu0 %v2273
    %v2322 = vpop.f32.mrf.mxu0
    %v2323 = vadd.f32 0.0, %v2322
    %2324 = vmatmul.f32.gmra.mxu0 %v2274
    %v2325 = vpop.f32.mrf.mxu0
    %v2326 = vadd.f32 0.0, %v2325
    %2327 = vmatmul.f32.gmra.mxu0 %v2275
    %v2328 = vpop.f32.mrf.mxu0
    %v2329 = vadd.f32 0.0, %v2328
    %2330 = vmatmul.f32.gmra.mxu0 %v2276
    %v2331 = vpop.f32.mrf.mxu0
    %v2332 = vadd.f32 0.0, %v2331
    %2333 = vmatmul.f32.gmra.mxu0 %v2277
    %v2334 = vpop.f32.mrf.mxu0
    %v2335 = vadd.f32 0.0, %v2334
    %2336 = vmatmul.f32.gmra.mxu0 %v2278
    %v2337 = vpop.f32.mrf.mxu0
    %v2338 = vadd.f32 0.0, %v2337
    %2339 = vmatmul.f32.gmra.mxu0 %v2279
    %v2340 = vpop.f32.mrf.mxu0
    %v2341 = vadd.f32 0.0, %v2340
    %2342 = vmatmul.f32.gmra.mxu0 %v2280
    %v2343 = vpop.f32.mrf.mxu0
    %v2344 = vadd.f32 0.0, %v2343
    %2345 = vdwg.mxu0
    %v2346 = vadd.f32 %v1689, %v2299
    %v2347 = vadd.f32 %v1692, %v2302
    %v2348 = vadd.f32 %v1695, %v2305
    %v2349 = vadd.f32 %v1698, %v2308
    %v2350 = vadd.f32 %v1701, %v2311
    %v2351 = vadd.f32 %v1704, %v2314
    %v2352 = vadd.f32 %v1707, %v2317
    %v2353 = vadd.f32 %v1710, %v2320
    %v2354 = vadd.f32 %v1713, %v2323
    %v2355 = vadd.f32 %v1716, %v2326
    %v2356 = vadd.f32 %v1719, %v2329
    %v2357 = vadd.f32 %v1722, %v2332
    %v2358 = vadd.f32 %v1725, %v2335
    %v2359 = vadd.f32 %v1728, %v2338
    %v2360 = vadd.f32 %v1731, %v2341
    %v2361 = vadd.f32 %v1734, %v2344
    %2362 = vrot.lane.b32.xlu0 %v323, 104
    %v2363 = vpop.permute.xlu0 %2362
    %2364 = vrot.lane.b32.xlu0 %v326, 104
    %v2365 = vpop.permute.xlu0 %2364
    %2366 = vrot.lane.b32.xlu0 %v329, 104
    %v2367 = vpop.permute.xlu0 %2366
    %2368 = vrot.lane.b32.xlu0 %v332, 104
    %v2369 = vpop.permute.xlu0 %2368
    %2370 = vrot.lane.b32.xlu0 %v335, 104
    %v2371 = vpop.permute.xlu0 %2370
    %2372 = vrot.lane.b32.xlu0 %v338, 104
    %v2373 = vpop.permute.xlu0 %2372
    %2374 = vrot.lane.b32.xlu0 %v341, 104
    %v2375 = vpop.permute.xlu0 %2374
    %2376 = vrot.lane.b32.xlu0 %v344, 104
    %v2377 = vpop.permute.xlu0 %2376
    %2378 = vrot.lane.b32.xlu0 %v347, 104
    %v2379 = vpop.permute.xlu0 %2378
    %2380 = vrot.lane.b32.xlu0 %v350, 104
    %v2381 = vpop.permute.xlu0 %2380
    %2382 = vrot.lane.b32.xlu0 %v353, 104
    %v2383 = vpop.permute.xlu0 %2382
    %2384 = vrot.lane.b32.xlu0 %v356, 104
    %v2385 = vpop.permute.xlu0 %2384
    %2386 = vrot.lane.b32.xlu0 %v359, 104
    %v2387 = vpop.permute.xlu0 %2386
    %2388 = vrot.lane.b32.xlu0 %v362, 104
    %v2389 = vpop.permute.xlu0 %2388
    %2390 = vrot.lane.b32.xlu0 %v365, 104
    %v2391 = vpop.permute.xlu0 %2390
    %2392 = vrot.lane.b32.xlu0 %v368, 104
    %v2393 = vpop.permute.xlu0 %2392
    %2394 = vrot.lane.b32.xlu0 %v323, 72
    %v2395 = vpop.permute.xlu0 %2394
    %2396 = vrot.lane.b32.xlu0 %v326, 72
    %v2397 = vpop.permute.xlu0 %2396
    %2398 = vrot.lane.b32.xlu0 %v329, 72
    %v2399 = vpop.permute.xlu0 %2398
    %2400 = vrot.lane.b32.xlu0 %v332, 72
    %v2401 = vpop.permute.xlu0 %2400
    %2402 = vrot.lane.b32.xlu0 %v335, 72
    %v2403 = vpop.permute.xlu0 %2402
    %2404 = vrot.lane.b32.xlu0 %v338, 72
    %v2405 = vpop.permute.xlu0 %2404
    %2406 = vrot.lane.b32.xlu0 %v341, 72
    %v2407 = vpop.permute.xlu0 %2406
    %2408 = vrot.lane.b32.xlu0 %v344, 72
    %v2409 = vpop.permute.xlu0 %2408
    %2410 = vrot.lane.b32.xlu0 %v347, 72
    %v2411 = vpop.permute.xlu0 %2410
    %2412 = vrot.lane.b32.xlu0 %v350, 72
    %v2413 = vpop.permute.xlu0 %2412
    %2414 = vrot.lane.b32.xlu0 %v353, 72
    %v2415 = vpop.permute.xlu0 %2414
    %2416 = vrot.lane.b32.xlu0 %v356, 72
    %v2417 = vpop.permute.xlu0 %2416
    %2418 = vrot.lane.b32.xlu0 %v359, 72
    %v2419 = vpop.permute.xlu0 %2418
    %2420 = vrot.lane.b32.xlu0 %v362, 72
    %v2421 = vpop.permute.xlu0 %2420
    %2422 = vrot.lane.b32.xlu0 %v365, 72
    %v2423 = vpop.permute.xlu0 %2422
    %2424 = vrot.lane.b32.xlu0 %v368, 72
    %v2425 = vpop.permute.xlu0 %2424
    %v2426 = vsel %vm483, %v2363, 0
    %v2428 = vsel %vm483, %v2365, 0
    %v2430 = vsel %vm483, %v2367, 0
    %v2432 = vsel %vm483, %v2369, 0
    %v2434 = vsel %vm483, %v2371, 0
    %v2436 = vsel %vm483, %v2373, 0
    %v2438 = vsel %vm483, %v2375, 0
    %v2440 = vsel %vm483, %v2377, 0
    %v2442 = vsel %vm483, %v2379, 0
    %v2444 = vsel %vm483, %v2381, 0
    %v2446 = vsel %vm483, %v2383, 0
    %v2448 = vsel %vm483, %v2385, 0
    %v2450 = vsel %vm483, %v2387, 0
    %v2452 = vsel %vm483, %v2389, 0
    %v2454 = vsel %vm483, %v2391, 0
    %v2456 = vsel %vm483, %v2393, 0
    %v2458 = vsel %vm483, %v2395, 0
    %v2460 = vsel %vm483, %v2397, 0
    %v2462 = vsel %vm483, %v2399, 0
    %v2464 = vsel %vm483, %v2401, 0
    %v2466 = vsel %vm483, %v2403, 0
    %v2468 = vsel %vm483, %v2405, 0
    %v2470 = vsel %vm483, %v2407, 0
    %v2472 = vsel %vm483, %v2409, 0
    %v2474 = vsel %vm483, %v2411, 0
    %v2476 = vsel %vm483, %v2413, 0
    %v2478 = vsel %vm483, %v2415, 0
    %v2480 = vsel %vm483, %v2417, 0
    %v2482 = vsel %vm483, %v2419, 0
    %v2484 = vsel %vm483, %v2421, 0
    %v2486 = vsel %vm483, %v2423, 0
    %v2488 = vsel %vm483, %v2425, 0
    %2490 = vmatpush.xpose.msra.mxu0 %v2488
    %2491 = vmatpush.xpose.msra.mxu0 %v2486
    %2492 = vmatpush.xpose.msra.mxu0 %v2484
    %2493 = vmatpush.xpose.msra.mxu0 %v2482
    %2494 = vmatpush.xpose.msra.mxu0 %v2480
    %2495 = vmatpush.xpose.msra.mxu0 %v2478
    %2496 = vmatpush.xpose.msra.mxu0 %v2476
    %2497 = vmatpush.xpose.msra.mxu0 %v2474
    %2498 = vmatpush.xpose.msra.mxu0 %v2472
    %2499 = vmatpush.xpose.msra.mxu0 %v2470
    %2500 = vmatpush.xpose.msra.mxu0 %v2468
    %2501 = vmatpush.xpose.msra.mxu0 %v2466
    %2502 = vmatpush.xpose.msra.mxu0 %v2464
    %2503 = vmatpush.xpose.msra.mxu0 %v2462
    %2504 = vmatpush.xpose.msra.mxu0 %v2460
    %2505 = vmatpush.xpose.msra.mxu0 %v2458
    %2506 = vmatmul.f32.gmra.mxu0 %v2426
    %v2507 = vpop.f32.mrf.mxu0
    %v2508 = vadd.f32 %v151, %v2507
    %2509 = vmatmul.f32.gmra.mxu0 %v2428
    %v2510 = vpop.f32.mrf.mxu0
    %v2511 = vadd.f32 %v152, %v2510
    %2512 = vmatmul.f32.gmra.mxu0 %v2430
    %v2513 = vpop.f32.mrf.mxu0
    %v2514 = vadd.f32 %v153, %v2513
    %2515 = vmatmul.f32.gmra.mxu0 %v2432
    %v2516 = vpop.f32.mrf.mxu0
    %v2517 = vadd.f32 %v154, %v2516
    %2518 = vmatmul.f32.gmra.mxu0 %v2434
    %v2519 = vpop.f32.mrf.mxu0
    %v2520 = vadd.f32 %v155, %v2519
    %2521 = vmatmul.f32.gmra.mxu0 %v2436
    %v2522 = vpop.f32.mrf.mxu0
    %v2523 = vadd.f32 %v156, %v2522
    %2524 = vmatmul.f32.gmra.mxu0 %v2438
    %v2525 = vpop.f32.mrf.mxu0
    %v2526 = vadd.f32 %v157, %v2525
    %2527 = vmatmul.f32.gmra.mxu0 %v2440
    %v2528 = vpop.f32.mrf.mxu0
    %v2529 = vadd.f32 %v158, %v2528
    %2530 = vmatmul.f32.gmra.mxu0 %v2442
    %v2531 = vpop.f32.mrf.mxu0
    %v2532 = vadd.f32 %v159, %v2531
    %2533 = vmatmul.f32.gmra.mxu0 %v2444
    %v2534 = vpop.f32.mrf.mxu0
    %v2535 = vadd.f32 %v160, %v2534
    %2536 = vmatmul.f32.gmra.mxu0 %v2446
    %v2537 = vpop.f32.mrf.mxu0
    %v2538 = vadd.f32 %v161, %v2537
    %2539 = vmatmul.f32.gmra.mxu0 %v2448
    %v2540 = vpop.f32.mrf.mxu0
    %v2541 = vadd.f32 %v162, %v2540
    %2542 = vmatmul.f32.gmra.mxu0 %v2450
    %v2543 = vpop.f32.mrf.mxu0
    %v2544 = vadd.f32 %v163, %v2543
    %2545 = vmatmul.f32.gmra.mxu0 %v2452
    %v2546 = vpop.f32.mrf.mxu0
    %v2547 = vadd.f32 %v164, %v2546
    %2548 = vmatmul.f32.gmra.mxu0 %v2454
    %v2549 = vpop.f32.mrf.mxu0
    %v2550 = vadd.f32 %v165, %v2549
    %2551 = vmatmul.f32.gmra.mxu0 %v2456
    %v2552 = vpop.f32.mrf.mxu0
    %v2553 = vadd.f32 %v166, %v2552
    %2554 = vdwg.mxu0
    %2555 = vmax.xlane.f32.xlu0 %v2508
    %v2556 = vpop.xlane.xlu0 %2555
    %2557 = vmax.xlane.f32.xlu0 %v2511
    %v2558 = vpop.xlane.xlu0 %2557
    %2559 = vmax.xlane.f32.xlu0 %v2514
    %v2560 = vpop.xlane.xlu0 %2559
    %2561 = vmax.xlane.f32.xlu0 %v2517
    %v2562 = vpop.xlane.xlu0 %2561
    %2563 = vmax.xlane.f32.xlu0 %v2520
    %v2564 = vpop.xlane.xlu0 %2563
    %2565 = vmax.xlane.f32.xlu0 %v2523
    %v2566 = vpop.xlane.xlu0 %2565
    %2567 = vmax.xlane.f32.xlu0 %v2526
    %v2568 = vpop.xlane.xlu0 %2567
    %2569 = vmax.xlane.f32.xlu0 %v2529
    %v2570 = vpop.xlane.xlu0 %2569
    %2571 = vmax.xlane.f32.xlu0 %v2532
    %v2572 = vpop.xlane.xlu0 %2571
    %2573 = vmax.xlane.f32.xlu0 %v2535
    %v2574 = vpop.xlane.xlu0 %2573
    %2575 = vmax.xlane.f32.xlu0 %v2538
    %v2576 = vpop.xlane.xlu0 %2575
    %2577 = vmax.xlane.f32.xlu0 %v2541
    %v2578 = vpop.xlane.xlu0 %2577
    %2579 = vmax.xlane.f32.xlu0 %v2544
    %v2580 = vpop.xlane.xlu0 %2579
    %2581 = vmax.xlane.f32.xlu0 %v2547
    %v2582 = vpop.xlane.xlu0 %2581
    %2583 = vmax.xlane.f32.xlu0 %v2550
    %v2584 = vpop.xlane.xlu0 %2583
    %2585 = vmax.xlane.f32.xlu0 %v2553
    %v2586 = vpop.xlane.xlu0 %2585
    %v2587 = vsub.f32 %v2508, %v2556
    %v2588 = vsub.f32 %v2511, %v2558
    %v2589 = vsub.f32 %v2514, %v2560
    %v2590 = vsub.f32 %v2517, %v2562
    %v2591 = vsub.f32 %v2520, %v2564
    %v2592 = vsub.f32 %v2523, %v2566
    %v2593 = vsub.f32 %v2526, %v2568
    %v2594 = vsub.f32 %v2529, %v2570
    %v2595 = vsub.f32 %v2532, %v2572
    %v2596 = vsub.f32 %v2535, %v2574
    %v2597 = vsub.f32 %v2538, %v2576
    %v2598 = vsub.f32 %v2541, %v2578
    %v2599 = vsub.f32 %v2544, %v2580
    %v2600 = vsub.f32 %v2547, %v2582
    %v2601 = vsub.f32 %v2550, %v2584
    %v2602 = vsub.f32 %v2553, %v2586
    %v2603 = vmul.f32 %v2587, 1.442695
    %v2604 = vpow.pop %v2603
    %v2605 = vmul.f32 %v2588, 1.442695
    %v2606 = vpow.pop %v2605
    %v2607 = vmul.f32 %v2589, 1.442695
    %v2608 = vpow.pop %v2607
    %v2609 = vmul.f32 %v2590, 1.442695
    %v2610 = vpow.pop %v2609
    %v2611 = vmul.f32 %v2591, 1.442695
    %v2612 = vpow.pop %v2611
    %v2613 = vmul.f32 %v2592, 1.442695
    %v2614 = vpow.pop %v2613
    %v2615 = vmul.f32 %v2593, 1.442695
    %v2616 = vpow.pop %v2615
    %v2617 = vmul.f32 %v2594, 1.442695
    %v2618 = vpow.pop %v2617
    %v2619 = vmul.f32 %v2595, 1.442695
    %v2620 = vpow.pop %v2619
    %v2621 = vmul.f32 %v2596, 1.442695
    %v2622 = vpow.pop %v2621
    %v2623 = vmul.f32 %v2597, 1.442695
    %v2624 = vpow.pop %v2623
    %v2625 = vmul.f32 %v2598, 1.442695
    %v2626 = vpow.pop %v2625
    %v2627 = vmul.f32 %v2599, 1.442695
    %v2628 = vpow.pop %v2627
    %v2629 = vmul.f32 %v2600, 1.442695
    %v2630 = vpow.pop %v2629
    %v2631 = vmul.f32 %v2601, 1.442695
    %v2632 = vpow.pop %v2631
    %v2633 = vmul.f32 %v2602, 1.442695
    %v2634 = vpow.pop %v2633
    %2635 = vadd.xlane.f32.xlu0 %v2604
    %v2636 = vpop.xlane.xlu0 %2635
    %2637 = vadd.xlane.f32.xlu0 %v2606
    %v2638 = vpop.xlane.xlu0 %2637
    %2639 = vadd.xlane.f32.xlu0 %v2608
    %v2640 = vpop.xlane.xlu0 %2639
    %2641 = vadd.xlane.f32.xlu0 %v2610
    %v2642 = vpop.xlane.xlu0 %2641
    %2643 = vadd.xlane.f32.xlu0 %v2612
    %v2644 = vpop.xlane.xlu0 %2643
    %2645 = vadd.xlane.f32.xlu0 %v2614
    %v2646 = vpop.xlane.xlu0 %2645
    %2647 = vadd.xlane.f32.xlu0 %v2616
    %v2648 = vpop.xlane.xlu0 %2647
    %2649 = vadd.xlane.f32.xlu0 %v2618
    %v2650 = vpop.xlane.xlu0 %2649
    %2651 = vadd.xlane.f32.xlu0 %v2620
    %v2652 = vpop.xlane.xlu0 %2651
    %2653 = vadd.xlane.f32.xlu0 %v2622
    %v2654 = vpop.xlane.xlu0 %2653
    %2655 = vadd.xlane.f32.xlu0 %v2624
    %v2656 = vpop.xlane.xlu0 %2655
    %2657 = vadd.xlane.f32.xlu0 %v2626
    %v2658 = vpop.xlane.xlu0 %2657
    %2659 = vadd.xlane.f32.xlu0 %v2628
    %v2660 = vpop.xlane.xlu0 %2659
    %2661 = vadd.xlane.f32.xlu0 %v2630
    %v2662 = vpop.xlane.xlu0 %2661
    %2663 = vadd.xlane.f32.xlu0 %v2632
    %v2664 = vpop.xlane.xlu0 %2663
    %2665 = vadd.xlane.f32.xlu0 %v2634
    %v2666 = vpop.xlane.xlu0 %2665
    %v2667 = vrcp.pop %v2636
    %v2668 = vmul.f32 %v2636, %v2667
    %v2669 = vsub.f32 1.0, %v2668
    %v2670 = vmul.f32 %v2667, %v2669
    %v2671 = vadd.f32 %v2667, %v2670
    %vm2672 = vweird.f32 %v2636
    %vm2673 = vweird.f32 %v2667
    %vm2674 = vmor %vm2672, %vm2673
    %v2675 = vsel %vm2674, %v2667, %v2671
    %v2676 = vand.u32 2147483647, %v2636
    %vm2677 = vcmp.eq.f32.partialorder %v2676, 8.507059e+37
    %v2678 = vand.u32 %v2636, 2147483648
    %v2679 = vor.u32 1.1754944e-38, %v2678
    %v2680 = vsel %vm2677, %v2679, %v2675
    %v2681 = vrcp.pop %v2638
    %v2682 = vmul.f32 %v2638, %v2681
    %v2683 = vsub.f32 1.0, %v2682
    %v2684 = vmul.f32 %v2681, %v2683
    %v2685 = vadd.f32 %v2681, %v2684
    %vm2686 = vweird.f32 %v2638
    %vm2687 = vweird.f32 %v2681
    %vm2688 = vmor %vm2686, %vm2687
    %v2689 = vsel %vm2688, %v2681, %v2685
    %v2690 = vand.u32 2147483647, %v2638
    %vm2691 = vcmp.eq.f32.partialorder %v2690, 8.507059e+37
    %v2692 = vand.u32 %v2638, 2147483648
    %v2693 = vor.u32 1.1754944e-38, %v2692
    %v2694 = vsel %vm2691, %v2693, %v2689
    %v2695 = vrcp.pop %v2640
    %v2696 = vmul.f32 %v2640, %v2695
    %v2697 = vsub.f32 1.0, %v2696
    %v2698 = vmul.f32 %v2695, %v2697
    %v2699 = vadd.f32 %v2695, %v2698
    %vm2700 = vweird.f32 %v2640
    %vm2701 = vweird.f32 %v2695
    %vm2702 = vmor %vm2700, %vm2701
    %v2703 = vsel %vm2702, %v2695, %v2699
    %v2704 = vand.u32 2147483647, %v2640
    %vm2705 = vcmp.eq.f32.partialorder %v2704, 8.507059e+37
    %v2706 = vand.u32 %v2640, 2147483648
    %v2707 = vor.u32 1.1754944e-38, %v2706
    %v2708 = vsel %vm2705, %v2707, %v2703
    %v2709 = vrcp.pop %v2642
    %v2710 = vmul.f32 %v2642, %v2709
    %v2711 = vsub.f32 1.0, %v2710
    %v2712 = vmul.f32 %v2709, %v2711
    %v2713 = vadd.f32 %v2709, %v2712
    %vm2714 = vweird.f32 %v2642
    %vm2715 = vweird.f32 %v2709
    %vm2716 = vmor %vm2714, %vm2715
    %v2717 = vsel %vm2716, %v2709, %v2713
    %v2718 = vand.u32 2147483647, %v2642
    %vm2719 = vcmp.eq.f32.partialorder %v2718, 8.507059e+37
    %v2720 = vand.u32 %v2642, 2147483648
    %v2721 = vor.u32 1.1754944e-38, %v2720
    %v2722 = vsel %vm2719, %v2721, %v2717
    %v2723 = vrcp.pop %v2644
    %v2724 = vmul.f32 %v2644, %v2723
    %v2725 = vsub.f32 1.0, %v2724
    %v2726 = vmul.f32 %v2723, %v2725
    %v2727 = vadd.f32 %v2723, %v2726
    %vm2728 = vweird.f32 %v2644
    %vm2729 = vweird.f32 %v2723
    %vm2730 = vmor %vm2728, %vm2729
    %v2731 = vsel %vm2730, %v2723, %v2727
    %v2732 = vand.u32 2147483647, %v2644
    %vm2733 = vcmp.eq.f32.partialorder %v2732, 8.507059e+37
    %v2734 = vand.u32 %v2644, 2147483648
    %v2735 = vor.u32 1.1754944e-38, %v2734
    %v2736 = vsel %vm2733, %v2735, %v2731
    %v2737 = vrcp.pop %v2646
    %v2738 = vmul.f32 %v2646, %v2737
    %v2739 = vsub.f32 1.0, %v2738
    %v2740 = vmul.f32 %v2737, %v2739
    %v2741 = vadd.f32 %v2737, %v2740
    %vm2742 = vweird.f32 %v2646
    %vm2743 = vweird.f32 %v2737
    %vm2744 = vmor %vm2742, %vm2743
    %v2745 = vsel %vm2744, %v2737, %v2741
    %v2746 = vand.u32 2147483647, %v2646
    %vm2747 = vcmp.eq.f32.partialorder %v2746, 8.507059e+37
    %v2748 = vand.u32 %v2646, 2147483648
    %v2749 = vor.u32 1.1754944e-38, %v2748
    %v2750 = vsel %vm2747, %v2749, %v2745
    %v2751 = vrcp.pop %v2648
    %v2752 = vmul.f32 %v2648, %v2751
    %v2753 = vsub.f32 1.0, %v2752
    %v2754 = vmul.f32 %v2751, %v2753
    %v2755 = vadd.f32 %v2751, %v2754
    %vm2756 = vweird.f32 %v2648
    %vm2757 = vweird.f32 %v2751
    %vm2758 = vmor %vm2756, %vm2757
    %v2759 = vsel %vm2758, %v2751, %v2755
    %v2760 = vand.u32 2147483647, %v2648
    %vm2761 = vcmp.eq.f32.partialorder %v2760, 8.507059e+37
    %v2762 = vand.u32 %v2648, 2147483648
    %v2763 = vor.u32 1.1754944e-38, %v2762
    %v2764 = vsel %vm2761, %v2763, %v2759
    %v2765 = vrcp.pop %v2650
    %v2766 = vmul.f32 %v2650, %v2765
    %v2767 = vsub.f32 1.0, %v2766
    %v2768 = vmul.f32 %v2765, %v2767
    %v2769 = vadd.f32 %v2765, %v2768
    %vm2770 = vweird.f32 %v2650
    %vm2771 = vweird.f32 %v2765
    %vm2772 = vmor %vm2770, %vm2771
    %v2773 = vsel %vm2772, %v2765, %v2769
    %v2774 = vand.u32 2147483647, %v2650
    %vm2775 = vcmp.eq.f32.partialorder %v2774, 8.507059e+37
    %v2776 = vand.u32 %v2650, 2147483648
    %v2777 = vor.u32 1.1754944e-38, %v2776
    %v2778 = vsel %vm2775, %v2777, %v2773
    %v2779 = vrcp.pop %v2652
    %v2780 = vmul.f32 %v2652, %v2779
    %v2781 = vsub.f32 1.0, %v2780
    %v2782 = vmul.f32 %v2779, %v2781
    %v2783 = vadd.f32 %v2779, %v2782
    %vm2784 = vweird.f32 %v2652
    %vm2785 = vweird.f32 %v2779
    %vm2786 = vmor %vm2784, %vm2785
    %v2787 = vsel %vm2786, %v2779, %v2783
    %v2788 = vand.u32 2147483647, %v2652
    %vm2789 = vcmp.eq.f32.partialorder %v2788, 8.507059e+37
    %v2790 = vand.u32 %v2652, 2147483648
    %v2791 = vor.u32 1.1754944e-38, %v2790
    %v2792 = vsel %vm2789, %v2791, %v2787
    %v2793 = vrcp.pop %v2654
    %v2794 = vmul.f32 %v2654, %v2793
    %v2795 = vsub.f32 1.0, %v2794
    %v2796 = vmul.f32 %v2793, %v2795
    %v2797 = vadd.f32 %v2793, %v2796
    %vm2798 = vweird.f32 %v2654
    %vm2799 = vweird.f32 %v2793
    %vm2800 = vmor %vm2798, %vm2799
    %v2801 = vsel %vm2800, %v2793, %v2797
    %v2802 = vand.u32 2147483647, %v2654
    %vm2803 = vcmp.eq.f32.partialorder %v2802, 8.507059e+37
    %v2804 = vand.u32 %v2654, 2147483648
    %v2805 = vor.u32 1.1754944e-38, %v2804
    %v2806 = vsel %vm2803, %v2805, %v2801
    %v2807 = vrcp.pop %v2656
    %v2808 = vmul.f32 %v2656, %v2807
    %v2809 = vsub.f32 1.0, %v2808
    %v2810 = vmul.f32 %v2807, %v2809
    %v2811 = vadd.f32 %v2807, %v2810
    %vm2812 = vweird.f32 %v2656
    %vm2813 = vweird.f32 %v2807
    %vm2814 = vmor %vm2812, %vm2813
    %v2815 = vsel %vm2814, %v2807, %v2811
    %v2816 = vand.u32 2147483647, %v2656
    %vm2817 = vcmp.eq.f32.partialorder %v2816, 8.507059e+37
    %v2818 = vand.u32 %v2656, 2147483648
    %v2819 = vor.u32 1.1754944e-38, %v2818
    %v2820 = vsel %vm2817, %v2819, %v2815
    %v2821 = vrcp.pop %v2658
    %v2822 = vmul.f32 %v2658, %v2821
    %v2823 = vsub.f32 1.0, %v2822
    %v2824 = vmul.f32 %v2821, %v2823
    %v2825 = vadd.f32 %v2821, %v2824
    %vm2826 = vweird.f32 %v2658
    %vm2827 = vweird.f32 %v2821
    %vm2828 = vmor %vm2826, %vm2827
    %v2829 = vsel %vm2828, %v2821, %v2825
    %v2830 = vand.u32 2147483647, %v2658
    %vm2831 = vcmp.eq.f32.partialorder %v2830, 8.507059e+37
    %v2832 = vand.u32 %v2658, 2147483648
    %v2833 = vor.u32 1.1754944e-38, %v2832
    %v2834 = vsel %vm2831, %v2833, %v2829
    %v2835 = vrcp.pop %v2660
    %v2836 = vmul.f32 %v2660, %v2835
    %v2837 = vsub.f32 1.0, %v2836
    %v2838 = vmul.f32 %v2835, %v2837
    %v2839 = vadd.f32 %v2835, %v2838
    %vm2840 = vweird.f32 %v2660
    %vm2841 = vweird.f32 %v2835
    %vm2842 = vmor %vm2840, %vm2841
    %v2843 = vsel %vm2842, %v2835, %v2839
    %v2844 = vand.u32 2147483647, %v2660
    %vm2845 = vcmp.eq.f32.partialorder %v2844, 8.507059e+37
    %v2846 = vand.u32 %v2660, 2147483648
    %v2847 = vor.u32 1.1754944e-38, %v2846
    %v2848 = vsel %vm2845, %v2847, %v2843
    %v2849 = vrcp.pop %v2662
    %v2850 = vmul.f32 %v2662, %v2849
    %v2851 = vsub.f32 1.0, %v2850
    %v2852 = vmul.f32 %v2849, %v2851
    %v2853 = vadd.f32 %v2849, %v2852
    %vm2854 = vweird.f32 %v2662
    %vm2855 = vweird.f32 %v2849
    %vm2856 = vmor %vm2854, %vm2855
    %v2857 = vsel %vm2856, %v2849, %v2853
    %v2858 = vand.u32 2147483647, %v2662
    %vm2859 = vcmp.eq.f32.partialorder %v2858, 8.507059e+37
    %v2860 = vand.u32 %v2662, 2147483648
    %v2861 = vor.u32 1.1754944e-38, %v2860
    %v2862 = vsel %vm2859, %v2861, %v2857
    %v2863 = vrcp.pop %v2664
    %v2864 = vmul.f32 %v2664, %v2863
    %v2865 = vsub.f32 1.0, %v2864
    %v2866 = vmul.f32 %v2863, %v2865
    %v2867 = vadd.f32 %v2863, %v2866
    %vm2868 = vweird.f32 %v2664
    %vm2869 = vweird.f32 %v2863
    %vm2870 = vmor %vm2868, %vm2869
    %v2871 = vsel %vm2870, %v2863, %v2867
    %v2872 = vand.u32 2147483647, %v2664
    %vm2873 = vcmp.eq.f32.partialorder %v2872, 8.507059e+37
    %v2874 = vand.u32 %v2664, 2147483648
    %v2875 = vor.u32 1.1754944e-38, %v2874
    %v2876 = vsel %vm2873, %v2875, %v2871
    %v2877 = vrcp.pop %v2666
    %v2878 = vmul.f32 %v2666, %v2877
    %v2879 = vsub.f32 1.0, %v2878
    %v2880 = vmul.f32 %v2877, %v2879
    %v2881 = vadd.f32 %v2877, %v2880
    %vm2882 = vweird.f32 %v2666
    %vm2883 = vweird.f32 %v2877
    %vm2884 = vmor %vm2882, %vm2883
    %v2885 = vsel %vm2884, %v2877, %v2881
    %v2886 = vand.u32 2147483647, %v2666
    %vm2887 = vcmp.eq.f32.partialorder %v2886, 8.507059e+37
    %v2888 = vand.u32 %v2666, 2147483648
    %v2889 = vor.u32 1.1754944e-38, %v2888
    %v2890 = vsel %vm2887, %v2889, %v2885
    %v2891 = vmul.f32 %v2604, %v2680
    %v2892 = vmul.f32 %v2606, %v2694
    %v2893 = vmul.f32 %v2608, %v2708
    %v2894 = vmul.f32 %v2610, %v2722
    %v2895 = vmul.f32 %v2612, %v2736
    %v2896 = vmul.f32 %v2614, %v2750
    %v2897 = vmul.f32 %v2616, %v2764
    %v2898 = vmul.f32 %v2618, %v2778
    %v2899 = vmul.f32 %v2620, %v2792
    %v2900 = vmul.f32 %v2622, %v2806
    %v2901 = vmul.f32 %v2624, %v2820
    %v2902 = vmul.f32 %v2626, %v2834
    %v2903 = vmul.f32 %v2628, %v2848
    %v2904 = vmul.f32 %v2630, %v2862
    %v2905 = vmul.f32 %v2632, %v2876
    %v2906 = vmul.f32 %v2634, %v2890
    %2923 = vrot.lane.b32.xlu0 %v388, 96
    %v2924 = vpop.permute.xlu0 %2923
    %2925 = vrot.lane.b32.xlu0 %v391, 96
    %v2926 = vpop.permute.xlu0 %2925
    %2927 = vrot.lane.b32.xlu0 %v394, 96
    %v2928 = vpop.permute.xlu0 %2927
    %2929 = vrot.lane.b32.xlu0 %v397, 96
    %v2930 = vpop.permute.xlu0 %2929
    %2931 = vrot.lane.b32.xlu0 %v400, 96
    %v2932 = vpop.permute.xlu0 %2931
    %2933 = vrot.lane.b32.xlu0 %v403, 96
    %v2934 = vpop.permute.xlu0 %2933
    %2935 = vrot.lane.b32.xlu0 %v406, 96
    %v2936 = vpop.permute.xlu0 %2935
    %2937 = vrot.lane.b32.xlu0 %v409, 96
    %v2938 = vpop.permute.xlu0 %2937
    %2939 = vrot.lane.b32.xlu0 %v412, 96
    %v2940 = vpop.permute.xlu0 %2939
    %2941 = vrot.lane.b32.xlu0 %v415, 96
    %v2942 = vpop.permute.xlu0 %2941
    %2943 = vrot.lane.b32.xlu0 %v418, 96
    %v2944 = vpop.permute.xlu0 %2943
    %2945 = vrot.lane.b32.xlu0 %v421, 96
    %v2946 = vpop.permute.xlu0 %2945
    %2947 = vrot.lane.b32.xlu0 %v424, 96
    %v2948 = vpop.permute.xlu0 %2947
    %2949 = vrot.lane.b32.xlu0 %v427, 96
    %v2950 = vpop.permute.xlu0 %2949
    %2951 = vrot.lane.b32.xlu0 %v430, 96
    %v2952 = vpop.permute.xlu0 %2951
    %2953 = vrot.lane.b32.xlu0 %v433, 96
    %v2954 = vpop.permute.xlu0 %2953
    %2971 = vmatpush.msra.mxu0 %v2954
    %2972 = vmatpush.msra.mxu0 %v2952
    %2973 = vmatpush.msra.mxu0 %v2950
    %2974 = vmatpush.msra.mxu0 %v2948
    %2975 = vmatpush.msra.mxu0 %v2946
    %2976 = vmatpush.msra.mxu0 %v2944
    %2977 = vmatpush.msra.mxu0 %v2942
    %2978 = vmatpush.msra.mxu0 %v2940
    %2979 = vmatpush.msra.mxu0 %v2938
    %2980 = vmatpush.msra.mxu0 %v2936
    %2981 = vmatpush.msra.mxu0 %v2934
    %2982 = vmatpush.msra.mxu0 %v2932
    %2983 = vmatpush.msra.mxu0 %v2930
    %2984 = vmatpush.msra.mxu0 %v2928
    %2985 = vmatpush.msra.mxu0 %v2926
    %2986 = vmatpush.msra.mxu0 %v2924
    %2987 = vmatmul.f32.gmra.mxu0 %v2891
    %v2988 = vpop.f32.mrf.mxu0
    %v2989 = vadd.f32 0.0, %v2988
    %2990 = vmatmul.f32.gmra.mxu0 %v2892
    %v2991 = vpop.f32.mrf.mxu0
    %v2992 = vadd.f32 0.0, %v2991
    %2993 = vmatmul.f32.gmra.mxu0 %v2893
    %v2994 = vpop.f32.mrf.mxu0
    %v2995 = vadd.f32 0.0, %v2994
    %2996 = vmatmul.f32.gmra.mxu0 %v2894
    %v2997 = vpop.f32.mrf.mxu0
    %v2998 = vadd.f32 0.0, %v2997
    %2999 = vmatmul.f32.gmra.mxu0 %v2895
    %v3000 = vpop.f32.mrf.mxu0
    %v3001 = vadd.f32 0.0, %v3000
    %3002 = vmatmul.f32.gmra.mxu0 %v2896
    %v3003 = vpop.f32.mrf.mxu0
    %v3004 = vadd.f32 0.0, %v3003
    %3005 = vmatmul.f32.gmra.mxu0 %v2897
    %v3006 = vpop.f32.mrf.mxu0
    %v3007 = vadd.f32 0.0, %v3006
    %3008 = vmatmul.f32.gmra.mxu0 %v2898
    %v3009 = vpop.f32.mrf.mxu0
    %v3010 = vadd.f32 0.0, %v3009
    %3011 = vmatmul.f32.gmra.mxu0 %v2899
    %v3012 = vpop.f32.mrf.mxu0
    %v3013 = vadd.f32 0.0, %v3012
    %3014 = vmatmul.f32.gmra.mxu0 %v2900
    %v3015 = vpop.f32.mrf.mxu0
    %v3016 = vadd.f32 0.0, %v3015
    %3017 = vmatmul.f32.gmra.mxu0 %v2901
    %v3018 = vpop.f32.mrf.mxu0
    %v3019 = vadd.f32 0.0, %v3018
    %3020 = vmatmul.f32.gmra.mxu0 %v2902
    %v3021 = vpop.f32.mrf.mxu0
    %v3022 = vadd.f32 0.0, %v3021
    %3023 = vmatmul.f32.gmra.mxu0 %v2903
    %v3024 = vpop.f32.mrf.mxu0
    %v3025 = vadd.f32 0.0, %v3024
    %3026 = vmatmul.f32.gmra.mxu0 %v2904
    %v3027 = vpop.f32.mrf.mxu0
    %v3028 = vadd.f32 0.0, %v3027
    %3029 = vmatmul.f32.gmra.mxu0 %v2905
    %v3030 = vpop.f32.mrf.mxu0
    %v3031 = vadd.f32 0.0, %v3030
    %3032 = vmatmul.f32.gmra.mxu0 %v2906
    %v3033 = vpop.f32.mrf.mxu0
    %v3034 = vadd.f32 0.0, %v3033
    %3035 = vdwg.mxu0
    %v3036 = vadd.f32 %v2346, %v2989
    %v3037 = vadd.f32 %v2347, %v2992
    %v3038 = vadd.f32 %v2348, %v2995
    %v3039 = vadd.f32 %v2349, %v2998
    %v3040 = vadd.f32 %v2350, %v3001
    %v3041 = vadd.f32 %v2351, %v3004
    %v3042 = vadd.f32 %v2352, %v3007
    %v3043 = vadd.f32 %v2353, %v3010
    %v3044 = vadd.f32 %v2354, %v3013
    %v3045 = vadd.f32 %v2355, %v3016
    %v3046 = vadd.f32 %v2356, %v3019
    %v3047 = vadd.f32 %v2357, %v3022
    %v3048 = vadd.f32 %v2358, %v3025
    %v3049 = vadd.f32 %v2359, %v3028
    %v3050 = vadd.f32 %v2360, %v3031
    %v3051 = vadd.f32 %v2361, %v3034
    %v3052 = vld [vmem:[%s3 + $0x10] sm:$0xff]
    %v3053 = vld [vmem:[%s3 + $0x30] sm:$0xff]
    %v3054 = vld [vmem:[%s3 + $0x50] sm:$0xff]
    %v3055 = vld [vmem:[%s3 + $0x70] sm:$0xff]
    %v3056 = vld [vmem:[%s4 + $0x1] sm:$0x1]
    %v3058 = vperm.slane %v3056, 0
    %v3061 = vsel %vm256, %v3036, 0
    %v3064 = vsel %vm256, %v3037, 0
    %v3067 = vsel %vm256, %v3038, 0
    %v3070 = vsel %vm256, %v3039, 0
    %v3073 = vsel %vm256, %v3040, 0
    %v3076 = vsel %vm256, %v3041, 0
    %v3079 = vsel %vm256, %v3042, 0
    %v3082 = vsel %vm256, %v3043, 0
    %v3085 = vsel %vm256, %v3044, 0
    %v3088 = vsel %vm256, %v3045, 0
    %v3091 = vsel %vm256, %v3046, 0
    %v3094 = vsel %vm256, %v3047, 0
    %v3097 = vsel %vm256, %v3048, 0
    %v3100 = vsel %vm256, %v3049, 0
    %v3103 = vsel %vm256, %v3050, 0
    %v3106 = vsel %vm256, %v3051, 0
    %3108 = vmatpush.msra.mxu0 0.0
    %3109 = vmatpush.msra.mxu0 0.0
    %3110 = vmatpush.msra.mxu0 0.0
    %3111 = vmatpush.msra.mxu0 0.0
    %3112 = vmatpush.msra.mxu0 0.0
    %3113 = vmatpush.msra.mxu0 0.0
    %3114 = vmatpush.msra.mxu0 0.0
    %3115 = vmatpush.msra.mxu0 0.0
    %3116 = vmatpush.msra.mxu0 0.0
    %3117 = vmatpush.msra.mxu0 0.0
    %3118 = vmatpush.msra.mxu0 0.0
    %3119 = vmatpush.msra.mxu0 0.0
    %3120 = vmatpush.msra.mxu0 %v3055
    %3121 = vmatpush.msra.mxu0 %v3054
    %3122 = vmatpush.msra.mxu0 %v3053
    %3123 = vmatpush.msra.mxu0 %v3052
    %3124 = vmatmul.f32.gmra.mxu0 %v3061
    %v3125 = vpop.f32.mrf.mxu0
    %v3126 = vadd.f32 %v3058, %v3125
    %3127 = vmatmul.f32.gmra.mxu0 %v3064
    %v3128 = vpop.f32.mrf.mxu0
    %v3129 = vadd.f32 %v3058, %v3128
    %3130 = vmatmul.f32.gmra.mxu0 %v3067
    %v3131 = vpop.f32.mrf.mxu0
    %v3132 = vadd.f32 %v3058, %v3131
    %3133 = vmatmul.f32.gmra.mxu0 %v3070
    %v3134 = vpop.f32.mrf.mxu0
    %v3135 = vadd.f32 %v3058, %v3134
    %3136 = vmatmul.f32.gmra.mxu0 %v3073
    %v3137 = vpop.f32.mrf.mxu0
    %v3138 = vadd.f32 %v3058, %v3137
    %3139 = vmatmul.f32.gmra.mxu0 %v3076
    %v3140 = vpop.f32.mrf.mxu0
    %v3141 = vadd.f32 %v3058, %v3140
    %3142 = vmatmul.f32.gmra.mxu0 %v3079
    %v3143 = vpop.f32.mrf.mxu0
    %v3144 = vadd.f32 %v3058, %v3143
    %3145 = vmatmul.f32.gmra.mxu0 %v3082
    %v3146 = vpop.f32.mrf.mxu0
    %v3147 = vadd.f32 %v3058, %v3146
    %3148 = vmatmul.f32.gmra.mxu0 %v3085
    %v3149 = vpop.f32.mrf.mxu0
    %v3150 = vadd.f32 %v3058, %v3149
    %3151 = vmatmul.f32.gmra.mxu0 %v3088
    %v3152 = vpop.f32.mrf.mxu0
    %v3153 = vadd.f32 %v3058, %v3152
    %3154 = vmatmul.f32.gmra.mxu0 %v3091
    %v3155 = vpop.f32.mrf.mxu0
    %v3156 = vadd.f32 %v3058, %v3155
    %3157 = vmatmul.f32.gmra.mxu0 %v3094
    %v3158 = vpop.f32.mrf.mxu0
    %v3159 = vadd.f32 %v3058, %v3158
    %3160 = vmatmul.f32.gmra.mxu0 %v3097
    %v3161 = vpop.f32.mrf.mxu0
    %v3162 = vadd.f32 %v3058, %v3161
    %3163 = vmatmul.f32.gmra.mxu0 %v3100
    %v3164 = vpop.f32.mrf.mxu0
    %v3165 = vadd.f32 %v3058, %v3164
    %3166 = vmatmul.f32.gmra.mxu0 %v3103
    %v3167 = vpop.f32.mrf.mxu0
    %v3168 = vadd.f32 %v3058, %v3167
    %3169 = vmatmul.f32.gmra.mxu0 %v3106
    %v3170 = vpop.f32.mrf.mxu0
    %v3171 = vadd.f32 %v3058, %v3170
    %3172 = vdwg.mxu0
    %v3173 = vmax.f32 %v3126, 0.0
    %v3174 = vmax.f32 %v3129, 0.0
    %v3175 = vmax.f32 %v3132, 0.0
    %v3176 = vmax.f32 %v3135, 0.0
    %v3177 = vmax.f32 %v3138, 0.0
    %v3178 = vmax.f32 %v3141, 0.0
    %v3179 = vmax.f32 %v3144, 0.0
    %v3180 = vmax.f32 %v3147, 0.0
    %v3181 = vmax.f32 %v3150, 0.0
    %v3182 = vmax.f32 %v3153, 0.0
    %v3183 = vmax.f32 %v3156, 0.0
    %v3184 = vmax.f32 %v3159, 0.0
    %v3185 = vmax.f32 %v3162, 0.0
    %v3186 = vmax.f32 %v3165, 0.0
    %v3187 = vmax.f32 %v3168, 0.0
    %v3188 = vmax.f32 %v3171, 0.0
    %v3189 = vld [vmem:[%s3 + $0x18] sm:$0xff]
    %v3190 = vld [vmem:[%s3 + $0x38] sm:$0xff]
    %v3191 = vld [vmem:[%s3 + $0x58] sm:$0xff]
    %v3192 = vld [vmem:[%s3 + $0x78] sm:$0xff]
    %v3193 = vld [vmem:[%s4] sm:$0x1]
    %v3195 = vperm.slane %v3193, 0
    %v3198 = vsel %vm256, %v3173, 0
    %v3201 = vsel %vm256, %v3174, 0
    %v3204 = vsel %vm256, %v3175, 0
    %v3207 = vsel %vm256, %v3176, 0
    %v3210 = vsel %vm256, %v3177, 0
    %v3213 = vsel %vm256, %v3178, 0
    %v3216 = vsel %vm256, %v3179, 0
    %v3219 = vsel %vm256, %v3180, 0
    %v3222 = vsel %vm256, %v3181, 0
    %v3225 = vsel %vm256, %v3182, 0
    %v3228 = vsel %vm256, %v3183, 0
    %v3231 = vsel %vm256, %v3184, 0
    %v3234 = vsel %vm256, %v3185, 0
    %v3237 = vsel %vm256, %v3186, 0
    %v3240 = vsel %vm256, %v3187, 0
    %v3243 = vsel %vm256, %v3188, 0
    %3245 = vmatpush.msra.mxu0 0.0
    %3246 = vmatpush.msra.mxu0 0.0
    %3247 = vmatpush.msra.mxu0 0.0
    %3248 = vmatpush.msra.mxu0 0.0
    %3249 = vmatpush.msra.mxu0 0.0
    %3250 = vmatpush.msra.mxu0 0.0
    %3251 = vmatpush.msra.mxu0 0.0
    %3252 = vmatpush.msra.mxu0 0.0
    %3253 = vmatpush.msra.mxu0 0.0
    %3254 = vmatpush.msra.mxu0 0.0
    %3255 = vmatpush.msra.mxu0 0.0
    %3256 = vmatpush.msra.mxu0 0.0
    %3257 = vmatpush.msra.mxu0 %v3192
    %3258 = vmatpush.msra.mxu0 %v3191
    %3259 = vmatpush.msra.mxu0 %v3190
    %3260 = vmatpush.msra.mxu0 %v3189
    %3261 = vmatmul.f32.gmra.mxu0 %v3198
    %v3262 = vpop.f32.mrf.mxu0
    %v3263 = vadd.f32 %v3195, %v3262
    %3264 = vmatmul.f32.gmra.mxu0 %v3201
    %v3265 = vpop.f32.mrf.mxu0
    %v3266 = vadd.f32 %v3195, %v3265
    %3267 = vmatmul.f32.gmra.mxu0 %v3204
    %v3268 = vpop.f32.mrf.mxu0
    %v3269 = vadd.f32 %v3195, %v3268
    %3270 = vmatmul.f32.gmra.mxu0 %v3207
    %v3271 = vpop.f32.mrf.mxu0
    %v3272 = vadd.f32 %v3195, %v3271
    %3273 = vmatmul.f32.gmra.mxu0 %v3210
    %v3274 = vpop.f32.mrf.mxu0
    %v3275 = vadd.f32 %v3195, %v3274
    %3276 = vmatmul.f32.gmra.mxu0 %v3213
    %v3277 = vpop.f32.mrf.mxu0
    %v3278 = vadd.f32 %v3195, %v3277
    %3279 = vmatmul.f32.gmra.mxu0 %v3216
    %v3280 = vpop.f32.mrf.mxu0
    %v3281 = vadd.f32 %v3195, %v3280
    %3282 = vmatmul.f32.gmra.mxu0 %v3219
    %v3283 = vpop.f32.mrf.mxu0
    %v3284 = vadd.f32 %v3195, %v3283
    %3285 = vmatmul.f32.gmra.mxu0 %v3222
    %v3286 = vpop.f32.mrf.mxu0
    %v3287 = vadd.f32 %v3195, %v3286
    %3288 = vmatmul.f32.gmra.mxu0 %v3225
    %v3289 = vpop.f32.mrf.mxu0
    %v3290 = vadd.f32 %v3195, %v3289
    %3291 = vmatmul.f32.gmra.mxu0 %v3228
    %v3292 = vpop.f32.mrf.mxu0
    %v3293 = vadd.f32 %v3195, %v3292
    %3294 = vmatmul.f32.gmra.mxu0 %v3231
    %v3295 = vpop.f32.mrf.mxu0
    %v3296 = vadd.f32 %v3195, %v3295
    %3297 = vmatmul.f32.gmra.mxu0 %v3234
    %v3298 = vpop.f32.mrf.mxu0
    %v3299 = vadd.f32 %v3195, %v3298
    %3300 = vmatmul.f32.gmra.mxu0 %v3237
    %v3301 = vpop.f32.mrf.mxu0
    %v3302 = vadd.f32 %v3195, %v3301
    %3303 = vmatmul.f32.gmra.mxu0 %v3240
    %v3304 = vpop.f32.mrf.mxu0
    %v3305 = vadd.f32 %v3195, %v3304
    %3306 = vmatmul.f32.gmra.mxu0 %v3243
    %v3307 = vpop.f32.mrf.mxu0
    %v3308 = vadd.f32 %v3195, %v3307
    %3309 = vdwg.mxu0
    %3310 = vst [vmem:[#allocation2] sm:$0xff] %v3263
    %3311 = vst [vmem:[#allocation2 + $0x8] sm:$0xff] %v3266
    %3312 = vst [vmem:[#allocation2 + $0x10] sm:$0xff] %v3269
    %3313 = vst [vmem:[#allocation2 + $0x18] sm:$0xff] %v3272
    %3314 = vst [vmem:[#allocation2 + $0x20] sm:$0xff] %v3275
    %3315 = vst [vmem:[#allocation2 + $0x28] sm:$0xff] %v3278
    %3316 = vst [vmem:[#allocation2 + $0x30] sm:$0xff] %v3281
    %3317 = vst [vmem:[#allocation2 + $0x38] sm:$0xff] %v3284
    %3318 = vst [vmem:[#allocation2 + $0x40] sm:$0xff] %v3287
    %3319 = vst [vmem:[#allocation2 + $0x48] sm:$0xff] %v3290
    %3320 = vst [vmem:[#allocation2 + $0x50] sm:$0xff] %v3293
    %3321 = vst [vmem:[#allocation2 + $0x58] sm:$0xff] %v3296
    %3322 = vst [vmem:[#allocation2 + $0x60] sm:$0xff] %v3299
    %3323 = vst [vmem:[#allocation2 + $0x68] sm:$0xff] %v3302
    %3324 = vst [vmem:[#allocation2 + $0x70] sm:$0xff] %v3305
    %3325 = vst [vmem:[#allocation2 + $0x78] sm:$0xff] %v3308
    // Predicated region
    $region22: #{bigram_forward.1} parent=1 // pred_check
      _
    $region23: #{bigram_forward.1} parent=1 // pred_check_branch
      %3327 = sbr.rel (0) target = $region25
    $region24: #{bigram_forward.1} parent=1 // pred_region
      %3329 = vsyncadd [#allocation3], 0
      %s3330 = sshll.u32 [#allocation2], 4
      %s3331 = int_to_ptr.vmem [resolvable:$true] %s3330
      %s3332 = sshll.u32 %s5, 4
      %s3333 = int_to_ptr.hbm [resolvable:$true] %s3332
      %3338 = dma.vmem_to_hbm [thread:$0]  %s3331, 2048, %s3333, [#allocation3], 128, 128, 8
    $region25: #{bigram_forward.1} parent=1 // pred_fallthru
      _
    // Predicated region
    $region26: #{bigram_forward.1} parent=1 // pred_check
      _
    $region27: #{bigram_forward.1} parent=1 // pred_check_branch
      %3340 = sbr.rel (0) target = $region29
    $region28: #{bigram_forward.1} parent=1 // pred_region
      %3342 = dma.done [#allocation3], 2048
    $region29: #{bigram_forward.1} parent=1 // pred_fallthru
      _
    %3343 = vsyncpa [#allocation3], 1

</llo_original>
